<compile_context>
chip_gen: v7x
topology: tpu7x:2x2x1
jax: 0.10.0
libtpu: 0.0.40
codegen_flags: <defaults>
</compile_context>

<pallas_src>
import functools

import jax
import jax.numpy as jnp
from jax.experimental import pallas as pl
from jax.experimental.pallas import tpu as pltpu

_NEG_SLOPE = 0.01  # nn.LeakyReLU default negative_slope


def _leaky_relu(x):
    return jnp.where(x > 0, x, _NEG_SLOPE * x)


def _build_im2col(pad_ref, patch_ref, src, W):
    """Build the 3x3 im2col matrix of `src` in VMEM.

    src:       (HW, Cc) value, row-major flattened H x W image, Cc channels.
    pad_ref:   (HW + 2*(W+1), Cc) scratch; zero rows absorb y-boundary taps.
    patch_ref: (HW, 9*Cc) scratch receiving the 9 shifted taps.
    Shifted reads are pure sublane slices (cheap); only the x boundary needs
    an explicit mask.
    """
    HW, Cc = src.shape
    PAD = W + 1

    zpad = jnp.zeros((PAD, Cc), jnp.float32)
    pad_ref[0:PAD, :] = zpad
    pad_ref[PAD + HW:PAD + HW + PAD, :] = zpad
    pad_ref[PAD:PAD + HW, :] = src

    col = jax.lax.broadcasted_iota(jnp.int32, (HW, Cc), 0) % W   # output x
    for dy in (-1, 0, 1):
        for dx in (-1, 0, 1):
            t = (dy + 1) * 3 + (dx + 1)
            s = dy * W + dx
            tap = pad_ref[PAD + s:PAD + s + HW, :]
            if dx == -1:
                tap = jnp.where(col >= 1, tap, 0.0)
            elif dx == 1:
                tap = jnp.where(col <= W - 2, tap, 0.0)
            patch_ref[:, t * Cc:(t + 1) * Cc] = tap


def _double_conv_kernel(W,             # static: spatial width
                        x_ref,         # (HW, Cin)     raw image (NHWC flat)
                        w1_ref,        # (9*Cin, C)    conv1 weight, BN1 folded
                        w2_ref,        # (9*C, C)      conv2 weight, BN2 folded
                        bias_ref,      # (2, C)        folded biases [b1; b2]
                        out_ref,       # (HW, C)
                        p1_ref,        # scratch (HW, 9*Cin)        conv1 im2col
                        pad1_ref,      # scratch (HW+2*(W+1), Cin)  padded x
                        p2_ref,        # scratch (HW, 9*C)          conv2 im2col
                        pad2_ref):     # scratch (HW+2*(W+1), C)    padded h
    # ---- conv1: in-kernel im2col + single matmul (K = 9*Cin), folded BN ----
    _build_im2col(pad1_ref, p1_ref, x_ref[...], W)
    h = jnp.dot(p1_ref[...], w1_ref[...], preferred_element_type=jnp.float32)
    h = _leaky_relu(h + bias_ref[0:1, :])                        # (HW, C)

    # ---- conv2: in-kernel im2col + single matmul (K = 9*C), folded BN ------
    _build_im2col(pad2_ref, p2_ref, h, W)
    o = jnp.dot(p2_ref[...], w2_ref[...], preferred_element_type=jnp.float32)
    o = _leaky_relu(o + bias_ref[1:2, :])

    out_ref[...] = o.astype(out_ref.dtype)


def double_conv_forward(x_nchw, params):
    """x_nchw: (B, Cin, H, W) f32  ->  (B, C, H, W) f32  (eval-mode BN)."""
    B, Cin, H, W = x_nchw.shape
    C = params["w1"].shape[0]
    eps = 1e-5
    HW = H * W
    PAD = W + 1

    # ---- fold BN (eval mode) into the conv weights / biases -----------------
    s1 = params["g1"] / jnp.sqrt(params["v1"] + eps)
    s2 = params["g2"] / jnp.sqrt(params["v2"] + eps)
    # torch conv weight (Cout, Cin, kh, kw) -> (kh, kw, Cin, Cout) -> (9*Cin, Cout)
    w1 = jnp.transpose(params["w1"], (2, 3, 1, 0)).reshape(9 * Cin, C) * s1[None, :]
    w2 = jnp.transpose(params["w2"], (2, 3, 1, 0)).reshape(9 * C, C) * s2[None, :]
    b1 = (params["b1"] - params["m1"]) * s1 + params["be1"]
    b2 = (params["b2"] - params["m2"]) * s2 + params["be2"]
    bias = jnp.stack([b1, b2], axis=0).astype(jnp.float32)        # (2, C)

    # ---- only layout plumbing left in XLA: NCHW -> flat NHWC ----------------
    x2d = jnp.transpose(x_nchw, (0, 2, 3, 1)).reshape(B * HW, Cin)
    x2d = x2d.astype(jnp.float32)

    out2d = pl.pallas_call(
        functools.partial(_double_conv_kernel, W),
        out_shape=jax.ShapeDtypeStruct((B * HW, C), jnp.float32),
        grid_spec=pltpu.PrefetchScalarGridSpec(
            num_scalar_prefetch=0,
            grid=(B,),
            in_specs=[
                pl.BlockSpec((HW, Cin), lambda b: (b, 0)),        # per-image input
                pl.BlockSpec((9 * Cin, C), lambda b: (0, 0)),     # w1 (BN folded)
                pl.BlockSpec((9 * C, C), lambda b: (0, 0)),       # w2 (BN folded)
                pl.BlockSpec((2, C), lambda b: (0, 0)),           # merged biases
            ],
            out_specs=pl.BlockSpec((HW, C), lambda b: (b, 0)),
            scratch_shapes=[
                pltpu.VMEM((HW, 9 * Cin), jnp.float32),           # conv1 im2col
                pltpu.VMEM((HW + 2 * PAD, Cin), jnp.float32),     # row-padded x
                pltpu.VMEM((HW, 9 * C), jnp.float32),             # conv2 im2col
                pltpu.VMEM((HW + 2 * PAD, C), jnp.float32),       # row-padded h
            ],
        ),
        compiler_params=pltpu.CompilerParams(
            dimension_semantics=("parallel",),
            vmem_limit_bytes=32 * 1024 * 1024,
        ),
    )(x2d, w1.astype(jnp.float32), w2.astype(jnp.float32), bias)

    return jnp.transpose(out2d.reshape(B, H, W, C), (0, 3, 1, 2))  # -> NCHW


def double_conv_reference(x_nchw, params):
    """Pure-JAX reference (same eval-mode BN semantics) for validation."""
    eps = 1e-5

    def conv_bn_lrelu(x, w, b, g, be, m, v):
        y = jax.lax.conv_general_dilated(
            x, w, window_strides=(1, 1), padding=((1, 1), (1, 1)),
            dimension_numbers=("NCHW", "OIHW", "NCHW"),
            precision=jax.lax.Precision.HIGHEST)
        y = y + b[None, :, None, None]
        s = g / jnp.sqrt(v + eps)
        y = (y - m[None, :, None, None]) * s[None, :, None, None] \
            + be[None, :, None, None]
        return jnp.where(y > 0, y, _NEG_SLOPE * y)

    h = conv_bn_lrelu(x_nchw, params["w1"], params["b1"], params["g1"],
                      params["be1"], params["m1"], params["v1"])
    return conv_bn_lrelu(h, params["w2"], params["b2"], params["g2"],
                         params["be2"], params["m2"], params["v2"])


def make_params(key, inplanes, planes):
    ks = jax.random.split(key, 12)
    n = lambda k, shape, s: s * jax.random.normal(k, shape, jnp.float32)
    # NOTE: nonzero running mean / non-unit variance / non-trivial gamma & beta
    # so the BN-folding algebra is actually exercised by the test.
    return {
        "w1": n(ks[0], (planes, inplanes, 3, 3), 0.2),
        "b1": n(ks[1], (planes,), 0.05),
        "g1": 1.0 + 0.1 * jax.random.normal(ks[2], (planes,), jnp.float32),
        "be1": n(ks[3], (planes,), 0.1),
        "m1": n(ks[4], (planes,), 0.1),
        "v1": 1.0 + 0.5 * jax.random.uniform(ks[5], (planes,), jnp.float32),
        "w2": n(ks[6], (planes, planes, 3, 3), 0.1),
        "b2": n(ks[7], (planes,), 0.05),
        "g2": 1.0 + 0.1 * jax.random.normal(ks[8], (planes,), jnp.float32),
        "be2": n(ks[9], (planes,), 0.1),
        "m2": n(ks[10], (planes,), 0.1),
        "v2": 1.0 + 0.5 * jax.random.uniform(ks[11], (planes,), jnp.float32),
    }


if __name__ == "__main__":
    key = jax.random.PRNGKey(0)
    kx, kp = jax.random.split(key)

    B, Cin, H, W = 2, 4, 16, 16
    planes = 32

    x = jax.random.normal(kx, (B, Cin, H, W), jnp.float32)
    params = make_params(kp, Cin, planes)

    out = jax.block_until_ready(double_conv_forward(x, params))
    ref = jax.block_until_ready(double_conv_reference(x, params))

    assert out.shape == (B, planes, H, W)
    max_err = float(jnp.max(jnp.abs(out - ref)))
    assert jnp.allclose(out, ref, atol=1e-3, rtol=1e-3), \
        f"mismatch vs reference (max abs err {max_err})"

    print("KERNEL_OK")
</pallas_src>

<mosaic_0001>
module attributes {stable_mosaic.version = 11 : i64} {
  func.func @_double_conv_kernel(%arg0: i32, %arg1: memref<256x4xf32, #tpu.memory_space<vmem>>, %arg2: memref<36x32xf32, #tpu.memory_space<vmem>>, %arg3: memref<288x32xf32, #tpu.memory_space<vmem>>, %arg4: memref<2x32xf32, #tpu.memory_space<vmem>>, %arg5: memref<256x32xf32, #tpu.memory_space<vmem>>, %arg6: memref<256x36xf32, #tpu.memory_space<vmem>>, %arg7: memref<290x4xf32, #tpu.memory_space<vmem>>, %arg8: memref<256x288xf32, #tpu.memory_space<vmem>>, %arg9: memref<290x32xf32, #tpu.memory_space<vmem>>) attributes {dimension_semantics = [#tpu.dimension_semantics<parallel>], iteration_bounds = array<i64: 2>, scalar_prefetch = 0 : i64, scratch_operands = 4 : i64, tpu.core_type = #tpu.core_type<tc>, window_params = [{transform_indices = @transform_0, window_bounds = array<i64: 256, 4>}, {pipeline_mode = #tpu.pipeline_mode<synchronous>, transform_indices = @transform_1, window_bounds = array<i64: 36, 32>}, {pipeline_mode = #tpu.pipeline_mode<synchronous>, transform_indices = @transform_2, window_bounds = array<i64: 288, 32>}, {pipeline_mode = #tpu.pipeline_mode<synchronous>, transform_indices = @transform_3, window_bounds = array<i64: 2, 32>}, {transform_indices = @transform_4, window_bounds = array<i64: 256, 32>}]} {
    %c0 = arith.constant 0 : index
    %c0_0 = arith.constant 0 : index
    %0 = vector.load %arg1[%c0, %c0_0] : memref<256x4xf32, #tpu.memory_space<vmem>>, vector<256x4xf32>
    %cst = arith.constant 0.000000e+00 : f32
    %1 = vector.broadcast %cst : f32 to vector<17x4xf32>
    %c0_1 = arith.constant 0 : index
    %c0_2 = arith.constant 0 : index
    %2 = vector.load %arg7[%c0_1, %c0_2] : memref<290x4xf32, #tpu.memory_space<vmem>>, vector<17x4xf32>
    tpu.vector_store %arg7[%c0_1, %c0_2], %1 {strides = array<i32>} : memref<290x4xf32, #tpu.memory_space<vmem>>, vector<17x4xf32>,
    %c273 = arith.constant 273 : index
    %c0_3 = arith.constant 0 : index
    %3 = vector.load %arg7[%c273, %c0_3] : memref<290x4xf32, #tpu.memory_space<vmem>>, vector<17x4xf32>
    tpu.vector_store %arg7[%c273, %c0_3], %1 {strides = array<i32>} : memref<290x4xf32, #tpu.memory_space<vmem>>, vector<17x4xf32>,
    %c17 = arith.constant 17 : index
    %c0_4 = arith.constant 0 : index
    %4 = vector.load %arg7[%c17, %c0_4] : memref<290x4xf32, #tpu.memory_space<vmem>>, vector<256x4xf32>
    tpu.vector_store %arg7[%c17, %c0_4], %0 {strides = array<i32>} : memref<290x4xf32, #tpu.memory_space<vmem>>, vector<256x4xf32>,
    %5 = tpu.iota {dimensions = array<i32: 0>} : vector<256x4xi32>
    %c16_i32 = arith.constant 16 : i32
    %c0_i32 = arith.constant 0 : i32
    %6 = arith.cmpi eq, %c16_i32, %c0_i32 : i32
    %c1_i32 = arith.constant 1 : i32
    %7 = arith.select %6, %c1_i32, %c16_i32 : i32
    %8 = vector.broadcast %7 : i32 to vector<256x4xi32>
    %9 = arith.remsi %5, %8 : vector<256x4xi32>
    %c0_i32_5 = arith.constant 0 : i32
    %10 = vector.broadcast %c0_i32_5 : i32 to vector<256x4xi32>
    %11 = arith.cmpi ne, %9, %10 : vector<256x4xi32>
    %c0_i32_6 = arith.constant 0 : i32
    %12 = vector.broadcast %c0_i32_6 : i32 to vector<256x4xi32>
    %13 = arith.cmpi slt, %9, %12 : vector<256x4xi32>
    %c0_i32_7 = arith.constant 0 : i32
    %14 = arith.cmpi slt, %7, %c0_i32_7 : i32
    %15 = vector.broadcast %14 : i1 to vector<256x4xi1>
    %16 = vector.broadcast %15 : vector<256x4xi1> to vector<256x4xi1>
    %17 = arith.xori %13, %16 : vector<256x4xi1>
    %18 = arith.andi %17, %11 : vector<256x4xi1>
    %19 = vector.broadcast %7 : i32 to vector<256x4xi32>
    %20 = arith.addi %9, %19 : vector<256x4xi32>
    %21 = arith.select %18, %20, %9 : vector<256x4xi1>, vector<256x4xi32>
    %c0_8 = arith.constant 0 : index
    %c0_9 = arith.constant 0 : index
    %22 = vector.load %arg7[%c0_8, %c0_9] : memref<290x4xf32, #tpu.memory_space<vmem>>, vector<256x4xf32>
    %c1_i32_10 = arith.constant 1 : i32
    %23 = vector.broadcast %c1_i32_10 : i32 to vector<256x4xi32>
    %24 = arith.cmpi sge, %21, %23 : vector<256x4xi32>
    %cst_11 = arith.constant 0.000000e+00 : f32
    %25 = vector.broadcast %cst_11 : f32 to vector<256x4xf32>
    %26 = arith.select %24, %22, %25 : vector<256x4xi1>, vector<256x4xf32>
    %c0_12 = arith.constant 0 : index
    %c0_13 = arith.constant 0 : index
    %27 = vector.load %arg6[%c0_12, %c0_13] : memref<256x36xf32, #tpu.memory_space<vmem>>, vector<256x4xf32>
    tpu.vector_store %arg6[%c0_12, %c0_13], %26 {strides = array<i32>} : memref<256x36xf32, #tpu.memory_space<vmem>>, vector<256x4xf32>,
    %c1 = arith.constant 1 : index
    %c0_14 = arith.constant 0 : index
    %28 = vector.load %arg7[%c1, %c0_14] : memref<290x4xf32, #tpu.memory_space<vmem>>, vector<256x4xf32>
    %c0_15 = arith.constant 0 : index
    %c4 = arith.constant 4 : index
    %29 = vector.load %arg6[%c0_15, %c4] : memref<256x36xf32, #tpu.memory_space<vmem>>, vector<256x4xf32>
    tpu.vector_store %arg6[%c0_15, %c4], %28 {strides = array<i32>} : memref<256x36xf32, #tpu.memory_space<vmem>>, vector<256x4xf32>,
    %c2 = arith.constant 2 : index
    %c0_16 = arith.constant 0 : index
    %30 = vector.load %arg7[%c2, %c0_16] : memref<290x4xf32, #tpu.memory_space<vmem>>, vector<256x4xf32>
    %c14_i32 = arith.constant 14 : i32
    %31 = vector.broadcast %c14_i32 : i32 to vector<256x4xi32>
    %32 = arith.cmpi sle, %21, %31 : vector<256x4xi32>
    %cst_17 = arith.constant 0.000000e+00 : f32
    %33 = vector.broadcast %cst_17 : f32 to vector<256x4xf32>
    %34 = arith.select %32, %30, %33 : vector<256x4xi1>, vector<256x4xf32>
    %c0_18 = arith.constant 0 : index
    %c8 = arith.constant 8 : index
    %35 = vector.load %arg6[%c0_18, %c8] : memref<256x36xf32, #tpu.memory_space<vmem>>, vector<256x4xf32>
    tpu.vector_store %arg6[%c0_18, %c8], %34 {strides = array<i32>} : memref<256x36xf32, #tpu.memory_space<vmem>>, vector<256x4xf32>,
    %c16 = arith.constant 16 : index
    %c0_19 = arith.constant 0 : index
    %36 = vector.load %arg7[%c16, %c0_19] : memref<290x4xf32, #tpu.memory_space<vmem>>, vector<256x4xf32>
    %c1_i32_20 = arith.constant 1 : i32
    %37 = vector.broadcast %c1_i32_20 : i32 to vector<256x4xi32>
    %38 = arith.cmpi sge, %21, %37 : vector<256x4xi32>
    %cst_21 = arith.constant 0.000000e+00 : f32
    %39 = vector.broadcast %cst_21 : f32 to vector<256x4xf32>
    %40 = arith.select %38, %36, %39 : vector<256x4xi1>, vector<256x4xf32>
    %c0_22 = arith.constant 0 : index
    %c12 = arith.constant 12 : index
    %41 = vector.load %arg6[%c0_22, %c12] : memref<256x36xf32, #tpu.memory_space<vmem>>, vector<256x4xf32>
    tpu.vector_store %arg6[%c0_22, %c12], %40 {strides = array<i32>} : memref<256x36xf32, #tpu.memory_space<vmem>>, vector<256x4xf32>,
    %c17_23 = arith.constant 17 : index
    %c0_24 = arith.constant 0 : index
    %42 = vector.load %arg7[%c17_23, %c0_24] : memref<290x4xf32, #tpu.memory_space<vmem>>, vector<256x4xf32>
    %c0_25 = arith.constant 0 : index
    %c16_26 = arith.constant 16 : index
    %43 = vector.load %arg6[%c0_25, %c16_26] : memref<256x36xf32, #tpu.memory_space<vmem>>, vector<256x4xf32>
    tpu.vector_store %arg6[%c0_25, %c16_26], %42 {strides = array<i32>} : memref<256x36xf32, #tpu.memory_space<vmem>>, vector<256x4xf32>,
    %c18 = arith.constant 18 : index
    %c0_27 = arith.constant 0 : index
    %44 = vector.load %arg7[%c18, %c0_27] : memref<290x4xf32, #tpu.memory_space<vmem>>, vector<256x4xf32>
    %c14_i32_28 = arith.constant 14 : i32
    %45 = vector.broadcast %c14_i32_28 : i32 to vector<256x4xi32>
    %46 = arith.cmpi sle, %21, %45 : vector<256x4xi32>
    %cst_29 = arith.constant 0.000000e+00 : f32
    %47 = vector.broadcast %cst_29 : f32 to vector<256x4xf32>
    %48 = arith.select %46, %44, %47 : vector<256x4xi1>, vector<256x4xf32>
    %c0_30 = arith.constant 0 : index
    %c20 = arith.constant 20 : index
    %49 = vector.load %arg6[%c0_30, %c20] : memref<256x36xf32, #tpu.memory_space<vmem>>, vector<256x4xf32>
    tpu.vector_store %arg6[%c0_30, %c20], %48 {strides = array<i32>} : memref<256x36xf32, #tpu.memory_space<vmem>>, vector<256x4xf32>,
    %c32 = arith.constant 32 : index
    %c0_31 = arith.constant 0 : index
    %50 = vector.load %arg7[%c32, %c0_31] : memref<290x4xf32, #tpu.memory_space<vmem>>, vector<256x4xf32>
    %c1_i32_32 = arith.constant 1 : i32
    %51 = vector.broadcast %c1_i32_32 : i32 to vector<256x4xi32>
    %52 = arith.cmpi sge, %21, %51 : vector<256x4xi32>
    %cst_33 = arith.constant 0.000000e+00 : f32
    %53 = vector.broadcast %cst_33 : f32 to vector<256x4xf32>
    %54 = arith.select %52, %50, %53 : vector<256x4xi1>, vector<256x4xf32>
    %c0_34 = arith.constant 0 : index
    %c24 = arith.constant 24 : index
    %55 = vector.load %arg6[%c0_34, %c24] : memref<256x36xf32, #tpu.memory_space<vmem>>, vector<256x4xf32>
    tpu.vector_store %arg6[%c0_34, %c24], %54 {strides = array<i32>} : memref<256x36xf32, #tpu.memory_space<vmem>>, vector<256x4xf32>,
    %c33 = arith.constant 33 : index
    %c0_35 = arith.constant 0 : index
    %56 = vector.load %arg7[%c33, %c0_35] : memref<290x4xf32, #tpu.memory_space<vmem>>, vector<256x4xf32>
    %c0_36 = arith.constant 0 : index
    %c28 = arith.constant 28 : index
    %57 = vector.load %arg6[%c0_36, %c28] : memref<256x36xf32, #tpu.memory_space<vmem>>, vector<256x4xf32>
    tpu.vector_store %arg6[%c0_36, %c28], %56 {strides = array<i32>} : memref<256x36xf32, #tpu.memory_space<vmem>>, vector<256x4xf32>,
    %c34 = arith.constant 34 : index
    %c0_37 = arith.constant 0 : index
    %58 = vector.load %arg7[%c34, %c0_37] : memref<290x4xf32, #tpu.memory_space<vmem>>, vector<256x4xf32>
    %c14_i32_38 = arith.constant 14 : i32
    %59 = vector.broadcast %c14_i32_38 : i32 to vector<256x4xi32>
    %60 = arith.cmpi sle, %21, %59 : vector<256x4xi32>
    %cst_39 = arith.constant 0.000000e+00 : f32
    %61 = vector.broadcast %cst_39 : f32 to vector<256x4xf32>
    %62 = arith.select %60, %58, %61 : vector<256x4xi1>, vector<256x4xf32>
    %c0_40 = arith.constant 0 : index
    %c32_41 = arith.constant 32 : index
    %63 = vector.load %arg6[%c0_40, %c32_41] : memref<256x36xf32, #tpu.memory_space<vmem>>, vector<256x4xf32>
    tpu.vector_store %arg6[%c0_40, %c32_41], %62 {strides = array<i32>} : memref<256x36xf32, #tpu.memory_space<vmem>>, vector<256x4xf32>,
    %c0_42 = arith.constant 0 : index
    %c0_43 = arith.constant 0 : index
    %64 = vector.load %arg6[%c0_42, %c0_43] : memref<256x36xf32, #tpu.memory_space<vmem>>, vector<256x36xf32>
    %c0_44 = arith.constant 0 : index
    %c0_45 = arith.constant 0 : index
    %65 = vector.load %arg2[%c0_44, %c0_45] : memref<36x32xf32, #tpu.memory_space<vmem>>, vector<36x32xf32>
    %cst_46 = arith.constant dense<0.000000e+00> : vector<256x32xf32>
    %66 = tpu.matmul %64, %65, %cst_46 {dimension_numbers = #tpu.dot_dimension_numbers<[1], [0], [0], [1], [0, 0, 1, 1], [], []>} : vector<256x36xf32>, vector<36x32xf32>, vector<256x32xf32> -> vector<256x32xf32>
    %c0_47 = arith.constant 0 : index
    %c0_48 = arith.constant 0 : index
    %67 = vector.load %arg4[%c0_47, %c0_48] : memref<2x32xf32, #tpu.memory_space<vmem>>, vector<1x32xf32>
    %68 = vector.broadcast %67 : vector<1x32xf32> to vector<256x32xf32>
    %69 = arith.addf %66, %68 : vector<256x32xf32>
    %cst_49 = arith.constant 0.000000e+00 : f32
    %70 = vector.broadcast %cst_49 : f32 to vector<256x32xf32>
    %71 = arith.cmpf ogt, %69, %70 : vector<256x32xf32>
    %cst_50 = arith.constant 0.00999999977 : f32
    %72 = vector.broadcast %cst_50 : f32 to vector<256x32xf32>
    %73 = arith.mulf %72, %69 : vector<256x32xf32>
    %74 = arith.select %71, %69, %73 : vector<256x32xi1>, vector<256x32xf32>
    %cst_51 = arith.constant 0.000000e+00 : f32
    %75 = vector.broadcast %cst_51 : f32 to vector<17x32xf32>
    %c0_52 = arith.constant 0 : index
    %c0_53 = arith.constant 0 : index
    %76 = vector.load %arg9[%c0_52, %c0_53] : memref<290x32xf32, #tpu.memory_space<vmem>>, vector<17x32xf32>
    tpu.vector_store %arg9[%c0_52, %c0_53], %75 {strides = array<i32>} : memref<290x32xf32, #tpu.memory_space<vmem>>, vector<17x32xf32>,
    %c273_54 = arith.constant 273 : index
    %c0_55 = arith.constant 0 : index
    %77 = vector.load %arg9[%c273_54, %c0_55] : memref<290x32xf32, #tpu.memory_space<vmem>>, vector<17x32xf32>
    tpu.vector_store %arg9[%c273_54, %c0_55], %75 {strides = array<i32>} : memref<290x32xf32, #tpu.memory_space<vmem>>, vector<17x32xf32>,
    %c17_56 = arith.constant 17 : index
    %c0_57 = arith.constant 0 : index
    %78 = vector.load %arg9[%c17_56, %c0_57] : memref<290x32xf32, #tpu.memory_space<vmem>>, vector<256x32xf32>
    tpu.vector_store %arg9[%c17_56, %c0_57], %74 {strides = array<i32>} : memref<290x32xf32, #tpu.memory_space<vmem>>, vector<256x32xf32>,
    %79 = tpu.iota {dimensions = array<i32: 0>} : vector<256x32xi32>
    %c16_i32_58 = arith.constant 16 : i32
    %c0_i32_59 = arith.constant 0 : i32
    %80 = arith.cmpi eq, %c16_i32_58, %c0_i32_59 : i32
    %c1_i32_60 = arith.constant 1 : i32
    %81 = arith.select %80, %c1_i32_60, %c16_i32_58 : i32
    %82 = vector.broadcast %81 : i32 to vector<256x32xi32>
    %83 = arith.remsi %79, %82 : vector<256x32xi32>
    %c0_i32_61 = arith.constant 0 : i32
    %84 = vector.broadcast %c0_i32_61 : i32 to vector<256x32xi32>
    %85 = arith.cmpi ne, %83, %84 : vector<256x32xi32>
    %c0_i32_62 = arith.constant 0 : i32
    %86 = vector.broadcast %c0_i32_62 : i32 to vector<256x32xi32>
    %87 = arith.cmpi slt, %83, %86 : vector<256x32xi32>
    %c0_i32_63 = arith.constant 0 : i32
    %88 = arith.cmpi slt, %81, %c0_i32_63 : i32
    %89 = vector.broadcast %88 : i1 to vector<256x32xi1>
    %90 = vector.broadcast %89 : vector<256x32xi1> to vector<256x32xi1>
    %91 = arith.xori %87, %90 : vector<256x32xi1>
    %92 = arith.andi %91, %85 : vector<256x32xi1>
    %93 = vector.broadcast %81 : i32 to vector<256x32xi32>
    %94 = arith.addi %83, %93 : vector<256x32xi32>
    %95 = arith.select %92, %94, %83 : vector<256x32xi1>, vector<256x32xi32>
    %c0_64 = arith.constant 0 : index
    %c0_65 = arith.constant 0 : index
    %96 = vector.load %arg9[%c0_64, %c0_65] : memref<290x32xf32, #tpu.memory_space<vmem>>, vector<256x32xf32>
    %c1_i32_66 = arith.constant 1 : i32
    %97 = vector.broadcast %c1_i32_66 : i32 to vector<256x32xi32>
    %98 = arith.cmpi sge, %95, %97 : vector<256x32xi32>
    %cst_67 = arith.constant 0.000000e+00 : f32
    %99 = vector.broadcast %cst_67 : f32 to vector<256x32xf32>
    %100 = arith.select %98, %96, %99 : vector<256x32xi1>, vector<256x32xf32>
    %c0_68 = arith.constant 0 : index
    %c0_69 = arith.constant 0 : index
    %101 = vector.load %arg8[%c0_68, %c0_69] : memref<256x288xf32, #tpu.memory_space<vmem>>, vector<256x32xf32>
    tpu.vector_store %arg8[%c0_68, %c0_69], %100 {strides = array<i32>} : memref<256x288xf32, #tpu.memory_space<vmem>>, vector<256x32xf32>,
    %c1_70 = arith.constant 1 : index
    %c0_71 = arith.constant 0 : index
    %102 = vector.load %arg9[%c1_70, %c0_71] : memref<290x32xf32, #tpu.memory_space<vmem>>, vector<256x32xf32>
    %c0_72 = arith.constant 0 : index
    %c32_73 = arith.constant 32 : index
    %103 = vector.load %arg8[%c0_72, %c32_73] : memref<256x288xf32, #tpu.memory_space<vmem>>, vector<256x32xf32>
    tpu.vector_store %arg8[%c0_72, %c32_73], %102 {strides = array<i32>} : memref<256x288xf32, #tpu.memory_space<vmem>>, vector<256x32xf32>,
    %c2_74 = arith.constant 2 : index
    %c0_75 = arith.constant 0 : index
    %104 = vector.load %arg9[%c2_74, %c0_75] : memref<290x32xf32, #tpu.memory_space<vmem>>, vector<256x32xf32>
    %c14_i32_76 = arith.constant 14 : i32
    %105 = vector.broadcast %c14_i32_76 : i32 to vector<256x32xi32>
    %106 = arith.cmpi sle, %95, %105 : vector<256x32xi32>
    %cst_77 = arith.constant 0.000000e+00 : f32
    %107 = vector.broadcast %cst_77 : f32 to vector<256x32xf32>
    %108 = arith.select %106, %104, %107 : vector<256x32xi1>, vector<256x32xf32>
    %c0_78 = arith.constant 0 : index
    %c64 = arith.constant 64 : index
    %109 = vector.load %arg8[%c0_78, %c64] : memref<256x288xf32, #tpu.memory_space<vmem>>, vector<256x32xf32>
    tpu.vector_store %arg8[%c0_78, %c64], %108 {strides = array<i32>} : memref<256x288xf32, #tpu.memory_space<vmem>>, vector<256x32xf32>,
    %c16_79 = arith.constant 16 : index
    %c0_80 = arith.constant 0 : index
    %110 = vector.load %arg9[%c16_79, %c0_80] : memref<290x32xf32, #tpu.memory_space<vmem>>, vector<256x32xf32>
    %c1_i32_81 = arith.constant 1 : i32
    %111 = vector.broadcast %c1_i32_81 : i32 to vector<256x32xi32>
    %112 = arith.cmpi sge, %95, %111 : vector<256x32xi32>
    %cst_82 = arith.constant 0.000000e+00 : f32
    %113 = vector.broadcast %cst_82 : f32 to vector<256x32xf32>
    %114 = arith.select %112, %110, %113 : vector<256x32xi1>, vector<256x32xf32>
    %c0_83 = arith.constant 0 : index
    %c96 = arith.constant 96 : index
    %115 = vector.load %arg8[%c0_83, %c96] : memref<256x288xf32, #tpu.memory_space<vmem>>, vector<256x32xf32>
    tpu.vector_store %arg8[%c0_83, %c96], %114 {strides = array<i32>} : memref<256x288xf32, #tpu.memory_space<vmem>>, vector<256x32xf32>,
    %c17_84 = arith.constant 17 : index
    %c0_85 = arith.constant 0 : index
    %116 = vector.load %arg9[%c17_84, %c0_85] : memref<290x32xf32, #tpu.memory_space<vmem>>, vector<256x32xf32>
    %c0_86 = arith.constant 0 : index
    %c128 = arith.constant 128 : index
    %117 = vector.load %arg8[%c0_86, %c128] : memref<256x288xf32, #tpu.memory_space<vmem>>, vector<256x32xf32>
    tpu.vector_store %arg8[%c0_86, %c128], %116 {strides = array<i32>} : memref<256x288xf32, #tpu.memory_space<vmem>>, vector<256x32xf32>,
    %c18_87 = arith.constant 18 : index
    %c0_88 = arith.constant 0 : index
    %118 = vector.load %arg9[%c18_87, %c0_88] : memref<290x32xf32, #tpu.memory_space<vmem>>, vector<256x32xf32>
    %c14_i32_89 = arith.constant 14 : i32
    %119 = vector.broadcast %c14_i32_89 : i32 to vector<256x32xi32>
    %120 = arith.cmpi sle, %95, %119 : vector<256x32xi32>
    %cst_90 = arith.constant 0.000000e+00 : f32
    %121 = vector.broadcast %cst_90 : f32 to vector<256x32xf32>
    %122 = arith.select %120, %118, %121 : vector<256x32xi1>, vector<256x32xf32>
    %c0_91 = arith.constant 0 : index
    %c160 = arith.constant 160 : index
    %123 = vector.load %arg8[%c0_91, %c160] : memref<256x288xf32, #tpu.memory_space<vmem>>, vector<256x32xf32>
    tpu.vector_store %arg8[%c0_91, %c160], %122 {strides = array<i32>} : memref<256x288xf32, #tpu.memory_space<vmem>>, vector<256x32xf32>,
    %c32_92 = arith.constant 32 : index
    %c0_93 = arith.constant 0 : index
    %124 = vector.load %arg9[%c32_92, %c0_93] : memref<290x32xf32, #tpu.memory_space<vmem>>, vector<256x32xf32>
    %c1_i32_94 = arith.constant 1 : i32
    %125 = vector.broadcast %c1_i32_94 : i32 to vector<256x32xi32>
    %126 = arith.cmpi sge, %95, %125 : vector<256x32xi32>
    %cst_95 = arith.constant 0.000000e+00 : f32
    %127 = vector.broadcast %cst_95 : f32 to vector<256x32xf32>
    %128 = arith.select %126, %124, %127 : vector<256x32xi1>, vector<256x32xf32>
    %c0_96 = arith.constant 0 : index
    %c192 = arith.constant 192 : index
    %129 = vector.load %arg8[%c0_96, %c192] : memref<256x288xf32, #tpu.memory_space<vmem>>, vector<256x32xf32>
    tpu.vector_store %arg8[%c0_96, %c192], %128 {strides = array<i32>} : memref<256x288xf32, #tpu.memory_space<vmem>>, vector<256x32xf32>,
    %c33_97 = arith.constant 33 : index
    %c0_98 = arith.constant 0 : index
    %130 = vector.load %arg9[%c33_97, %c0_98] : memref<290x32xf32, #tpu.memory_space<vmem>>, vector<256x32xf32>
    %c0_99 = arith.constant 0 : index
    %c224 = arith.constant 224 : index
    %131 = vector.load %arg8[%c0_99, %c224] : memref<256x288xf32, #tpu.memory_space<vmem>>, vector<256x32xf32>
    tpu.vector_store %arg8[%c0_99, %c224], %130 {strides = array<i32>} : memref<256x288xf32, #tpu.memory_space<vmem>>, vector<256x32xf32>,
    %c34_100 = arith.constant 34 : index
    %c0_101 = arith.constant 0 : index
    %132 = vector.load %arg9[%c34_100, %c0_101] : memref<290x32xf32, #tpu.memory_space<vmem>>, vector<256x32xf32>
    %c14_i32_102 = arith.constant 14 : i32
    %133 = vector.broadcast %c14_i32_102 : i32 to vector<256x32xi32>
    %134 = arith.cmpi sle, %95, %133 : vector<256x32xi32>
    %cst_103 = arith.constant 0.000000e+00 : f32
    %135 = vector.broadcast %cst_103 : f32 to vector<256x32xf32>
    %136 = arith.select %134, %132, %135 : vector<256x32xi1>, vector<256x32xf32>
    %c0_104 = arith.constant 0 : index
    %c256 = arith.constant 256 : index
    %137 = vector.load %arg8[%c0_104, %c256] : memref<256x288xf32, #tpu.memory_space<vmem>>, vector<256x32xf32>
    tpu.vector_store %arg8[%c0_104, %c256], %136 {strides = array<i32>} : memref<256x288xf32, #tpu.memory_space<vmem>>, vector<256x32xf32>,
    %c0_105 = arith.constant 0 : index
    %c0_106 = arith.constant 0 : index
    %138 = vector.load %arg8[%c0_105, %c0_106] : memref<256x288xf32, #tpu.memory_space<vmem>>, vector<256x288xf32>
    %c0_107 = arith.constant 0 : index
    %c0_108 = arith.constant 0 : index
    %139 = vector.load %arg3[%c0_107, %c0_108] : memref<288x32xf32, #tpu.memory_space<vmem>>, vector<288x32xf32>
    %cst_109 = arith.constant dense<0.000000e+00> : vector<256x32xf32>
    %140 = tpu.matmul %138, %139, %cst_109 {dimension_numbers = #tpu.dot_dimension_numbers<[1], [0], [0], [1], [0, 0, 1, 1], [], []>} : vector<256x288xf32>, vector<288x32xf32>, vector<256x32xf32> -> vector<256x32xf32>
    %c1_110 = arith.constant 1 : index
    %c0_111 = arith.constant 0 : index
    %141 = vector.load %arg4[%c1_110, %c0_111] : memref<2x32xf32, #tpu.memory_space<vmem>>, vector<1x32xf32>
    %142 = vector.broadcast %141 : vector<1x32xf32> to vector<256x32xf32>
    %143 = arith.addf %140, %142 : vector<256x32xf32>
    %cst_112 = arith.constant 0.000000e+00 : f32
    %144 = vector.broadcast %cst_112 : f32 to vector<256x32xf32>
    %145 = arith.cmpf ogt, %143, %144 : vector<256x32xf32>
    %cst_113 = arith.constant 0.00999999977 : f32
    %146 = vector.broadcast %cst_113 : f32 to vector<256x32xf32>
    %147 = arith.mulf %146, %143 : vector<256x32xf32>
    %148 = arith.select %145, %143, %147 : vector<256x32xi1>, vector<256x32xf32>
    %c0_114 = arith.constant 0 : index
    %c0_115 = arith.constant 0 : index
    %149 = vector.load %arg5[%c0_114, %c0_115] : memref<256x32xf32, #tpu.memory_space<vmem>>, vector<256x32xf32>
    tpu.vector_store %arg5[%c0_114, %c0_115], %148 {strides = array<i32>} : memref<256x32xf32, #tpu.memory_space<vmem>>, vector<256x32xf32>,
    return
  }
  func.func @transform_0(%arg0: i32) -> (i32, i32) {
    %c0_i32 = arith.constant 0 : i32
    %c0_i32_0 = arith.constant 0 : i32
    return %arg0, %c0_i32 : i32, i32
  }
  func.func @transform_1(%arg0: i32) -> (i32, i32) {
    %c0_i32 = arith.constant 0 : i32
    %c0_i32_0 = arith.constant 0 : i32
    %c0_i32_1 = arith.constant 0 : i32
    return %c0_i32, %c0_i32_0 : i32, i32
  }
  func.func @transform_2(%arg0: i32) -> (i32, i32) {
    %c0_i32 = arith.constant 0 : i32
    %c0_i32_0 = arith.constant 0 : i32
    %c0_i32_1 = arith.constant 0 : i32
    return %c0_i32, %c0_i32_0 : i32, i32
  }
  func.func @transform_3(%arg0: i32) -> (i32, i32) {
    %c0_i32 = arith.constant 0 : i32
    %c0_i32_0 = arith.constant 0 : i32
    %c0_i32_1 = arith.constant 0 : i32
    return %c0_i32, %c0_i32_0 : i32, i32
  }
  func.func @transform_4(%arg0: i32) -> (i32, i32) {
    %c0_i32 = arith.constant 0 : i32
    %c0_i32_0 = arith.constant 0 : i32
    return %arg0, %c0_i32 : i32, i32
  }
}

</mosaic_0001>

<llo_original>
// kernel: tpu_custom_call.1
$region0: #{tpu_custom_call.1}
  #allocation0 [shape = 'u32[]', space=smem, size = 0x4, offset = 0x4, fixed_abs, tag = 'smem constant byte address 0x4 - core index']
  #allocation1 [shape = 'u32[144,128]{1,0:T(1,128)}', space=vmem, size = 0x12000, scoped, tag = 'internal scratch']
  #allocation2 [shape = 'f32[256,36]{1,0:T(8,128)}', space=vmem, size = 0x20000, scoped, tag = 'scratch operand']
  #allocation3 [shape = 'f32[290,4]{1,0:T(8,128)}', space=vmem, size = 0x25000, scoped, tag = 'scratch operand']
  #allocation4 [shape = 'f32[256,288]{1,0:T(8,128)}', space=vmem, size = 0x60000, scoped, tag = 'scratch operand']
  #allocation5 [shape = 'f32[290,32]{1,0:T(8,128)}', space=vmem, size = 0x25000, scoped, tag = 'scratch operand']
  %s0 = inlined_call_operand.vmem [shape: f32[512,4], index: 0, kind: input, shape index: {}]
  %s1 = inlined_call_operand.vmem [shape: f32[36,32], index: 1, kind: input, shape index: {}]
  %s2 = inlined_call_operand.vmem [shape: f32[288,32], index: 2, kind: input, shape index: {}]
  %s3 = inlined_call_operand.vmem [shape: f32[2,32], index: 3, kind: input, shape index: {}]
  %s4 = inlined_call_operand.vmem [shape: f32[512,32], index: 4, kind: output, shape index: {}]
  %s5 = sld [smem:[#allocation0]]
  $region49: #{tpu_custom_call.1} parent=0
    _
  %s7 = ssub.s32 1, %s5
  %s8 = scalar_select 0, %s7, %s5
  loop: start=0, step=1, limit=4
  $region2: #{tpu_custom_call.1} parent=0 // loop_pre_header
    _
  $region3: #{tpu_custom_call.1} parent=0 // loop_header
    %s10 = sphi 0, %s14
    %p11 = scmp.ge.s32.totalorder %s10, 4
    %s20 = sphi 0, %s22
    %s23 = sphi 0, %s20
    %s24 = sphi 0, %s23
    %s40 = sphi 0, %s24
    %s44 = sphi 0, %s44
    %s46 = sphi 0, %s44
    %s47 = sphi 0, %s46
    %s61 = sphi 0, %s47
    %s65 = sphi 0, %s65
    %s67 = sphi 0, %s65
    %s68 = sphi 0, %s67
    %s82 = sphi 0, %s68
    %s86 = sphi 0, %s86
    %s88 = sphi 0, %s86
    %s89 = sphi 0, %s88
    %s103 = sphi 0, %s89
    %s109 = sphi 0, %s111
    %s112 = sphi 0, %s109
    %s113 = sphi 0, %s112
    %s129 = sphi 0, %s113
  $region4: #{tpu_custom_call.1} parent=0 // loop_header_branch
    %13 = sbr.rel (%p11) target = $region8
  $region5: #{tpu_custom_call.1} parent=0 // loop_body
    %s15 = ssub.s32 %s10, 1
    %s16 = ssub.s32 %s10, 2
    %s17 = sadd.s32 %s10, 1
    %s18 = ssub.s32 %s10, %s17
    %p19 = scmp.eq.s32.totalorder %s18, 0
    %s21 = sadd.s32 %s20, 1
    %s22 = scalar_select %p19, %s20, %s21
    %p25 = pneg %p19
    %p26 = scmp.eq.s32.totalorder %s10, 1
    %p27 = por %p25, %p26
    %p28 = scmp.ne.s32.totalorder %s20, %s23
    %p29 = scmp.eq.s32.totalorder %s10, 0
    %p30 = por %p28, %p29
    %p31 = scmp.ne.s32.totalorder %s20, %s23
    %p32 = scmp.eq.s32.totalorder %s15, 1
    %p33 = por %p31, %p32
    %p34 = scmp.ne.s32.totalorder %s23, %s24
    %p35 = scmp.eq.s32.totalorder %s15, 0
    %p36 = por %p34, %p35
    %p37 = scmp.ne.s32.totalorder %s23, %s24
    %p38 = scmp.eq.s32.totalorder %s16, 1
    %p39 = por %p37, %p38
    %p41 = scmp.ne.s32.totalorder %s24, %s40
    %p42 = scmp.eq.s32.totalorder %s16, 0
    %p43 = por %p41, %p42
    %s45 = sadd.s32 %s44, 1
    %p48 = scmp.eq.s32.totalorder %s10, 1
    %p49 = scmp.ne.s32.totalorder %s44, %s46
    %p50 = scmp.eq.s32.totalorder %s10, 0
    %p51 = por %p49, %p50
    %p52 = scmp.ne.s32.totalorder %s44, %s46
    %p53 = scmp.eq.s32.totalorder %s15, 1
    %p54 = por %p52, %p53
    %p55 = scmp.ne.s32.totalorder %s46, %s47
    %p56 = scmp.eq.s32.totalorder %s15, 0
    %p57 = por %p55, %p56
    %p58 = scmp.ne.s32.totalorder %s46, %s47
    %p59 = scmp.eq.s32.totalorder %s16, 1
    %p60 = por %p58, %p59
    %p62 = scmp.ne.s32.totalorder %s47, %s61
    %p63 = scmp.eq.s32.totalorder %s16, 0
    %p64 = por %p62, %p63
    %s66 = sadd.s32 %s65, 1
    %p69 = scmp.eq.s32.totalorder %s10, 1
    %p70 = scmp.ne.s32.totalorder %s65, %s67
    %p71 = scmp.eq.s32.totalorder %s10, 0
    %p72 = por %p70, %p71
    %p73 = scmp.ne.s32.totalorder %s65, %s67
    %p74 = scmp.eq.s32.totalorder %s15, 1
    %p75 = por %p73, %p74
    %p76 = scmp.ne.s32.totalorder %s67, %s68
    %p77 = scmp.eq.s32.totalorder %s15, 0
    %p78 = por %p76, %p77
    %p79 = scmp.ne.s32.totalorder %s67, %s68
    %p80 = scmp.eq.s32.totalorder %s16, 1
    %p81 = por %p79, %p80
    %p83 = scmp.ne.s32.totalorder %s68, %s82
    %p84 = scmp.eq.s32.totalorder %s16, 0
    %p85 = por %p83, %p84
    %s87 = sadd.s32 %s86, 1
    %p90 = scmp.eq.s32.totalorder %s10, 1
    %p91 = scmp.ne.s32.totalorder %s86, %s88
    %p92 = scmp.eq.s32.totalorder %s10, 0
    %p93 = por %p91, %p92
    %p94 = scmp.ne.s32.totalorder %s86, %s88
    %p95 = scmp.eq.s32.totalorder %s15, 1
    %p96 = por %p94, %p95
    %p97 = scmp.ne.s32.totalorder %s88, %s89
    %p98 = scmp.eq.s32.totalorder %s15, 0
    %p99 = por %p97, %p98
    %p100 = scmp.ne.s32.totalorder %s88, %s89
    %p101 = scmp.eq.s32.totalorder %s16, 1
    %p102 = por %p100, %p101
    %p104 = scmp.ne.s32.totalorder %s89, %s103
    %p105 = scmp.eq.s32.totalorder %s16, 0
    %p106 = por %p104, %p105
    %s107 = ssub.s32 %s10, %s17
    %p108 = scmp.eq.s32.totalorder %s107, 0
    %s110 = sadd.s32 %s109, 1
    %s111 = scalar_select %p108, %s109, %s110
    %p114 = pneg %p108
    %p115 = scmp.eq.s32.totalorder %s10, 1
    %p116 = por %p114, %p115
    %p117 = scmp.ne.s32.totalorder %s109, %s112
    %p118 = scmp.eq.s32.totalorder %s10, 0
    %p119 = por %p117, %p118
    %p120 = scmp.ne.s32.totalorder %s109, %s112
    %p121 = scmp.eq.s32.totalorder %s15, 1
    %p122 = por %p120, %p121
    %p123 = scmp.ne.s32.totalorder %s112, %s113
    %p124 = scmp.eq.s32.totalorder %s15, 0
    %p125 = por %p123, %p124
    %p126 = scmp.ne.s32.totalorder %s112, %s113
    %p127 = scmp.eq.s32.totalorder %s16, 1
    %p128 = por %p126, %p127
    %p130 = scmp.ne.s32.totalorder %s113, %s129
    %p131 = scmp.eq.s32.totalorder %s16, 0
    %p132 = por %p130, %p131
    %p133 = scmp.le.s32.totalorder 1, %s10
    %p134 = scmp.lt.s32.totalorder %s10, 3
    %p135 = pnand %p133, %p134
    %p136 = pneg %p135
    // Predicated region
    $region9: #{tpu_custom_call.1} parent=5 // pred_check
      _
    $region10: #{tpu_custom_call.1} parent=5 // pred_check_branch
      %138 = sbr.rel (%p135) target = $region12
    $region11: #{tpu_custom_call.1} parent=5 // pred_region
      %s139 = ssub.s32 %s10, 1
      // Predicated region
      $region13: #{tpu_custom_call.1} parent=11 // pred_check
        %p140 = pneg %p57
      $region14: #{tpu_custom_call.1} parent=11 // pred_check_branch
        %142 = sbr.rel (%p140) target = $region16
      $region15: #{tpu_custom_call.1} parent=11 // pred_region
        _
      $region16: #{tpu_custom_call.1} parent=11 // pred_fallthru
        _
      // Predicated region
      $region17: #{tpu_custom_call.1} parent=11 // pred_check
        %p143 = pneg %p78
      $region18: #{tpu_custom_call.1} parent=11 // pred_check_branch
        %145 = sbr.rel (%p143) target = $region20
      $region19: #{tpu_custom_call.1} parent=11 // pred_region
        _
      $region20: #{tpu_custom_call.1} parent=11 // pred_fallthru
        _
      // Predicated region
      $region21: #{tpu_custom_call.1} parent=11 // pred_check
        %p146 = pneg %p99
      $region22: #{tpu_custom_call.1} parent=11 // pred_check_branch
        %148 = sbr.rel (%p146) target = $region24
      $region23: #{tpu_custom_call.1} parent=11 // pred_region
        _
      $region24: #{tpu_custom_call.1} parent=11 // pred_fallthru
        _
    $region12: #{tpu_custom_call.1} parent=5 // pred_fallthru
      _
    %p149 = scmp.lt.s32.totalorder %s10, 2
    // Predicated region
    $region25: #{tpu_custom_call.1} parent=5 // pred_check
      %p150 = pneg %p149
    $region26: #{tpu_custom_call.1} parent=5 // pred_check_branch
      %152 = sbr.rel (%p150) target = $region28
    $region27: #{tpu_custom_call.1} parent=5 // pred_region
      // Predicated region
      $region29: #{tpu_custom_call.1} parent=27 // pred_check
        %p153 = pneg %p30
      $region30: #{tpu_custom_call.1} parent=27 // pred_check_branch
        %155 = sbr.rel (%p153) target = $region32
      $region31: #{tpu_custom_call.1} parent=27 // pred_region
        %s156 = smul.u32 32, %s10
        %p157 = scmp.lt.s32.totalorder %s156, 63
        %s158 = scalar_select %p157, %s156, 63
        %s159 = smul.addr %s158, 8
        %s160 = scalar_lea.vmem %s0, %s159
        %s161 = smul.u32 32, %s10
      $region32: #{tpu_custom_call.1} parent=27 // pred_fallthru
        _
    $region28: #{tpu_custom_call.1} parent=5 // pred_fallthru
      _
    %p162 = scmp.le.s32.totalorder 1, %s10
    %p163 = scmp.lt.s32.totalorder %s10, 3
    %p164 = pnand %p162, %p163
    %p165 = pneg %p164
    // Predicated region
    $region33: #{tpu_custom_call.1} parent=5 // pred_check
      _
    $region34: #{tpu_custom_call.1} parent=5 // pred_check_branch
      %167 = sbr.rel (%p164) target = $region36
    $region35: #{tpu_custom_call.1} parent=5 // pred_region
      %s168 = ssub.s32 %s10, 1
      %s169 = smul.u32 32, %s15
      %p170 = scmp.lt.s32.totalorder %s169, 63
      %s171 = scalar_select %p170, %s169, 63
      %s172 = smul.addr %s171, 8
      %s173 = scalar_lea.vmem %s0, %s172
      %p174 = pneg %p36
      %p175 = pneg %p33
      %p176 = pneg %p57
      %p177 = pneg %p54
      %p178 = pneg %p78
      %p179 = pneg %p75
      %p180 = pneg %p99
      %p181 = pneg %p96
      %p182 = pneg %p125
      %p183 = pneg %p122
      %s184 = smul.u32 32, %s15
      %p185 = scmp.lt.s32.totalorder %s184, 63
      %s186 = scalar_select %p185, %s184, 63
      %s187 = smul.addr %s186, 8
      %s188 = scalar_lea.vmem %s4, %s187
      %s189 = smul.u32 32, %s15
      %p190 = scmp.lt.s32.totalorder %s189, 63
      %s191 = scalar_select %p190, %s189, 63
      %s192 = smul.addr %s191, 8
      %s193 = scalar_lea.vmem %s0, %s192
      %s194 = smul.u32 32, %s15
      %s195 = smul.u32 32, %s15
      %p196 = scmp.lt.s32.totalorder %s195, 63
      %s197 = scalar_select %p196, %s195, 63
      %s198 = smul.addr %s197, 8
      %s199 = scalar_lea.vmem %s4, %s198
      %s200 = smul.u32 32, %s15
      %v201 = vld [vmem:[%s193] sm:$0xff]
      %v202 = vld [vmem:[%s193 + $0x8] sm:$0xff]
      %v203 = vld [vmem:[%s193 + $0x10] sm:$0xff]
      %v204 = vld [vmem:[%s193 + $0x18] sm:$0xff]
      %v205 = vld [vmem:[%s193 + $0x20] sm:$0xff]
      %v206 = vld [vmem:[%s193 + $0x28] sm:$0xff]
      %v207 = vld [vmem:[%s193 + $0x30] sm:$0xff]
      %v208 = vld [vmem:[%s193 + $0x38] sm:$0xff]
      %v209 = vld [vmem:[%s193 + $0x40] sm:$0xff]
      %v210 = vld [vmem:[%s193 + $0x48] sm:$0xff]
      %v211 = vld [vmem:[%s193 + $0x50] sm:$0xff]
      %v212 = vld [vmem:[%s193 + $0x58] sm:$0xff]
      %v213 = vld [vmem:[%s193 + $0x60] sm:$0xff]
      %v214 = vld [vmem:[%s193 + $0x68] sm:$0xff]
      %v215 = vld [vmem:[%s193 + $0x70] sm:$0xff]
      %v216 = vld [vmem:[%s193 + $0x78] sm:$0xff]
      %v217 = vld [vmem:[%s193 + $0x80] sm:$0xff]
      %v218 = vld [vmem:[%s193 + $0x88] sm:$0xff]
      %v219 = vld [vmem:[%s193 + $0x90] sm:$0xff]
      %v220 = vld [vmem:[%s193 + $0x98] sm:$0xff]
      %v221 = vld [vmem:[%s193 + $0xa0] sm:$0xff]
      %v222 = vld [vmem:[%s193 + $0xa8] sm:$0xff]
      %v223 = vld [vmem:[%s193 + $0xb0] sm:$0xff]
      %v224 = vld [vmem:[%s193 + $0xb8] sm:$0xff]
      %v225 = vld [vmem:[%s193 + $0xc0] sm:$0xff]
      %v226 = vld [vmem:[%s193 + $0xc8] sm:$0xff]
      %v227 = vld [vmem:[%s193 + $0xd0] sm:$0xff]
      %v228 = vld [vmem:[%s193 + $0xd8] sm:$0xff]
      %v229 = vld [vmem:[%s193 + $0xe0] sm:$0xff]
      %v230 = vld [vmem:[%s193 + $0xe8] sm:$0xff]
      %v231 = vld [vmem:[%s193 + $0xf0] sm:$0xff]
      %v232 = vld [vmem:[%s193 + $0xf8] sm:$0xff]
      %vm233 = vcmask 31744
      %234 = vst.msk [vmem:[#allocation3] sm:$0xff] %vm233, 0.0
      %235 = vst.msk [vmem:[#allocation3 + $0x8] sm:$0xff] %vm233, 0.0
      %vm236 = vcmask 24576
      %237 = vst.msk [vmem:[#allocation3 + $0x10] sm:$0x1] %vm236, 0.0
      %238 = vst.msk [vmem:[#allocation3 + $0x111] sm:$0xff] %vm233, 0.0
      %239 = vst.msk [vmem:[#allocation3 + $0x119] sm:$0xff] %vm233, 0.0
      %240 = vst.msk [vmem:[#allocation3 + $0x121] sm:$0x1] %vm236, 0.0
      %241 = vst.msk [vmem:[#allocation3 + $0x11] sm:$0xff] %vm233, %v201
      %242 = vst.msk [vmem:[#allocation3 + $0x19] sm:$0xff] %vm233, %v202
      %243 = vst.msk [vmem:[#allocation3 + $0x21] sm:$0xff] %vm233, %v203
      %244 = vst.msk [vmem:[#allocation3 + $0x29] sm:$0xff] %vm233, %v204
      %245 = vst.msk [vmem:[#allocation3 + $0x31] sm:$0xff] %vm233, %v205
      %246 = vst.msk [vmem:[#allocation3 + $0x39] sm:$0xff] %vm233, %v206
      %247 = vst.msk [vmem:[#allocation3 + $0x41] sm:$0xff] %vm233, %v207
      %248 = vst.msk [vmem:[#allocation3 + $0x49] sm:$0xff] %vm233, %v208
      %249 = vst.msk [vmem:[#allocation3 + $0x51] sm:$0xff] %vm233, %v209
      %250 = vst.msk [vmem:[#allocation3 + $0x59] sm:$0xff] %vm233, %v210
      %251 = vst.msk [vmem:[#allocation3 + $0x61] sm:$0xff] %vm233, %v211
      %252 = vst.msk [vmem:[#allocation3 + $0x69] sm:$0xff] %vm233, %v212
      %253 = vst.msk [vmem:[#allocation3 + $0x71] sm:$0xff] %vm233, %v213
      %254 = vst.msk [vmem:[#allocation3 + $0x79] sm:$0xff] %vm233, %v214
      %255 = vst.msk [vmem:[#allocation3 + $0x81] sm:$0xff] %vm233, %v215
      %256 = vst.msk [vmem:[#allocation3 + $0x89] sm:$0xff] %vm233, %v216
      %257 = vst.msk [vmem:[#allocation3 + $0x91] sm:$0xff] %vm233, %v217
      %258 = vst.msk [vmem:[#allocation3 + $0x99] sm:$0xff] %vm233, %v218
      %259 = vst.msk [vmem:[#allocation3 + $0xa1] sm:$0xff] %vm233, %v219
      %260 = vst.msk [vmem:[#allocation3 + $0xa9] sm:$0xff] %vm233, %v220
      %261 = vst.msk [vmem:[#allocation3 + $0xb1] sm:$0xff] %vm233, %v221
      %262 = vst.msk [vmem:[#allocation3 + $0xb9] sm:$0xff] %vm233, %v222
      %263 = vst.msk [vmem:[#allocation3 + $0xc1] sm:$0xff] %vm233, %v223
      %264 = vst.msk [vmem:[#allocation3 + $0xc9] sm:$0xff] %vm233, %v224
      %265 = vst.msk [vmem:[#allocation3 + $0xd1] sm:$0xff] %vm233, %v225
      %266 = vst.msk [vmem:[#allocation3 + $0xd9] sm:$0xff] %vm233, %v226
      %267 = vst.msk [vmem:[#allocation3 + $0xe1] sm:$0xff] %vm233, %v227
      %268 = vst.msk [vmem:[#allocation3 + $0xe9] sm:$0xff] %vm233, %v228
      %269 = vst.msk [vmem:[#allocation3 + $0xf1] sm:$0xff] %vm233, %v229
      %270 = vst.msk [vmem:[#allocation3 + $0xf9] sm:$0xff] %vm233, %v230
      %271 = vst.msk [vmem:[#allocation3 + $0x101] sm:$0xff] %vm233, %v231
      %272 = vst.msk [vmem:[#allocation3 + $0x109] sm:$0xff] %vm233, %v232
      %v273 = vlaneseq
      %v274 = vshrl.u32 %v273, 7
      %v275 = vadd.s32 %v274, 8
      %v276 = vadd.s32 %v274, 16
      %v277 = vadd.s32 %v274, 24
      %v278 = vadd.s32 %v274, 32
      %v279 = vadd.s32 %v274, 40
      %v280 = vadd.s32 %v274, 48
      %v281 = vadd.s32 %v274, 56
      %v282 = vadd.s32 %v274, 64
      %v283 = vadd.s32 %v274, 72
      %v284 = vadd.s32 %v274, 80
      %v285 = vadd.s32 %v274, 88
      %v286 = vadd.s32 %v274, 96
      %v287 = vadd.s32 %v274, 104
      %v288 = vadd.s32 %v274, 112
      %v289 = vadd.s32 %v274, 120
      %v290 = vadd.s32 %v274, 128
      %v291 = vadd.s32 %v274, 136
      %v292 = vadd.s32 %v274, 144
      %v293 = vadd.s32 %v274, 152
      %v294 = vadd.s32 %v274, 160
      %v295 = vadd.s32 %v274, 168
      %v296 = vadd.s32 %v274, 176
      %v297 = vadd.s32 %v274, 184
      %v298 = vadd.s32 %v274, 192
      %v299 = vadd.s32 %v274, 200
      %v300 = vadd.s32 %v274, 208
      %v301 = vadd.s32 %v274, 216
      %v302 = vadd.s32 %v274, 224
      %v303 = vadd.s32 %v274, 232
      %v304 = vadd.s32 %v274, 240
      %v305 = vadd.s32 %v274, 248
      %vm306 = vcmp.lt.s32.totalorder %v274, 0
      %v307 = vsub.s32 0, %v274
      %v308 = vsel %vm306, %v307, %v274
      %v309 = vshrl.u32 %v308, 4
      %v310 = vand.u32 %v308, 15
      %v311 = vsub.s32 0, %v310
      %v312 = vsel %vm306, %v311, %v310
      %vm313 = vcmp.lt.s32.totalorder %v275, 0
      %v314 = vsub.s32 0, %v275
      %v315 = vsel %vm313, %v314, %v275
      %v316 = vshrl.u32 %v315, 4
      %v317 = vand.u32 %v315, 15
      %v318 = vsub.s32 0, %v317
      %v319 = vsel %vm313, %v318, %v317
      %vm320 = vcmp.lt.s32.totalorder %v276, 0
      %v321 = vsub.s32 0, %v276
      %v322 = vsel %vm320, %v321, %v276
      %v323 = vshrl.u32 %v322, 4
      %v324 = vand.u32 %v322, 15
      %v325 = vsub.s32 0, %v324
      %v326 = vsel %vm320, %v325, %v324
      %vm327 = vcmp.lt.s32.totalorder %v277, 0
      %v328 = vsub.s32 0, %v277
      %v329 = vsel %vm327, %v328, %v277
      %v330 = vshrl.u32 %v329, 4
      %v331 = vand.u32 %v329, 15
      %v332 = vsub.s32 0, %v331
      %v333 = vsel %vm327, %v332, %v331
      %vm334 = vcmp.lt.s32.totalorder %v278, 0
      %v335 = vsub.s32 0, %v278
      %v336 = vsel %vm334, %v335, %v278
      %v337 = vshrl.u32 %v336, 4
      %v338 = vand.u32 %v336, 15
      %v339 = vsub.s32 0, %v338
      %v340 = vsel %vm334, %v339, %v338
      %vm341 = vcmp.lt.s32.totalorder %v279, 0
      %v342 = vsub.s32 0, %v279
      %v343 = vsel %vm341, %v342, %v279
      %v344 = vshrl.u32 %v343, 4
      %v345 = vand.u32 %v343, 15
      %v346 = vsub.s32 0, %v345
      %v347 = vsel %vm341, %v346, %v345
      %vm348 = vcmp.lt.s32.totalorder %v280, 0
      %v349 = vsub.s32 0, %v280
      %v350 = vsel %vm348, %v349, %v280
      %v351 = vshrl.u32 %v350, 4
      %v352 = vand.u32 %v350, 15
      %v353 = vsub.s32 0, %v352
      %v354 = vsel %vm348, %v353, %v352
      %vm355 = vcmp.lt.s32.totalorder %v281, 0
      %v356 = vsub.s32 0, %v281
      %v357 = vsel %vm355, %v356, %v281
      %v358 = vshrl.u32 %v357, 4
      %v359 = vand.u32 %v357, 15
      %v360 = vsub.s32 0, %v359
      %v361 = vsel %vm355, %v360, %v359
      %vm362 = vcmp.lt.s32.totalorder %v282, 0
      %v363 = vsub.s32 0, %v282
      %v364 = vsel %vm362, %v363, %v282
      %v365 = vshrl.u32 %v364, 4
      %v366 = vand.u32 %v364, 15
      %v367 = vsub.s32 0, %v366
      %v368 = vsel %vm362, %v367, %v366
      %vm369 = vcmp.lt.s32.totalorder %v283, 0
      %v370 = vsub.s32 0, %v283
      %v371 = vsel %vm369, %v370, %v283
      %v372 = vshrl.u32 %v371, 4
      %v373 = vand.u32 %v371, 15
      %v374 = vsub.s32 0, %v373
      %v375 = vsel %vm369, %v374, %v373
      %vm376 = vcmp.lt.s32.totalorder %v284, 0
      %v377 = vsub.s32 0, %v284
      %v378 = vsel %vm376, %v377, %v284
      %v379 = vshrl.u32 %v378, 4
      %v380 = vand.u32 %v378, 15
      %v381 = vsub.s32 0, %v380
      %v382 = vsel %vm376, %v381, %v380
      %vm383 = vcmp.lt.s32.totalorder %v285, 0
      %v384 = vsub.s32 0, %v285
      %v385 = vsel %vm383, %v384, %v285
      %v386 = vshrl.u32 %v385, 4
      %v387 = vand.u32 %v385, 15
      %v388 = vsub.s32 0, %v387
      %v389 = vsel %vm383, %v388, %v387
      %vm390 = vcmp.lt.s32.totalorder %v286, 0
      %v391 = vsub.s32 0, %v286
      %v392 = vsel %vm390, %v391, %v286
      %v393 = vshrl.u32 %v392, 4
      %v394 = vand.u32 %v392, 15
      %v395 = vsub.s32 0, %v394
      %v396 = vsel %vm390, %v395, %v394
      %vm397 = vcmp.lt.s32.totalorder %v287, 0
      %v398 = vsub.s32 0, %v287
      %v399 = vsel %vm397, %v398, %v287
      %v400 = vshrl.u32 %v399, 4
      %v401 = vand.u32 %v399, 15
      %v402 = vsub.s32 0, %v401
      %v403 = vsel %vm397, %v402, %v401
      %vm404 = vcmp.lt.s32.totalorder %v288, 0
      %v405 = vsub.s32 0, %v288
      %v406 = vsel %vm404, %v405, %v288
      %v407 = vshrl.u32 %v406, 4
      %v408 = vand.u32 %v406, 15
      %v409 = vsub.s32 0, %v408
      %v410 = vsel %vm404, %v409, %v408
      %vm411 = vcmp.lt.s32.totalorder %v289, 0
      %v412 = vsub.s32 0, %v289
      %v413 = vsel %vm411, %v412, %v289
      %v414 = vshrl.u32 %v413, 4
      %v415 = vand.u32 %v413, 15
      %v416 = vsub.s32 0, %v415
      %v417 = vsel %vm411, %v416, %v415
      %vm418 = vcmp.lt.s32.totalorder %v290, 0
      %v419 = vsub.s32 0, %v290
      %v420 = vsel %vm418, %v419, %v290
      %v421 = vshrl.u32 %v420, 4
      %v422 = vand.u32 %v420, 15
      %v423 = vsub.s32 0, %v422
      %v424 = vsel %vm418, %v423, %v422
      %vm425 = vcmp.lt.s32.totalorder %v291, 0
      %v426 = vsub.s32 0, %v291
      %v427 = vsel %vm425, %v426, %v291
      %v428 = vshrl.u32 %v427, 4
      %v429 = vand.u32 %v427, 15
      %v430 = vsub.s32 0, %v429
      %v431 = vsel %vm425, %v430, %v429
      %vm432 = vcmp.lt.s32.totalorder %v292, 0
      %v433 = vsub.s32 0, %v292
      %v434 = vsel %vm432, %v433, %v292
      %v435 = vshrl.u32 %v434, 4
      %v436 = vand.u32 %v434, 15
      %v437 = vsub.s32 0, %v436
      %v438 = vsel %vm432, %v437, %v436
      %vm439 = vcmp.lt.s32.totalorder %v293, 0
      %v440 = vsub.s32 0, %v293
      %v441 = vsel %vm439, %v440, %v293
      %v442 = vshrl.u32 %v441, 4
      %v443 = vand.u32 %v441, 15
      %v444 = vsub.s32 0, %v443
      %v445 = vsel %vm439, %v444, %v443
      %vm446 = vcmp.lt.s32.totalorder %v294, 0
      %v447 = vsub.s32 0, %v294
      %v448 = vsel %vm446, %v447, %v294
      %v449 = vshrl.u32 %v448, 4
      %v450 = vand.u32 %v448, 15
      %v451 = vsub.s32 0, %v450
      %v452 = vsel %vm446, %v451, %v450
      %vm453 = vcmp.lt.s32.totalorder %v295, 0
      %v454 = vsub.s32 0, %v295
      %v455 = vsel %vm453, %v454, %v295
      %v456 = vshrl.u32 %v455, 4
      %v457 = vand.u32 %v455, 15
      %v458 = vsub.s32 0, %v457
      %v459 = vsel %vm453, %v458, %v457
      %vm460 = vcmp.lt.s32.totalorder %v296, 0
      %v461 = vsub.s32 0, %v296
      %v462 = vsel %vm460, %v461, %v296
      %v463 = vshrl.u32 %v462, 4
      %v464 = vand.u32 %v462, 15
      %v465 = vsub.s32 0, %v464
      %v466 = vsel %vm460, %v465, %v464
      %vm467 = vcmp.lt.s32.totalorder %v297, 0
      %v468 = vsub.s32 0, %v297
      %v469 = vsel %vm467, %v468, %v297
      %v470 = vshrl.u32 %v469, 4
      %v471 = vand.u32 %v469, 15
      %v472 = vsub.s32 0, %v471
      %v473 = vsel %vm467, %v472, %v471
      %vm474 = vcmp.lt.s32.totalorder %v298, 0
      %v475 = vsub.s32 0, %v298
      %v476 = vsel %vm474, %v475, %v298
      %v477 = vshrl.u32 %v476, 4
      %v478 = vand.u32 %v476, 15
      %v479 = vsub.s32 0, %v478
      %v480 = vsel %vm474, %v479, %v478
      %vm481 = vcmp.lt.s32.totalorder %v299, 0
      %v482 = vsub.s32 0, %v299
      %v483 = vsel %vm481, %v482, %v299
      %v484 = vshrl.u32 %v483, 4
      %v485 = vand.u32 %v483, 15
      %v486 = vsub.s32 0, %v485
      %v487 = vsel %vm481, %v486, %v485
      %vm488 = vcmp.lt.s32.totalorder %v300, 0
      %v489 = vsub.s32 0, %v300
      %v490 = vsel %vm488, %v489, %v300
      %v491 = vshrl.u32 %v490, 4
      %v492 = vand.u32 %v490, 15
      %v493 = vsub.s32 0, %v492
      %v494 = vsel %vm488, %v493, %v492
      %vm495 = vcmp.lt.s32.totalorder %v301, 0
      %v496 = vsub.s32 0, %v301
      %v497 = vsel %vm495, %v496, %v301
      %v498 = vshrl.u32 %v497, 4
      %v499 = vand.u32 %v497, 15
      %v500 = vsub.s32 0, %v499
      %v501 = vsel %vm495, %v500, %v499
      %vm502 = vcmp.lt.s32.totalorder %v302, 0
      %v503 = vsub.s32 0, %v302
      %v504 = vsel %vm502, %v503, %v302
      %v505 = vshrl.u32 %v504, 4
      %v506 = vand.u32 %v504, 15
      %v507 = vsub.s32 0, %v506
      %v508 = vsel %vm502, %v507, %v506
      %vm509 = vcmp.lt.s32.totalorder %v303, 0
      %v510 = vsub.s32 0, %v303
      %v511 = vsel %vm509, %v510, %v303
      %v512 = vshrl.u32 %v511, 4
      %v513 = vand.u32 %v511, 15
      %v514 = vsub.s32 0, %v513
      %v515 = vsel %vm509, %v514, %v513
      %vm516 = vcmp.lt.s32.totalorder %v304, 0
      %v517 = vsub.s32 0, %v304
      %v518 = vsel %vm516, %v517, %v304
      %v519 = vshrl.u32 %v518, 4
      %v520 = vand.u32 %v518, 15
      %v521 = vsub.s32 0, %v520
      %v522 = vsel %vm516, %v521, %v520
      %vm523 = vcmp.lt.s32.totalorder %v305, 0
      %v524 = vsub.s32 0, %v305
      %v525 = vsel %vm523, %v524, %v305
      %v526 = vshrl.u32 %v525, 4
      %v527 = vand.u32 %v525, 15
      %v528 = vsub.s32 0, %v527
      %v529 = vsel %vm523, %v528, %v527
      %vm530 = vcmp.ne.s32.totalorder %v312, 0
      %vm531 = vcmp.ne.s32.totalorder %v319, 0
      %vm532 = vcmp.ne.s32.totalorder %v326, 0
      %vm533 = vcmp.ne.s32.totalorder %v333, 0
      %vm534 = vcmp.ne.s32.totalorder %v340, 0
      %vm535 = vcmp.ne.s32.totalorder %v347, 0
      %vm536 = vcmp.ne.s32.totalorder %v354, 0
      %vm537 = vcmp.ne.s32.totalorder %v361, 0
      %vm538 = vcmp.ne.s32.totalorder %v368, 0
      %vm539 = vcmp.ne.s32.totalorder %v375, 0
      %vm540 = vcmp.ne.s32.totalorder %v382, 0
      %vm541 = vcmp.ne.s32.totalorder %v389, 0
      %vm542 = vcmp.ne.s32.totalorder %v396, 0
      %vm543 = vcmp.ne.s32.totalorder %v403, 0
      %vm544 = vcmp.ne.s32.totalorder %v410, 0
      %vm545 = vcmp.ne.s32.totalorder %v417, 0
      %vm546 = vcmp.ne.s32.totalorder %v424, 0
      %vm547 = vcmp.ne.s32.totalorder %v431, 0
      %vm548 = vcmp.ne.s32.totalorder %v438, 0
      %vm549 = vcmp.ne.s32.totalorder %v445, 0
      %vm550 = vcmp.ne.s32.totalorder %v452, 0
      %vm551 = vcmp.ne.s32.totalorder %v459, 0
      %vm552 = vcmp.ne.s32.totalorder %v466, 0
      %vm553 = vcmp.ne.s32.totalorder %v473, 0
      %vm554 = vcmp.ne.s32.totalorder %v480, 0
      %vm555 = vcmp.ne.s32.totalorder %v487, 0
      %vm556 = vcmp.ne.s32.totalorder %v494, 0
      %vm557 = vcmp.ne.s32.totalorder %v501, 0
      %vm558 = vcmp.ne.s32.totalorder %v508, 0
      %vm559 = vcmp.ne.s32.totalorder %v515, 0
      %vm560 = vcmp.ne.s32.totalorder %v522, 0
      %vm561 = vcmp.ne.s32.totalorder %v529, 0
      %vm562 = vcmp.lt.s32.totalorder %v312, 0
      %vm563 = vcmp.lt.s32.totalorder %v319, 0
      %vm564 = vcmp.lt.s32.totalorder %v326, 0
      %vm565 = vcmp.lt.s32.totalorder %v333, 0
      %vm566 = vcmp.lt.s32.totalorder %v340, 0
      %vm567 = vcmp.lt.s32.totalorder %v347, 0
      %vm568 = vcmp.lt.s32.totalorder %v354, 0
      %vm569 = vcmp.lt.s32.totalorder %v361, 0
      %vm570 = vcmp.lt.s32.totalorder %v368, 0
      %vm571 = vcmp.lt.s32.totalorder %v375, 0
      %vm572 = vcmp.lt.s32.totalorder %v382, 0
      %vm573 = vcmp.lt.s32.totalorder %v389, 0
      %vm574 = vcmp.lt.s32.totalorder %v396, 0
      %vm575 = vcmp.lt.s32.totalorder %v403, 0
      %vm576 = vcmp.lt.s32.totalorder %v410, 0
      %vm577 = vcmp.lt.s32.totalorder %v417, 0
      %vm578 = vcmp.lt.s32.totalorder %v424, 0
      %vm579 = vcmp.lt.s32.totalorder %v431, 0
      %vm580 = vcmp.lt.s32.totalorder %v438, 0
      %vm581 = vcmp.lt.s32.totalorder %v445, 0
      %vm582 = vcmp.lt.s32.totalorder %v452, 0
      %vm583 = vcmp.lt.s32.totalorder %v459, 0
      %vm584 = vcmp.lt.s32.totalorder %v466, 0
      %vm585 = vcmp.lt.s32.totalorder %v473, 0
      %vm586 = vcmp.lt.s32.totalorder %v480, 0
      %vm587 = vcmp.lt.s32.totalorder %v487, 0
      %vm588 = vcmp.lt.s32.totalorder %v494, 0
      %vm589 = vcmp.lt.s32.totalorder %v501, 0
      %vm590 = vcmp.lt.s32.totalorder %v508, 0
      %vm591 = vcmp.lt.s32.totalorder %v515, 0
      %vm592 = vcmp.lt.s32.totalorder %v522, 0
      %vm593 = vcmp.lt.s32.totalorder %v529, 0
      %vm594 = vmand %vm562, %vm530
      %vm595 = vmand %vm563, %vm531
      %vm596 = vmand %vm564, %vm532
      %vm597 = vmand %vm565, %vm533
      %vm598 = vmand %vm566, %vm534
      %vm599 = vmand %vm567, %vm535
      %vm600 = vmand %vm568, %vm536
      %vm601 = vmand %vm569, %vm537
      %vm602 = vmand %vm570, %vm538
      %vm603 = vmand %vm571, %vm539
      %vm604 = vmand %vm572, %vm540
      %vm605 = vmand %vm573, %vm541
      %vm606 = vmand %vm574, %vm542
      %vm607 = vmand %vm575, %vm543
      %vm608 = vmand %vm576, %vm544
      %vm609 = vmand %vm577, %vm545
      %vm610 = vmand %vm578, %vm546
      %vm611 = vmand %vm579, %vm547
      %vm612 = vmand %vm580, %vm548
      %vm613 = vmand %vm581, %vm549
      %vm614 = vmand %vm582, %vm550
      %vm615 = vmand %vm583, %vm551
      %vm616 = vmand %vm584, %vm552
      %vm617 = vmand %vm585, %vm553
      %vm618 = vmand %vm586, %vm554
      %vm619 = vmand %vm587, %vm555
      %vm620 = vmand %vm588, %vm556
      %vm621 = vmand %vm589, %vm557
      %vm622 = vmand %vm590, %vm558
      %vm623 = vmand %vm591, %vm559
      %vm624 = vmand %vm592, %vm560
      %vm625 = vmand %vm593, %vm561
      %v626 = vadd.s32 %v312, 16
      %v627 = vadd.s32 %v319, 16
      %v628 = vadd.s32 %v326, 16
      %v629 = vadd.s32 %v333, 16
      %v630 = vadd.s32 %v340, 16
      %v631 = vadd.s32 %v347, 16
      %v632 = vadd.s32 %v354, 16
      %v633 = vadd.s32 %v361, 16
      %v634 = vadd.s32 %v368, 16
      %v635 = vadd.s32 %v375, 16
      %v636 = vadd.s32 %v382, 16
      %v637 = vadd.s32 %v389, 16
      %v638 = vadd.s32 %v396, 16
      %v639 = vadd.s32 %v403, 16
      %v640 = vadd.s32 %v410, 16
      %v641 = vadd.s32 %v417, 16
      %v642 = vadd.s32 %v424, 16
      %v643 = vadd.s32 %v431, 16
      %v644 = vadd.s32 %v438, 16
      %v645 = vadd.s32 %v445, 16
      %v646 = vadd.s32 %v452, 16
      %v647 = vadd.s32 %v459, 16
      %v648 = vadd.s32 %v466, 16
      %v649 = vadd.s32 %v473, 16
      %v650 = vadd.s32 %v480, 16
      %v651 = vadd.s32 %v487, 16
      %v652 = vadd.s32 %v494, 16
      %v653 = vadd.s32 %v501, 16
      %v654 = vadd.s32 %v508, 16
      %v655 = vadd.s32 %v515, 16
      %v656 = vadd.s32 %v522, 16
      %v657 = vadd.s32 %v529, 16
      %v658 = vsel %vm594, %v626, %v312
      %v659 = vsel %vm595, %v627, %v319
      %v660 = vsel %vm596, %v628, %v326
      %v661 = vsel %vm597, %v629, %v333
      %v662 = vsel %vm598, %v630, %v340
      %v663 = vsel %vm599, %v631, %v347
      %v664 = vsel %vm600, %v632, %v354
      %v665 = vsel %vm601, %v633, %v361
      %v666 = vsel %vm602, %v634, %v368
      %v667 = vsel %vm603, %v635, %v375
      %v668 = vsel %vm604, %v636, %v382
      %v669 = vsel %vm605, %v637, %v389
      %v670 = vsel %vm606, %v638, %v396
      %v671 = vsel %vm607, %v639, %v403
      %v672 = vsel %vm608, %v640, %v410
      %v673 = vsel %vm609, %v641, %v417
      %v674 = vsel %vm610, %v642, %v424
      %v675 = vsel %vm611, %v643, %v431
      %v676 = vsel %vm612, %v644, %v438
      %v677 = vsel %vm613, %v645, %v445
      %v678 = vsel %vm614, %v646, %v452
      %v679 = vsel %vm615, %v647, %v459
      %v680 = vsel %vm616, %v648, %v466
      %v681 = vsel %vm617, %v649, %v473
      %v682 = vsel %vm618, %v650, %v480
      %v683 = vsel %vm619, %v651, %v487
      %v684 = vsel %vm620, %v652, %v494
      %v685 = vsel %vm621, %v653, %v501
      %v686 = vsel %vm622, %v654, %v508
      %v687 = vsel %vm623, %v655, %v515
      %v688 = vsel %vm624, %v656, %v522
      %v689 = vsel %vm625, %v657, %v529
      %v690 = vld [vmem:[#allocation3] sm:$0xff]
      %v691 = vld [vmem:[#allocation3 + $0x8] sm:$0xff]
      %v692 = vld [vmem:[#allocation3 + $0x10] sm:$0xff]
      %v693 = vld [vmem:[#allocation3 + $0x18] sm:$0xff]
      %v694 = vld [vmem:[#allocation3 + $0x20] sm:$0xff]
      %v695 = vld [vmem:[#allocation3 + $0x28] sm:$0xff]
      %v696 = vld [vmem:[#allocation3 + $0x30] sm:$0xff]
      %v697 = vld [vmem:[#allocation3 + $0x38] sm:$0xff]
      %v698 = vld [vmem:[#allocation3 + $0x40] sm:$0xff]
      %v699 = vld [vmem:[#allocation3 + $0x48] sm:$0xff]
      %v700 = vld [vmem:[#allocation3 + $0x50] sm:$0xff]
      %v701 = vld [vmem:[#allocation3 + $0x58] sm:$0xff]
      %v702 = vld [vmem:[#allocation3 + $0x60] sm:$0xff]
      %v703 = vld [vmem:[#allocation3 + $0x68] sm:$0xff]
      %v704 = vld [vmem:[#allocation3 + $0x70] sm:$0xff]
      %v705 = vld [vmem:[#allocation3 + $0x78] sm:$0xff]
      %v706 = vld [vmem:[#allocation3 + $0x80] sm:$0xff]
      %v707 = vld [vmem:[#allocation3 + $0x88] sm:$0xff]
      %v708 = vld [vmem:[#allocation3 + $0x90] sm:$0xff]
      %v709 = vld [vmem:[#allocation3 + $0x98] sm:$0xff]
      %v710 = vld [vmem:[#allocation3 + $0xa0] sm:$0xff]
      %v711 = vld [vmem:[#allocation3 + $0xa8] sm:$0xff]
      %v712 = vld [vmem:[#allocation3 + $0xb0] sm:$0xff]
      %v713 = vld [vmem:[#allocation3 + $0xb8] sm:$0xff]
      %v714 = vld [vmem:[#allocation3 + $0xc0] sm:$0xff]
      %v715 = vld [vmem:[#allocation3 + $0xc8] sm:$0xff]
      %v716 = vld [vmem:[#allocation3 + $0xd0] sm:$0xff]
      %v717 = vld [vmem:[#allocation3 + $0xd8] sm:$0xff]
      %v718 = vld [vmem:[#allocation3 + $0xe0] sm:$0xff]
      %v719 = vld [vmem:[#allocation3 + $0xe8] sm:$0xff]
      %v720 = vld [vmem:[#allocation3 + $0xf0] sm:$0xff]
      %v721 = vld [vmem:[#allocation3 + $0xf8] sm:$0xff]
      %vm722 = vcmp.ge.s32.totalorder %v658, 1
      %vm723 = vcmp.ge.s32.totalorder %v659, 1
      %vm724 = vcmp.ge.s32.totalorder %v660, 1
      %vm725 = vcmp.ge.s32.totalorder %v661, 1
      %vm726 = vcmp.ge.s32.totalorder %v662, 1
      %vm727 = vcmp.ge.s32.totalorder %v663, 1
      %vm728 = vcmp.ge.s32.totalorder %v664, 1
      %vm729 = vcmp.ge.s32.totalorder %v665, 1
      %vm730 = vcmp.ge.s32.totalorder %v666, 1
      %vm731 = vcmp.ge.s32.totalorder %v667, 1
      %vm732 = vcmp.ge.s32.totalorder %v668, 1
      %vm733 = vcmp.ge.s32.totalorder %v669, 1
      %vm734 = vcmp.ge.s32.totalorder %v670, 1
      %vm735 = vcmp.ge.s32.totalorder %v671, 1
      %vm736 = vcmp.ge.s32.totalorder %v672, 1
      %vm737 = vcmp.ge.s32.totalorder %v673, 1
      %vm738 = vcmp.ge.s32.totalorder %v674, 1
      %vm739 = vcmp.ge.s32.totalorder %v675, 1
      %vm740 = vcmp.ge.s32.totalorder %v676, 1
      %vm741 = vcmp.ge.s32.totalorder %v677, 1
      %vm742 = vcmp.ge.s32.totalorder %v678, 1
      %vm743 = vcmp.ge.s32.totalorder %v679, 1
      %vm744 = vcmp.ge.s32.totalorder %v680, 1
      %vm745 = vcmp.ge.s32.totalorder %v681, 1
      %vm746 = vcmp.ge.s32.totalorder %v682, 1
      %vm747 = vcmp.ge.s32.totalorder %v683, 1
      %vm748 = vcmp.ge.s32.totalorder %v684, 1
      %vm749 = vcmp.ge.s32.totalorder %v685, 1
      %vm750 = vcmp.ge.s32.totalorder %v686, 1
      %vm751 = vcmp.ge.s32.totalorder %v687, 1
      %vm752 = vcmp.ge.s32.totalorder %v688, 1
      %vm753 = vcmp.ge.s32.totalorder %v689, 1
      %v754 = vsel %vm722, %v690, 0.0
      %v755 = vsel %vm723, %v691, 0.0
      %v756 = vsel %vm724, %v692, 0.0
      %v757 = vsel %vm725, %v693, 0.0
      %v758 = vsel %vm726, %v694, 0.0
      %v759 = vsel %vm727, %v695, 0.0
      %v760 = vsel %vm728, %v696, 0.0
      %v761 = vsel %vm729, %v697, 0.0
      %v762 = vsel %vm730, %v698, 0.0
      %v763 = vsel %vm731, %v699, 0.0
      %v764 = vsel %vm732, %v700, 0.0
      %v765 = vsel %vm733, %v701, 0.0
      %v766 = vsel %vm734, %v702, 0.0
      %v767 = vsel %vm735, %v703, 0.0
      %v768 = vsel %vm736, %v704, 0.0
      %v769 = vsel %vm737, %v705, 0.0
      %v770 = vsel %vm738, %v706, 0.0
      %v771 = vsel %vm739, %v707, 0.0
      %v772 = vsel %vm740, %v708, 0.0
      %v773 = vsel %vm741, %v709, 0.0
      %v774 = vsel %vm742, %v710, 0.0
      %v775 = vsel %vm743, %v711, 0.0
      %v776 = vsel %vm744, %v712, 0.0
      %v777 = vsel %vm745, %v713, 0.0
      %v778 = vsel %vm746, %v714, 0.0
      %v779 = vsel %vm747, %v715, 0.0
      %v780 = vsel %vm748, %v716, 0.0
      %v781 = vsel %vm749, %v717, 0.0
      %v782 = vsel %vm750, %v718, 0.0
      %v783 = vsel %vm751, %v719, 0.0
      %v784 = vsel %vm752, %v720, 0.0
      %v785 = vsel %vm753, %v721, 0.0
      %786 = vst.msk [vmem:[#allocation2] sm:$0xff] %vm233, %v754
      %787 = vst.msk [vmem:[#allocation2 + $0x8] sm:$0xff] %vm233, %v755
      %788 = vst.msk [vmem:[#allocation2 + $0x10] sm:$0xff] %vm233, %v756
      %789 = vst.msk [vmem:[#allocation2 + $0x18] sm:$0xff] %vm233, %v757
      %790 = vst.msk [vmem:[#allocation2 + $0x20] sm:$0xff] %vm233, %v758
      %791 = vst.msk [vmem:[#allocation2 + $0x28] sm:$0xff] %vm233, %v759
      %792 = vst.msk [vmem:[#allocation2 + $0x30] sm:$0xff] %vm233, %v760
      %793 = vst.msk [vmem:[#allocation2 + $0x38] sm:$0xff] %vm233, %v761
      %794 = vst.msk [vmem:[#allocation2 + $0x40] sm:$0xff] %vm233, %v762
      %795 = vst.msk [vmem:[#allocation2 + $0x48] sm:$0xff] %vm233, %v763
      %796 = vst.msk [vmem:[#allocation2 + $0x50] sm:$0xff] %vm233, %v764
      %797 = vst.msk [vmem:[#allocation2 + $0x58] sm:$0xff] %vm233, %v765
      %798 = vst.msk [vmem:[#allocation2 + $0x60] sm:$0xff] %vm233, %v766
      %799 = vst.msk [vmem:[#allocation2 + $0x68] sm:$0xff] %vm233, %v767
      %800 = vst.msk [vmem:[#allocation2 + $0x70] sm:$0xff] %vm233, %v768
      %801 = vst.msk [vmem:[#allocation2 + $0x78] sm:$0xff] %vm233, %v769
      %802 = vst.msk [vmem:[#allocation2 + $0x80] sm:$0xff] %vm233, %v770
      %803 = vst.msk [vmem:[#allocation2 + $0x88] sm:$0xff] %vm233, %v771
      %804 = vst.msk [vmem:[#allocation2 + $0x90] sm:$0xff] %vm233, %v772
      %805 = vst.msk [vmem:[#allocation2 + $0x98] sm:$0xff] %vm233, %v773
      %806 = vst.msk [vmem:[#allocation2 + $0xa0] sm:$0xff] %vm233, %v774
      %807 = vst.msk [vmem:[#allocation2 + $0xa8] sm:$0xff] %vm233, %v775
      %808 = vst.msk [vmem:[#allocation2 + $0xb0] sm:$0xff] %vm233, %v776
      %809 = vst.msk [vmem:[#allocation2 + $0xb8] sm:$0xff] %vm233, %v777
      %810 = vst.msk [vmem:[#allocation2 + $0xc0] sm:$0xff] %vm233, %v778
      %811 = vst.msk [vmem:[#allocation2 + $0xc8] sm:$0xff] %vm233, %v779
      %812 = vst.msk [vmem:[#allocation2 + $0xd0] sm:$0xff] %vm233, %v780
      %813 = vst.msk [vmem:[#allocation2 + $0xd8] sm:$0xff] %vm233, %v781
      %814 = vst.msk [vmem:[#allocation2 + $0xe0] sm:$0xff] %vm233, %v782
      %815 = vst.msk [vmem:[#allocation2 + $0xe8] sm:$0xff] %vm233, %v783
      %816 = vst.msk [vmem:[#allocation2 + $0xf0] sm:$0xff] %vm233, %v784
      %817 = vst.msk [vmem:[#allocation2 + $0xf8] sm:$0xff] %vm233, %v785
      %v818 = vld [vmem:[#allocation3 + $0x1] sm:$0xff]
      %v819 = vld [vmem:[#allocation3 + $0x9] sm:$0xff]
      %v820 = vld [vmem:[#allocation3 + $0x11] sm:$0xff]
      %v821 = vld [vmem:[#allocation3 + $0x19] sm:$0xff]
      %v822 = vld [vmem:[#allocation3 + $0x21] sm:$0xff]
      %v823 = vld [vmem:[#allocation3 + $0x29] sm:$0xff]
      %v824 = vld [vmem:[#allocation3 + $0x31] sm:$0xff]
      %v825 = vld [vmem:[#allocation3 + $0x39] sm:$0xff]
      %v826 = vld [vmem:[#allocation3 + $0x41] sm:$0xff]
      %v827 = vld [vmem:[#allocation3 + $0x49] sm:$0xff]
      %v828 = vld [vmem:[#allocation3 + $0x51] sm:$0xff]
      %v829 = vld [vmem:[#allocation3 + $0x59] sm:$0xff]
      %v830 = vld [vmem:[#allocation3 + $0x61] sm:$0xff]
      %v831 = vld [vmem:[#allocation3 + $0x69] sm:$0xff]
      %v832 = vld [vmem:[#allocation3 + $0x71] sm:$0xff]
      %v833 = vld [vmem:[#allocation3 + $0x79] sm:$0xff]
      %v834 = vld [vmem:[#allocation3 + $0x81] sm:$0xff]
      %v835 = vld [vmem:[#allocation3 + $0x89] sm:$0xff]
      %v836 = vld [vmem:[#allocation3 + $0x91] sm:$0xff]
      %v837 = vld [vmem:[#allocation3 + $0x99] sm:$0xff]
      %v838 = vld [vmem:[#allocation3 + $0xa1] sm:$0xff]
      %v839 = vld [vmem:[#allocation3 + $0xa9] sm:$0xff]
      %v840 = vld [vmem:[#allocation3 + $0xb1] sm:$0xff]
      %v841 = vld [vmem:[#allocation3 + $0xb9] sm:$0xff]
      %v842 = vld [vmem:[#allocation3 + $0xc1] sm:$0xff]
      %v843 = vld [vmem:[#allocation3 + $0xc9] sm:$0xff]
      %v844 = vld [vmem:[#allocation3 + $0xd1] sm:$0xff]
      %v845 = vld [vmem:[#allocation3 + $0xd9] sm:$0xff]
      %v846 = vld [vmem:[#allocation3 + $0xe1] sm:$0xff]
      %v847 = vld [vmem:[#allocation3 + $0xe9] sm:$0xff]
      %v848 = vld [vmem:[#allocation3 + $0xf1] sm:$0xff]
      %v849 = vld [vmem:[#allocation3 + $0xf9] sm:$0xff]
      %882 = vrot.lane.b32.xlu0 %v818, 4
      %v883 = vpop.permute.xlu0 %882
      %884 = vrot.lane.b32.xlu0 %v819, 4
      %v885 = vpop.permute.xlu0 %884
      %886 = vrot.lane.b32.xlu0 %v820, 4
      %v887 = vpop.permute.xlu0 %886
      %888 = vrot.lane.b32.xlu0 %v821, 4
      %v889 = vpop.permute.xlu0 %888
      %890 = vrot.lane.b32.xlu0 %v822, 4
      %v891 = vpop.permute.xlu0 %890
      %892 = vrot.lane.b32.xlu0 %v823, 4
      %v893 = vpop.permute.xlu0 %892
      %894 = vrot.lane.b32.xlu0 %v824, 4
      %v895 = vpop.permute.xlu0 %894
      %896 = vrot.lane.b32.xlu0 %v825, 4
      %v897 = vpop.permute.xlu0 %896
      %898 = vrot.lane.b32.xlu0 %v826, 4
      %v899 = vpop.permute.xlu0 %898
      %900 = vrot.lane.b32.xlu0 %v827, 4
      %v901 = vpop.permute.xlu0 %900
      %902 = vrot.lane.b32.xlu0 %v828, 4
      %v903 = vpop.permute.xlu0 %902
      %904 = vrot.lane.b32.xlu0 %v829, 4
      %v905 = vpop.permute.xlu0 %904
      %906 = vrot.lane.b32.xlu0 %v830, 4
      %v907 = vpop.permute.xlu0 %906
      %908 = vrot.lane.b32.xlu0 %v831, 4
      %v909 = vpop.permute.xlu0 %908
      %910 = vrot.lane.b32.xlu0 %v832, 4
      %v911 = vpop.permute.xlu0 %910
      %912 = vrot.lane.b32.xlu0 %v833, 4
      %v913 = vpop.permute.xlu0 %912
      %914 = vrot.lane.b32.xlu0 %v834, 4
      %v915 = vpop.permute.xlu0 %914
      %916 = vrot.lane.b32.xlu0 %v835, 4
      %v917 = vpop.permute.xlu0 %916
      %918 = vrot.lane.b32.xlu0 %v836, 4
      %v919 = vpop.permute.xlu0 %918
      %920 = vrot.lane.b32.xlu0 %v837, 4
      %v921 = vpop.permute.xlu0 %920
      %922 = vrot.lane.b32.xlu0 %v838, 4
      %v923 = vpop.permute.xlu0 %922
      %924 = vrot.lane.b32.xlu0 %v839, 4
      %v925 = vpop.permute.xlu0 %924
      %926 = vrot.lane.b32.xlu0 %v840, 4
      %v927 = vpop.permute.xlu0 %926
      %928 = vrot.lane.b32.xlu0 %v841, 4
      %v929 = vpop.permute.xlu0 %928
      %930 = vrot.lane.b32.xlu0 %v842, 4
      %v931 = vpop.permute.xlu0 %930
      %932 = vrot.lane.b32.xlu0 %v843, 4
      %v933 = vpop.permute.xlu0 %932
      %934 = vrot.lane.b32.xlu0 %v844, 4
      %v935 = vpop.permute.xlu0 %934
      %936 = vrot.lane.b32.xlu0 %v845, 4
      %v937 = vpop.permute.xlu0 %936
      %938 = vrot.lane.b32.xlu0 %v846, 4
      %v939 = vpop.permute.xlu0 %938
      %940 = vrot.lane.b32.xlu0 %v847, 4
      %v941 = vpop.permute.xlu0 %940
      %942 = vrot.lane.b32.xlu0 %v848, 4
      %v943 = vpop.permute.xlu0 %942
      %944 = vrot.lane.b32.xlu0 %v849, 4
      %v945 = vpop.permute.xlu0 %944
      %vm978 = vcmask 64544
      %979 = vst.msk [vmem:[#allocation2] sm:$0xff] %vm978, %v883
      %980 = vst.msk [vmem:[#allocation2 + $0x8] sm:$0xff] %vm978, %v885
      %981 = vst.msk [vmem:[#allocation2 + $0x10] sm:$0xff] %vm978, %v887
      %982 = vst.msk [vmem:[#allocation2 + $0x18] sm:$0xff] %vm978, %v889
      %983 = vst.msk [vmem:[#allocation2 + $0x20] sm:$0xff] %vm978, %v891
      %984 = vst.msk [vmem:[#allocation2 + $0x28] sm:$0xff] %vm978, %v893
      %985 = vst.msk [vmem:[#allocation2 + $0x30] sm:$0xff] %vm978, %v895
      %986 = vst.msk [vmem:[#allocation2 + $0x38] sm:$0xff] %vm978, %v897
      %987 = vst.msk [vmem:[#allocation2 + $0x40] sm:$0xff] %vm978, %v899
      %988 = vst.msk [vmem:[#allocation2 + $0x48] sm:$0xff] %vm978, %v901
      %989 = vst.msk [vmem:[#allocation2 + $0x50] sm:$0xff] %vm978, %v903
      %990 = vst.msk [vmem:[#allocation2 + $0x58] sm:$0xff] %vm978, %v905
      %991 = vst.msk [vmem:[#allocation2 + $0x60] sm:$0xff] %vm978, %v907
      %992 = vst.msk [vmem:[#allocation2 + $0x68] sm:$0xff] %vm978, %v909
      %993 = vst.msk [vmem:[#allocation2 + $0x70] sm:$0xff] %vm978, %v911
      %994 = vst.msk [vmem:[#allocation2 + $0x78] sm:$0xff] %vm978, %v913
      %995 = vst.msk [vmem:[#allocation2 + $0x80] sm:$0xff] %vm978, %v915
      %996 = vst.msk [vmem:[#allocation2 + $0x88] sm:$0xff] %vm978, %v917
      %997 = vst.msk [vmem:[#allocation2 + $0x90] sm:$0xff] %vm978, %v919
      %998 = vst.msk [vmem:[#allocation2 + $0x98] sm:$0xff] %vm978, %v921
      %999 = vst.msk [vmem:[#allocation2 + $0xa0] sm:$0xff] %vm978, %v923
      %1000 = vst.msk [vmem:[#allocation2 + $0xa8] sm:$0xff] %vm978, %v925
      %1001 = vst.msk [vmem:[#allocation2 + $0xb0] sm:$0xff] %vm978, %v927
      %1002 = vst.msk [vmem:[#allocation2 + $0xb8] sm:$0xff] %vm978, %v929
      %1003 = vst.msk [vmem:[#allocation2 + $0xc0] sm:$0xff] %vm978, %v931
      %1004 = vst.msk [vmem:[#allocation2 + $0xc8] sm:$0xff] %vm978, %v933
      %1005 = vst.msk [vmem:[#allocation2 + $0xd0] sm:$0xff] %vm978, %v935
      %1006 = vst.msk [vmem:[#allocation2 + $0xd8] sm:$0xff] %vm978, %v937
      %1007 = vst.msk [vmem:[#allocation2 + $0xe0] sm:$0xff] %vm978, %v939
      %1008 = vst.msk [vmem:[#allocation2 + $0xe8] sm:$0xff] %vm978, %v941
      %1009 = vst.msk [vmem:[#allocation2 + $0xf0] sm:$0xff] %vm978, %v943
      %1010 = vst.msk [vmem:[#allocation2 + $0xf8] sm:$0xff] %vm978, %v945
      %v1011 = vld [vmem:[#allocation3 + $0x2] sm:$0xff]
      %v1012 = vld [vmem:[#allocation3 + $0xa] sm:$0xff]
      %v1013 = vld [vmem:[#allocation3 + $0x12] sm:$0xff]
      %v1014 = vld [vmem:[#allocation3 + $0x1a] sm:$0xff]
      %v1015 = vld [vmem:[#allocation3 + $0x22] sm:$0xff]
      %v1016 = vld [vmem:[#allocation3 + $0x2a] sm:$0xff]
      %v1017 = vld [vmem:[#allocation3 + $0x32] sm:$0xff]
      %v1018 = vld [vmem:[#allocation3 + $0x3a] sm:$0xff]
      %v1019 = vld [vmem:[#allocation3 + $0x42] sm:$0xff]
      %v1020 = vld [vmem:[#allocation3 + $0x4a] sm:$0xff]
      %v1021 = vld [vmem:[#allocation3 + $0x52] sm:$0xff]
      %v1022 = vld [vmem:[#allocation3 + $0x5a] sm:$0xff]
      %v1023 = vld [vmem:[#allocation3 + $0x62] sm:$0xff]
      %v1024 = vld [vmem:[#allocation3 + $0x6a] sm:$0xff]
      %v1025 = vld [vmem:[#allocation3 + $0x72] sm:$0xff]
      %v1026 = vld [vmem:[#allocation3 + $0x7a] sm:$0xff]
      %v1027 = vld [vmem:[#allocation3 + $0x82] sm:$0xff]
      %v1028 = vld [vmem:[#allocation3 + $0x8a] sm:$0xff]
      %v1029 = vld [vmem:[#allocation3 + $0x92] sm:$0xff]
      %v1030 = vld [vmem:[#allocation3 + $0x9a] sm:$0xff]
      %v1031 = vld [vmem:[#allocation3 + $0xa2] sm:$0xff]
      %v1032 = vld [vmem:[#allocation3 + $0xaa] sm:$0xff]
      %v1033 = vld [vmem:[#allocation3 + $0xb2] sm:$0xff]
      %v1034 = vld [vmem:[#allocation3 + $0xba] sm:$0xff]
      %v1035 = vld [vmem:[#allocation3 + $0xc2] sm:$0xff]
      %v1036 = vld [vmem:[#allocation3 + $0xca] sm:$0xff]
      %v1037 = vld [vmem:[#allocation3 + $0xd2] sm:$0xff]
      %v1038 = vld [vmem:[#allocation3 + $0xda] sm:$0xff]
      %v1039 = vld [vmem:[#allocation3 + $0xe2] sm:$0xff]
      %v1040 = vld [vmem:[#allocation3 + $0xea] sm:$0xff]
      %v1041 = vld [vmem:[#allocation3 + $0xf2] sm:$0xff]
      %v1042 = vld [vmem:[#allocation3 + $0xfa] sm:$0xff]
      %vm1043 = vcmp.le.s32.totalorder %v658, 14
      %vm1044 = vcmp.le.s32.totalorder %v659, 14
      %vm1045 = vcmp.le.s32.totalorder %v660, 14
      %vm1046 = vcmp.le.s32.totalorder %v661, 14
      %vm1047 = vcmp.le.s32.totalorder %v662, 14
      %vm1048 = vcmp.le.s32.totalorder %v663, 14
      %vm1049 = vcmp.le.s32.totalorder %v664, 14
      %vm1050 = vcmp.le.s32.totalorder %v665, 14
      %vm1051 = vcmp.le.s32.totalorder %v666, 14
      %vm1052 = vcmp.le.s32.totalorder %v667, 14
      %vm1053 = vcmp.le.s32.totalorder %v668, 14
      %vm1054 = vcmp.le.s32.totalorder %v669, 14
      %vm1055 = vcmp.le.s32.totalorder %v670, 14
      %vm1056 = vcmp.le.s32.totalorder %v671, 14
      %vm1057 = vcmp.le.s32.totalorder %v672, 14
      %vm1058 = vcmp.le.s32.totalorder %v673, 14
      %vm1059 = vcmp.le.s32.totalorder %v674, 14
      %vm1060 = vcmp.le.s32.totalorder %v675, 14
      %vm1061 = vcmp.le.s32.totalorder %v676, 14
      %vm1062 = vcmp.le.s32.totalorder %v677, 14
      %vm1063 = vcmp.le.s32.totalorder %v678, 14
      %vm1064 = vcmp.le.s32.totalorder %v679, 14
      %vm1065 = vcmp.le.s32.totalorder %v680, 14
      %vm1066 = vcmp.le.s32.totalorder %v681, 14
      %vm1067 = vcmp.le.s32.totalorder %v682, 14
      %vm1068 = vcmp.le.s32.totalorder %v683, 14
      %vm1069 = vcmp.le.s32.totalorder %v684, 14
      %vm1070 = vcmp.le.s32.totalorder %v685, 14
      %vm1071 = vcmp.le.s32.totalorder %v686, 14
      %vm1072 = vcmp.le.s32.totalorder %v687, 14
      %vm1073 = vcmp.le.s32.totalorder %v688, 14
      %vm1074 = vcmp.le.s32.totalorder %v689, 14
      %v1075 = vsel %vm1043, %v1011, 0.0
      %v1076 = vsel %vm1044, %v1012, 0.0
      %v1077 = vsel %vm1045, %v1013, 0.0
      %v1078 = vsel %vm1046, %v1014, 0.0
      %v1079 = vsel %vm1047, %v1015, 0.0
      %v1080 = vsel %vm1048, %v1016, 0.0
      %v1081 = vsel %vm1049, %v1017, 0.0
      %v1082 = vsel %vm1050, %v1018, 0.0
      %v1083 = vsel %vm1051, %v1019, 0.0
      %v1084 = vsel %vm1052, %v1020, 0.0
      %v1085 = vsel %vm1053, %v1021, 0.0
      %v1086 = vsel %vm1054, %v1022, 0.0
      %v1087 = vsel %vm1055, %v1023, 0.0
      %v1088 = vsel %vm1056, %v1024, 0.0
      %v1089 = vsel %vm1057, %v1025, 0.0
      %v1090 = vsel %vm1058, %v1026, 0.0
      %v1091 = vsel %vm1059, %v1027, 0.0
      %v1092 = vsel %vm1060, %v1028, 0.0
      %v1093 = vsel %vm1061, %v1029, 0.0
      %v1094 = vsel %vm1062, %v1030, 0.0
      %v1095 = vsel %vm1063, %v1031, 0.0
      %v1096 = vsel %vm1064, %v1032, 0.0
      %v1097 = vsel %vm1065, %v1033, 0.0
      %v1098 = vsel %vm1066, %v1034, 0.0
      %v1099 = vsel %vm1067, %v1035, 0.0
      %v1100 = vsel %vm1068, %v1036, 0.0
      %v1101 = vsel %vm1069, %v1037, 0.0
      %v1102 = vsel %vm1070, %v1038, 0.0
      %v1103 = vsel %vm1071, %v1039, 0.0
      %v1104 = vsel %vm1072, %v1040, 0.0
      %v1105 = vsel %vm1073, %v1041, 0.0
      %v1106 = vsel %vm1074, %v1042, 0.0
      %1139 = vrot.lane.b32.xlu0 %v1075, 8
      %v1140 = vpop.permute.xlu0 %1139
      %1141 = vrot.lane.b32.xlu0 %v1076, 8
      %v1142 = vpop.permute.xlu0 %1141
      %1143 = vrot.lane.b32.xlu0 %v1077, 8
      %v1144 = vpop.permute.xlu0 %1143
      %1145 = vrot.lane.b32.xlu0 %v1078, 8
      %v1146 = vpop.permute.xlu0 %1145
      %1147 = vrot.lane.b32.xlu0 %v1079, 8
      %v1148 = vpop.permute.xlu0 %1147
      %1149 = vrot.lane.b32.xlu0 %v1080, 8
      %v1150 = vpop.permute.xlu0 %1149
      %1151 = vrot.lane.b32.xlu0 %v1081, 8
      %v1152 = vpop.permute.xlu0 %1151
      %1153 = vrot.lane.b32.xlu0 %v1082, 8
      %v1154 = vpop.permute.xlu0 %1153
      %1155 = vrot.lane.b32.xlu0 %v1083, 8
      %v1156 = vpop.permute.xlu0 %1155
      %1157 = vrot.lane.b32.xlu0 %v1084, 8
      %v1158 = vpop.permute.xlu0 %1157
      %1159 = vrot.lane.b32.xlu0 %v1085, 8
      %v1160 = vpop.permute.xlu0 %1159
      %1161 = vrot.lane.b32.xlu0 %v1086, 8
      %v1162 = vpop.permute.xlu0 %1161
      %1163 = vrot.lane.b32.xlu0 %v1087, 8
      %v1164 = vpop.permute.xlu0 %1163
      %1165 = vrot.lane.b32.xlu0 %v1088, 8
      %v1166 = vpop.permute.xlu0 %1165
      %1167 = vrot.lane.b32.xlu0 %v1089, 8
      %v1168 = vpop.permute.xlu0 %1167
      %1169 = vrot.lane.b32.xlu0 %v1090, 8
      %v1170 = vpop.permute.xlu0 %1169
      %1171 = vrot.lane.b32.xlu0 %v1091, 8
      %v1172 = vpop.permute.xlu0 %1171
      %1173 = vrot.lane.b32.xlu0 %v1092, 8
      %v1174 = vpop.permute.xlu0 %1173
      %1175 = vrot.lane.b32.xlu0 %v1093, 8
      %v1176 = vpop.permute.xlu0 %1175
      %1177 = vrot.lane.b32.xlu0 %v1094, 8
      %v1178 = vpop.permute.xlu0 %1177
      %1179 = vrot.lane.b32.xlu0 %v1095, 8
      %v1180 = vpop.permute.xlu0 %1179
      %1181 = vrot.lane.b32.xlu0 %v1096, 8
      %v1182 = vpop.permute.xlu0 %1181
      %1183 = vrot.lane.b32.xlu0 %v1097, 8
      %v1184 = vpop.permute.xlu0 %1183
      %1185 = vrot.lane.b32.xlu0 %v1098, 8
      %v1186 = vpop.permute.xlu0 %1185
      %1187 = vrot.lane.b32.xlu0 %v1099, 8
      %v1188 = vpop.permute.xlu0 %1187
      %1189 = vrot.lane.b32.xlu0 %v1100, 8
      %v1190 = vpop.permute.xlu0 %1189
      %1191 = vrot.lane.b32.xlu0 %v1101, 8
      %v1192 = vpop.permute.xlu0 %1191
      %1193 = vrot.lane.b32.xlu0 %v1102, 8
      %v1194 = vpop.permute.xlu0 %1193
      %1195 = vrot.lane.b32.xlu0 %v1103, 8
      %v1196 = vpop.permute.xlu0 %1195
      %1197 = vrot.lane.b32.xlu0 %v1104, 8
      %v1198 = vpop.permute.xlu0 %1197
      %1199 = vrot.lane.b32.xlu0 %v1105, 8
      %v1200 = vpop.permute.xlu0 %1199
      %1201 = vrot.lane.b32.xlu0 %v1106, 8
      %v1202 = vpop.permute.xlu0 %1201
      %vm1235 = vcmask 97344
      %1236 = vst.msk [vmem:[#allocation2] sm:$0xff] %vm1235, %v1140
      %1237 = vst.msk [vmem:[#allocation2 + $0x8] sm:$0xff] %vm1235, %v1142
      %1238 = vst.msk [vmem:[#allocation2 + $0x10] sm:$0xff] %vm1235, %v1144
      %1239 = vst.msk [vmem:[#allocation2 + $0x18] sm:$0xff] %vm1235, %v1146
      %1240 = vst.msk [vmem:[#allocation2 + $0x20] sm:$0xff] %vm1235, %v1148
      %1241 = vst.msk [vmem:[#allocation2 + $0x28] sm:$0xff] %vm1235, %v1150
      %1242 = vst.msk [vmem:[#allocation2 + $0x30] sm:$0xff] %vm1235, %v1152
      %1243 = vst.msk [vmem:[#allocation2 + $0x38] sm:$0xff] %vm1235, %v1154
      %1244 = vst.msk [vmem:[#allocation2 + $0x40] sm:$0xff] %vm1235, %v1156
      %1245 = vst.msk [vmem:[#allocation2 + $0x48] sm:$0xff] %vm1235, %v1158
      %1246 = vst.msk [vmem:[#allocation2 + $0x50] sm:$0xff] %vm1235, %v1160
      %1247 = vst.msk [vmem:[#allocation2 + $0x58] sm:$0xff] %vm1235, %v1162
      %1248 = vst.msk [vmem:[#allocation2 + $0x60] sm:$0xff] %vm1235, %v1164
      %1249 = vst.msk [vmem:[#allocation2 + $0x68] sm:$0xff] %vm1235, %v1166
      %1250 = vst.msk [vmem:[#allocation2 + $0x70] sm:$0xff] %vm1235, %v1168
      %1251 = vst.msk [vmem:[#allocation2 + $0x78] sm:$0xff] %vm1235, %v1170
      %1252 = vst.msk [vmem:[#allocation2 + $0x80] sm:$0xff] %vm1235, %v1172
      %1253 = vst.msk [vmem:[#allocation2 + $0x88] sm:$0xff] %vm1235, %v1174
      %1254 = vst.msk [vmem:[#allocation2 + $0x90] sm:$0xff] %vm1235, %v1176
      %1255 = vst.msk [vmem:[#allocation2 + $0x98] sm:$0xff] %vm1235, %v1178
      %1256 = vst.msk [vmem:[#allocation2 + $0xa0] sm:$0xff] %vm1235, %v1180
      %1257 = vst.msk [vmem:[#allocation2 + $0xa8] sm:$0xff] %vm1235, %v1182
      %1258 = vst.msk [vmem:[#allocation2 + $0xb0] sm:$0xff] %vm1235, %v1184
      %1259 = vst.msk [vmem:[#allocation2 + $0xb8] sm:$0xff] %vm1235, %v1186
      %1260 = vst.msk [vmem:[#allocation2 + $0xc0] sm:$0xff] %vm1235, %v1188
      %1261 = vst.msk [vmem:[#allocation2 + $0xc8] sm:$0xff] %vm1235, %v1190
      %1262 = vst.msk [vmem:[#allocation2 + $0xd0] sm:$0xff] %vm1235, %v1192
      %1263 = vst.msk [vmem:[#allocation2 + $0xd8] sm:$0xff] %vm1235, %v1194
      %1264 = vst.msk [vmem:[#allocation2 + $0xe0] sm:$0xff] %vm1235, %v1196
      %1265 = vst.msk [vmem:[#allocation2 + $0xe8] sm:$0xff] %vm1235, %v1198
      %1266 = vst.msk [vmem:[#allocation2 + $0xf0] sm:$0xff] %vm1235, %v1200
      %1267 = vst.msk [vmem:[#allocation2 + $0xf8] sm:$0xff] %vm1235, %v1202
      %v1268 = vld [vmem:[#allocation3 + $0x10] sm:$0xff]
      %v1269 = vld [vmem:[#allocation3 + $0x18] sm:$0xff]
      %v1270 = vld [vmem:[#allocation3 + $0x20] sm:$0xff]
      %v1271 = vld [vmem:[#allocation3 + $0x28] sm:$0xff]
      %v1272 = vld [vmem:[#allocation3 + $0x30] sm:$0xff]
      %v1273 = vld [vmem:[#allocation3 + $0x38] sm:$0xff]
      %v1274 = vld [vmem:[#allocation3 + $0x40] sm:$0xff]
      %v1275 = vld [vmem:[#allocation3 + $0x48] sm:$0xff]
      %v1276 = vld [vmem:[#allocation3 + $0x50] sm:$0xff]
      %v1277 = vld [vmem:[#allocation3 + $0x58] sm:$0xff]
      %v1278 = vld [vmem:[#allocation3 + $0x60] sm:$0xff]
      %v1279 = vld [vmem:[#allocation3 + $0x68] sm:$0xff]
      %v1280 = vld [vmem:[#allocation3 + $0x70] sm:$0xff]
      %v1281 = vld [vmem:[#allocation3 + $0x78] sm:$0xff]
      %v1282 = vld [vmem:[#allocation3 + $0x80] sm:$0xff]
      %v1283 = vld [vmem:[#allocation3 + $0x88] sm:$0xff]
      %v1284 = vld [vmem:[#allocation3 + $0x90] sm:$0xff]
      %v1285 = vld [vmem:[#allocation3 + $0x98] sm:$0xff]
      %v1286 = vld [vmem:[#allocation3 + $0xa0] sm:$0xff]
      %v1287 = vld [vmem:[#allocation3 + $0xa8] sm:$0xff]
      %v1288 = vld [vmem:[#allocation3 + $0xb0] sm:$0xff]
      %v1289 = vld [vmem:[#allocation3 + $0xb8] sm:$0xff]
      %v1290 = vld [vmem:[#allocation3 + $0xc0] sm:$0xff]
      %v1291 = vld [vmem:[#allocation3 + $0xc8] sm:$0xff]
      %v1292 = vld [vmem:[#allocation3 + $0xd0] sm:$0xff]
      %v1293 = vld [vmem:[#allocation3 + $0xd8] sm:$0xff]
      %v1294 = vld [vmem:[#allocation3 + $0xe0] sm:$0xff]
      %v1295 = vld [vmem:[#allocation3 + $0xe8] sm:$0xff]
      %v1296 = vld [vmem:[#allocation3 + $0xf0] sm:$0xff]
      %v1297 = vld [vmem:[#allocation3 + $0xf8] sm:$0xff]
      %v1298 = vld [vmem:[#allocation3 + $0x100] sm:$0xff]
      %v1299 = vld [vmem:[#allocation3 + $0x108] sm:$0xff]
      %v1300 = vsel %vm722, %v1268, 0.0
      %v1301 = vsel %vm723, %v1269, 0.0
      %v1302 = vsel %vm724, %v1270, 0.0
      %v1303 = vsel %vm725, %v1271, 0.0
      %v1304 = vsel %vm726, %v1272, 0.0
      %v1305 = vsel %vm727, %v1273, 0.0
      %v1306 = vsel %vm728, %v1274, 0.0
      %v1307 = vsel %vm729, %v1275, 0.0
      %v1308 = vsel %vm730, %v1276, 0.0
      %v1309 = vsel %vm731, %v1277, 0.0
      %v1310 = vsel %vm732, %v1278, 0.0
      %v1311 = vsel %vm733, %v1279, 0.0
      %v1312 = vsel %vm734, %v1280, 0.0
      %v1313 = vsel %vm735, %v1281, 0.0
      %v1314 = vsel %vm736, %v1282, 0.0
      %v1315 = vsel %vm737, %v1283, 0.0
      %v1316 = vsel %vm738, %v1284, 0.0
      %v1317 = vsel %vm739, %v1285, 0.0
      %v1318 = vsel %vm740, %v1286, 0.0
      %v1319 = vsel %vm741, %v1287, 0.0
      %v1320 = vsel %vm742, %v1288, 0.0
      %v1321 = vsel %vm743, %v1289, 0.0
      %v1322 = vsel %vm744, %v1290, 0.0
      %v1323 = vsel %vm745, %v1291, 0.0
      %v1324 = vsel %vm746, %v1292, 0.0
      %v1325 = vsel %vm747, %v1293, 0.0
      %v1326 = vsel %vm748, %v1294, 0.0
      %v1327 = vsel %vm749, %v1295, 0.0
      %v1328 = vsel %vm750, %v1296, 0.0
      %v1329 = vsel %vm751, %v1297, 0.0
      %v1330 = vsel %vm752, %v1298, 0.0
      %v1331 = vsel %vm753, %v1299, 0.0
      %1364 = vrot.lane.b32.xlu0 %v1300, 12
      %v1365 = vpop.permute.xlu0 %1364
      %1366 = vrot.lane.b32.xlu0 %v1301, 12
      %v1367 = vpop.permute.xlu0 %1366
      %1368 = vrot.lane.b32.xlu0 %v1302, 12
      %v1369 = vpop.permute.xlu0 %1368
      %1370 = vrot.lane.b32.xlu0 %v1303, 12
      %v1371 = vpop.permute.xlu0 %1370
      %1372 = vrot.lane.b32.xlu0 %v1304, 12
      %v1373 = vpop.permute.xlu0 %1372
      %1374 = vrot.lane.b32.xlu0 %v1305, 12
      %v1375 = vpop.permute.xlu0 %1374
      %1376 = vrot.lane.b32.xlu0 %v1306, 12
      %v1377 = vpop.permute.xlu0 %1376
      %1378 = vrot.lane.b32.xlu0 %v1307, 12
      %v1379 = vpop.permute.xlu0 %1378
      %1380 = vrot.lane.b32.xlu0 %v1308, 12
      %v1381 = vpop.permute.xlu0 %1380
      %1382 = vrot.lane.b32.xlu0 %v1309, 12
      %v1383 = vpop.permute.xlu0 %1382
      %1384 = vrot.lane.b32.xlu0 %v1310, 12
      %v1385 = vpop.permute.xlu0 %1384
      %1386 = vrot.lane.b32.xlu0 %v1311, 12
      %v1387 = vpop.permute.xlu0 %1386
      %1388 = vrot.lane.b32.xlu0 %v1312, 12
      %v1389 = vpop.permute.xlu0 %1388
      %1390 = vrot.lane.b32.xlu0 %v1313, 12
      %v1391 = vpop.permute.xlu0 %1390
      %1392 = vrot.lane.b32.xlu0 %v1314, 12
      %v1393 = vpop.permute.xlu0 %1392
      %1394 = vrot.lane.b32.xlu0 %v1315, 12
      %v1395 = vpop.permute.xlu0 %1394
      %1396 = vrot.lane.b32.xlu0 %v1316, 12
      %v1397 = vpop.permute.xlu0 %1396
      %1398 = vrot.lane.b32.xlu0 %v1317, 12
      %v1399 = vpop.permute.xlu0 %1398
      %1400 = vrot.lane.b32.xlu0 %v1318, 12
      %v1401 = vpop.permute.xlu0 %1400
      %1402 = vrot.lane.b32.xlu0 %v1319, 12
      %v1403 = vpop.permute.xlu0 %1402
      %1404 = vrot.lane.b32.xlu0 %v1320, 12
      %v1405 = vpop.permute.xlu0 %1404
      %1406 = vrot.lane.b32.xlu0 %v1321, 12
      %v1407 = vpop.permute.xlu0 %1406
      %1408 = vrot.lane.b32.xlu0 %v1322, 12
      %v1409 = vpop.permute.xlu0 %1408
      %1410 = vrot.lane.b32.xlu0 %v1323, 12
      %v1411 = vpop.permute.xlu0 %1410
      %1412 = vrot.lane.b32.xlu0 %v1324, 12
      %v1413 = vpop.permute.xlu0 %1412
      %1414 = vrot.lane.b32.xlu0 %v1325, 12
      %v1415 = vpop.permute.xlu0 %1414
      %1416 = vrot.lane.b32.xlu0 %v1326, 12
      %v1417 = vpop.permute.xlu0 %1416
      %1418 = vrot.lane.b32.xlu0 %v1327, 12
      %v1419 = vpop.permute.xlu0 %1418
      %1420 = vrot.lane.b32.xlu0 %v1328, 12
      %v1421 = vpop.permute.xlu0 %1420
      %1422 = vrot.lane.b32.xlu0 %v1329, 12
      %v1423 = vpop.permute.xlu0 %1422
      %1424 = vrot.lane.b32.xlu0 %v1330, 12
      %v1425 = vpop.permute.xlu0 %1424
      %1426 = vrot.lane.b32.xlu0 %v1331, 12
      %v1427 = vpop.permute.xlu0 %1426
      %vm1460 = vcmask 130144
      %1461 = vst.msk [vmem:[#allocation2] sm:$0xff] %vm1460, %v1365
      %1462 = vst.msk [vmem:[#allocation2 + $0x8] sm:$0xff] %vm1460, %v1367
      %1463 = vst.msk [vmem:[#allocation2 + $0x10] sm:$0xff] %vm1460, %v1369
      %1464 = vst.msk [vmem:[#allocation2 + $0x18] sm:$0xff] %vm1460, %v1371
      %1465 = vst.msk [vmem:[#allocation2 + $0x20] sm:$0xff] %vm1460, %v1373
      %1466 = vst.msk [vmem:[#allocation2 + $0x28] sm:$0xff] %vm1460, %v1375
      %1467 = vst.msk [vmem:[#allocation2 + $0x30] sm:$0xff] %vm1460, %v1377
      %1468 = vst.msk [vmem:[#allocation2 + $0x38] sm:$0xff] %vm1460, %v1379
      %1469 = vst.msk [vmem:[#allocation2 + $0x40] sm:$0xff] %vm1460, %v1381
      %1470 = vst.msk [vmem:[#allocation2 + $0x48] sm:$0xff] %vm1460, %v1383
      %1471 = vst.msk [vmem:[#allocation2 + $0x50] sm:$0xff] %vm1460, %v1385
      %1472 = vst.msk [vmem:[#allocation2 + $0x58] sm:$0xff] %vm1460, %v1387
      %1473 = vst.msk [vmem:[#allocation2 + $0x60] sm:$0xff] %vm1460, %v1389
      %1474 = vst.msk [vmem:[#allocation2 + $0x68] sm:$0xff] %vm1460, %v1391
      %1475 = vst.msk [vmem:[#allocation2 + $0x70] sm:$0xff] %vm1460, %v1393
      %1476 = vst.msk [vmem:[#allocation2 + $0x78] sm:$0xff] %vm1460, %v1395
      %1477 = vst.msk [vmem:[#allocation2 + $0x80] sm:$0xff] %vm1460, %v1397
      %1478 = vst.msk [vmem:[#allocation2 + $0x88] sm:$0xff] %vm1460, %v1399
      %1479 = vst.msk [vmem:[#allocation2 + $0x90] sm:$0xff] %vm1460, %v1401
      %1480 = vst.msk [vmem:[#allocation2 + $0x98] sm:$0xff] %vm1460, %v1403
      %1481 = vst.msk [vmem:[#allocation2 + $0xa0] sm:$0xff] %vm1460, %v1405
      %1482 = vst.msk [vmem:[#allocation2 + $0xa8] sm:$0xff] %vm1460, %v1407
      %1483 = vst.msk [vmem:[#allocation2 + $0xb0] sm:$0xff] %vm1460, %v1409
      %1484 = vst.msk [vmem:[#allocation2 + $0xb8] sm:$0xff] %vm1460, %v1411
      %1485 = vst.msk [vmem:[#allocation2 + $0xc0] sm:$0xff] %vm1460, %v1413
      %1486 = vst.msk [vmem:[#allocation2 + $0xc8] sm:$0xff] %vm1460, %v1415
      %1487 = vst.msk [vmem:[#allocation2 + $0xd0] sm:$0xff] %vm1460, %v1417
      %1488 = vst.msk [vmem:[#allocation2 + $0xd8] sm:$0xff] %vm1460, %v1419
      %1489 = vst.msk [vmem:[#allocation2 + $0xe0] sm:$0xff] %vm1460, %v1421
      %1490 = vst.msk [vmem:[#allocation2 + $0xe8] sm:$0xff] %vm1460, %v1423
      %1491 = vst.msk [vmem:[#allocation2 + $0xf0] sm:$0xff] %vm1460, %v1425
      %1492 = vst.msk [vmem:[#allocation2 + $0xf8] sm:$0xff] %vm1460, %v1427
      %v1493 = vld [vmem:[#allocation3 + $0x11] sm:$0xff]
      %v1494 = vld [vmem:[#allocation3 + $0x19] sm:$0xff]
      %v1495 = vld [vmem:[#allocation3 + $0x21] sm:$0xff]
      %v1496 = vld [vmem:[#allocation3 + $0x29] sm:$0xff]
      %v1497 = vld [vmem:[#allocation3 + $0x31] sm:$0xff]
      %v1498 = vld [vmem:[#allocation3 + $0x39] sm:$0xff]
      %v1499 = vld [vmem:[#allocation3 + $0x41] sm:$0xff]
      %v1500 = vld [vmem:[#allocation3 + $0x49] sm:$0xff]
      %v1501 = vld [vmem:[#allocation3 + $0x51] sm:$0xff]
      %v1502 = vld [vmem:[#allocation3 + $0x59] sm:$0xff]
      %v1503 = vld [vmem:[#allocation3 + $0x61] sm:$0xff]
      %v1504 = vld [vmem:[#allocation3 + $0x69] sm:$0xff]
      %v1505 = vld [vmem:[#allocation3 + $0x71] sm:$0xff]
      %v1506 = vld [vmem:[#allocation3 + $0x79] sm:$0xff]
      %v1507 = vld [vmem:[#allocation3 + $0x81] sm:$0xff]
      %v1508 = vld [vmem:[#allocation3 + $0x89] sm:$0xff]
      %v1509 = vld [vmem:[#allocation3 + $0x91] sm:$0xff]
      %v1510 = vld [vmem:[#allocation3 + $0x99] sm:$0xff]
      %v1511 = vld [vmem:[#allocation3 + $0xa1] sm:$0xff]
      %v1512 = vld [vmem:[#allocation3 + $0xa9] sm:$0xff]
      %v1513 = vld [vmem:[#allocation3 + $0xb1] sm:$0xff]
      %v1514 = vld [vmem:[#allocation3 + $0xb9] sm:$0xff]
      %v1515 = vld [vmem:[#allocation3 + $0xc1] sm:$0xff]
      %v1516 = vld [vmem:[#allocation3 + $0xc9] sm:$0xff]
      %v1517 = vld [vmem:[#allocation3 + $0xd1] sm:$0xff]
      %v1518 = vld [vmem:[#allocation3 + $0xd9] sm:$0xff]
      %v1519 = vld [vmem:[#allocation3 + $0xe1] sm:$0xff]
      %v1520 = vld [vmem:[#allocation3 + $0xe9] sm:$0xff]
      %v1521 = vld [vmem:[#allocation3 + $0xf1] sm:$0xff]
      %v1522 = vld [vmem:[#allocation3 + $0xf9] sm:$0xff]
      %v1523 = vld [vmem:[#allocation3 + $0x101] sm:$0xff]
      %v1524 = vld [vmem:[#allocation3 + $0x109] sm:$0xff]
      %1557 = vrot.lane.b32.xlu0 %v1493, 16
      %v1558 = vpop.permute.xlu0 %1557
      %1559 = vrot.lane.b32.xlu0 %v1494, 16
      %v1560 = vpop.permute.xlu0 %1559
      %1561 = vrot.lane.b32.xlu0 %v1495, 16
      %v1562 = vpop.permute.xlu0 %1561
      %1563 = vrot.lane.b32.xlu0 %v1496, 16
      %v1564 = vpop.permute.xlu0 %1563
      %1565 = vrot.lane.b32.xlu0 %v1497, 16
      %v1566 = vpop.permute.xlu0 %1565
      %1567 = vrot.lane.b32.xlu0 %v1498, 16
      %v1568 = vpop.permute.xlu0 %1567
      %1569 = vrot.lane.b32.xlu0 %v1499, 16
      %v1570 = vpop.permute.xlu0 %1569
      %1571 = vrot.lane.b32.xlu0 %v1500, 16
      %v1572 = vpop.permute.xlu0 %1571
      %1573 = vrot.lane.b32.xlu0 %v1501, 16
      %v1574 = vpop.permute.xlu0 %1573
      %1575 = vrot.lane.b32.xlu0 %v1502, 16
      %v1576 = vpop.permute.xlu0 %1575
      %1577 = vrot.lane.b32.xlu0 %v1503, 16
      %v1578 = vpop.permute.xlu0 %1577
      %1579 = vrot.lane.b32.xlu0 %v1504, 16
      %v1580 = vpop.permute.xlu0 %1579
      %1581 = vrot.lane.b32.xlu0 %v1505, 16
      %v1582 = vpop.permute.xlu0 %1581
      %1583 = vrot.lane.b32.xlu0 %v1506, 16
      %v1584 = vpop.permute.xlu0 %1583
      %1585 = vrot.lane.b32.xlu0 %v1507, 16
      %v1586 = vpop.permute.xlu0 %1585
      %1587 = vrot.lane.b32.xlu0 %v1508, 16
      %v1588 = vpop.permute.xlu0 %1587
      %1589 = vrot.lane.b32.xlu0 %v1509, 16
      %v1590 = vpop.permute.xlu0 %1589
      %1591 = vrot.lane.b32.xlu0 %v1510, 16
      %v1592 = vpop.permute.xlu0 %1591
      %1593 = vrot.lane.b32.xlu0 %v1511, 16
      %v1594 = vpop.permute.xlu0 %1593
      %1595 = vrot.lane.b32.xlu0 %v1512, 16
      %v1596 = vpop.permute.xlu0 %1595
      %1597 = vrot.lane.b32.xlu0 %v1513, 16
      %v1598 = vpop.permute.xlu0 %1597
      %1599 = vrot.lane.b32.xlu0 %v1514, 16
      %v1600 = vpop.permute.xlu0 %1599
      %1601 = vrot.lane.b32.xlu0 %v1515, 16
      %v1602 = vpop.permute.xlu0 %1601
      %1603 = vrot.lane.b32.xlu0 %v1516, 16
      %v1604 = vpop.permute.xlu0 %1603
      %1605 = vrot.lane.b32.xlu0 %v1517, 16
      %v1606 = vpop.permute.xlu0 %1605
      %1607 = vrot.lane.b32.xlu0 %v1518, 16
      %v1608 = vpop.permute.xlu0 %1607
      %1609 = vrot.lane.b32.xlu0 %v1519, 16
      %v1610 = vpop.permute.xlu0 %1609
      %1611 = vrot.lane.b32.xlu0 %v1520, 16
      %v1612 = vpop.permute.xlu0 %1611
      %1613 = vrot.lane.b32.xlu0 %v1521, 16
      %v1614 = vpop.permute.xlu0 %1613
      %1615 = vrot.lane.b32.xlu0 %v1522, 16
      %v1616 = vpop.permute.xlu0 %1615
      %1617 = vrot.lane.b32.xlu0 %v1523, 16
      %v1618 = vpop.permute.xlu0 %1617
      %1619 = vrot.lane.b32.xlu0 %v1524, 16
      %v1620 = vpop.permute.xlu0 %1619
      %vm1653 = vcmask 162944
      %1654 = vst.msk [vmem:[#allocation2] sm:$0xff] %vm1653, %v1558
      %1655 = vst.msk [vmem:[#allocation2 + $0x8] sm:$0xff] %vm1653, %v1560
      %1656 = vst.msk [vmem:[#allocation2 + $0x10] sm:$0xff] %vm1653, %v1562
      %1657 = vst.msk [vmem:[#allocation2 + $0x18] sm:$0xff] %vm1653, %v1564
      %1658 = vst.msk [vmem:[#allocation2 + $0x20] sm:$0xff] %vm1653, %v1566
      %1659 = vst.msk [vmem:[#allocation2 + $0x28] sm:$0xff] %vm1653, %v1568
      %1660 = vst.msk [vmem:[#allocation2 + $0x30] sm:$0xff] %vm1653, %v1570
      %1661 = vst.msk [vmem:[#allocation2 + $0x38] sm:$0xff] %vm1653, %v1572
      %1662 = vst.msk [vmem:[#allocation2 + $0x40] sm:$0xff] %vm1653, %v1574
      %1663 = vst.msk [vmem:[#allocation2 + $0x48] sm:$0xff] %vm1653, %v1576
      %1664 = vst.msk [vmem:[#allocation2 + $0x50] sm:$0xff] %vm1653, %v1578
      %1665 = vst.msk [vmem:[#allocation2 + $0x58] sm:$0xff] %vm1653, %v1580
      %1666 = vst.msk [vmem:[#allocation2 + $0x60] sm:$0xff] %vm1653, %v1582
      %1667 = vst.msk [vmem:[#allocation2 + $0x68] sm:$0xff] %vm1653, %v1584
      %1668 = vst.msk [vmem:[#allocation2 + $0x70] sm:$0xff] %vm1653, %v1586
      %1669 = vst.msk [vmem:[#allocation2 + $0x78] sm:$0xff] %vm1653, %v1588
      %1670 = vst.msk [vmem:[#allocation2 + $0x80] sm:$0xff] %vm1653, %v1590
      %1671 = vst.msk [vmem:[#allocation2 + $0x88] sm:$0xff] %vm1653, %v1592
      %1672 = vst.msk [vmem:[#allocation2 + $0x90] sm:$0xff] %vm1653, %v1594
      %1673 = vst.msk [vmem:[#allocation2 + $0x98] sm:$0xff] %vm1653, %v1596
      %1674 = vst.msk [vmem:[#allocation2 + $0xa0] sm:$0xff] %vm1653, %v1598
      %1675 = vst.msk [vmem:[#allocation2 + $0xa8] sm:$0xff] %vm1653, %v1600
      %1676 = vst.msk [vmem:[#allocation2 + $0xb0] sm:$0xff] %vm1653, %v1602
      %1677 = vst.msk [vmem:[#allocation2 + $0xb8] sm:$0xff] %vm1653, %v1604
      %1678 = vst.msk [vmem:[#allocation2 + $0xc0] sm:$0xff] %vm1653, %v1606
      %1679 = vst.msk [vmem:[#allocation2 + $0xc8] sm:$0xff] %vm1653, %v1608
      %1680 = vst.msk [vmem:[#allocation2 + $0xd0] sm:$0xff] %vm1653, %v1610
      %1681 = vst.msk [vmem:[#allocation2 + $0xd8] sm:$0xff] %vm1653, %v1612
      %1682 = vst.msk [vmem:[#allocation2 + $0xe0] sm:$0xff] %vm1653, %v1614
      %1683 = vst.msk [vmem:[#allocation2 + $0xe8] sm:$0xff] %vm1653, %v1616
      %1684 = vst.msk [vmem:[#allocation2 + $0xf0] sm:$0xff] %vm1653, %v1618
      %1685 = vst.msk [vmem:[#allocation2 + $0xf8] sm:$0xff] %vm1653, %v1620
      %v1686 = vld [vmem:[#allocation3 + $0x12] sm:$0xff]
      %v1687 = vld [vmem:[#allocation3 + $0x1a] sm:$0xff]
      %v1688 = vld [vmem:[#allocation3 + $0x22] sm:$0xff]
      %v1689 = vld [vmem:[#allocation3 + $0x2a] sm:$0xff]
      %v1690 = vld [vmem:[#allocation3 + $0x32] sm:$0xff]
      %v1691 = vld [vmem:[#allocation3 + $0x3a] sm:$0xff]
      %v1692 = vld [vmem:[#allocation3 + $0x42] sm:$0xff]
      %v1693 = vld [vmem:[#allocation3 + $0x4a] sm:$0xff]
      %v1694 = vld [vmem:[#allocation3 + $0x52] sm:$0xff]
      %v1695 = vld [vmem:[#allocation3 + $0x5a] sm:$0xff]
      %v1696 = vld [vmem:[#allocation3 + $0x62] sm:$0xff]
      %v1697 = vld [vmem:[#allocation3 + $0x6a] sm:$0xff]
      %v1698 = vld [vmem:[#allocation3 + $0x72] sm:$0xff]
      %v1699 = vld [vmem:[#allocation3 + $0x7a] sm:$0xff]
      %v1700 = vld [vmem:[#allocation3 + $0x82] sm:$0xff]
      %v1701 = vld [vmem:[#allocation3 + $0x8a] sm:$0xff]
      %v1702 = vld [vmem:[#allocation3 + $0x92] sm:$0xff]
      %v1703 = vld [vmem:[#allocation3 + $0x9a] sm:$0xff]
      %v1704 = vld [vmem:[#allocation3 + $0xa2] sm:$0xff]
      %v1705 = vld [vmem:[#allocation3 + $0xaa] sm:$0xff]
      %v1706 = vld [vmem:[#allocation3 + $0xb2] sm:$0xff]
      %v1707 = vld [vmem:[#allocation3 + $0xba] sm:$0xff]
      %v1708 = vld [vmem:[#allocation3 + $0xc2] sm:$0xff]
      %v1709 = vld [vmem:[#allocation3 + $0xca] sm:$0xff]
      %v1710 = vld [vmem:[#allocation3 + $0xd2] sm:$0xff]
      %v1711 = vld [vmem:[#allocation3 + $0xda] sm:$0xff]
      %v1712 = vld [vmem:[#allocation3 + $0xe2] sm:$0xff]
      %v1713 = vld [vmem:[#allocation3 + $0xea] sm:$0xff]
      %v1714 = vld [vmem:[#allocation3 + $0xf2] sm:$0xff]
      %v1715 = vld [vmem:[#allocation3 + $0xfa] sm:$0xff]
      %v1716 = vld [vmem:[#allocation3 + $0x102] sm:$0xff]
      %v1717 = vld [vmem:[#allocation3 + $0x10a] sm:$0xff]
      %v1718 = vsel %vm1043, %v1686, 0.0
      %v1719 = vsel %vm1044, %v1687, 0.0
      %v1720 = vsel %vm1045, %v1688, 0.0
      %v1721 = vsel %vm1046, %v1689, 0.0
      %v1722 = vsel %vm1047, %v1690, 0.0
      %v1723 = vsel %vm1048, %v1691, 0.0
      %v1724 = vsel %vm1049, %v1692, 0.0
      %v1725 = vsel %vm1050, %v1693, 0.0
      %v1726 = vsel %vm1051, %v1694, 0.0
      %v1727 = vsel %vm1052, %v1695, 0.0
      %v1728 = vsel %vm1053, %v1696, 0.0
      %v1729 = vsel %vm1054, %v1697, 0.0
      %v1730 = vsel %vm1055, %v1698, 0.0
      %v1731 = vsel %vm1056, %v1699, 0.0
      %v1732 = vsel %vm1057, %v1700, 0.0
      %v1733 = vsel %vm1058, %v1701, 0.0
      %v1734 = vsel %vm1059, %v1702, 0.0
      %v1735 = vsel %vm1060, %v1703, 0.0
      %v1736 = vsel %vm1061, %v1704, 0.0
      %v1737 = vsel %vm1062, %v1705, 0.0
      %v1738 = vsel %vm1063, %v1706, 0.0
      %v1739 = vsel %vm1064, %v1707, 0.0
      %v1740 = vsel %vm1065, %v1708, 0.0
      %v1741 = vsel %vm1066, %v1709, 0.0
      %v1742 = vsel %vm1067, %v1710, 0.0
      %v1743 = vsel %vm1068, %v1711, 0.0
      %v1744 = vsel %vm1069, %v1712, 0.0
      %v1745 = vsel %vm1070, %v1713, 0.0
      %v1746 = vsel %vm1071, %v1714, 0.0
      %v1747 = vsel %vm1072, %v1715, 0.0
      %v1748 = vsel %vm1073, %v1716, 0.0
      %v1749 = vsel %vm1074, %v1717, 0.0
      %1782 = vrot.lane.b32.xlu0 %v1718, 20
      %v1783 = vpop.permute.xlu0 %1782
      %1784 = vrot.lane.b32.xlu0 %v1719, 20
      %v1785 = vpop.permute.xlu0 %1784
      %1786 = vrot.lane.b32.xlu0 %v1720, 20
      %v1787 = vpop.permute.xlu0 %1786
      %1788 = vrot.lane.b32.xlu0 %v1721, 20
      %v1789 = vpop.permute.xlu0 %1788
      %1790 = vrot.lane.b32.xlu0 %v1722, 20
      %v1791 = vpop.permute.xlu0 %1790
      %1792 = vrot.lane.b32.xlu0 %v1723, 20
      %v1793 = vpop.permute.xlu0 %1792
      %1794 = vrot.lane.b32.xlu0 %v1724, 20
      %v1795 = vpop.permute.xlu0 %1794
      %1796 = vrot.lane.b32.xlu0 %v1725, 20
      %v1797 = vpop.permute.xlu0 %1796
      %1798 = vrot.lane.b32.xlu0 %v1726, 20
      %v1799 = vpop.permute.xlu0 %1798
      %1800 = vrot.lane.b32.xlu0 %v1727, 20
      %v1801 = vpop.permute.xlu0 %1800
      %1802 = vrot.lane.b32.xlu0 %v1728, 20
      %v1803 = vpop.permute.xlu0 %1802
      %1804 = vrot.lane.b32.xlu0 %v1729, 20
      %v1805 = vpop.permute.xlu0 %1804
      %1806 = vrot.lane.b32.xlu0 %v1730, 20
      %v1807 = vpop.permute.xlu0 %1806
      %1808 = vrot.lane.b32.xlu0 %v1731, 20
      %v1809 = vpop.permute.xlu0 %1808
      %1810 = vrot.lane.b32.xlu0 %v1732, 20
      %v1811 = vpop.permute.xlu0 %1810
      %1812 = vrot.lane.b32.xlu0 %v1733, 20
      %v1813 = vpop.permute.xlu0 %1812
      %1814 = vrot.lane.b32.xlu0 %v1734, 20
      %v1815 = vpop.permute.xlu0 %1814
      %1816 = vrot.lane.b32.xlu0 %v1735, 20
      %v1817 = vpop.permute.xlu0 %1816
      %1818 = vrot.lane.b32.xlu0 %v1736, 20
      %v1819 = vpop.permute.xlu0 %1818
      %1820 = vrot.lane.b32.xlu0 %v1737, 20
      %v1821 = vpop.permute.xlu0 %1820
      %1822 = vrot.lane.b32.xlu0 %v1738, 20
      %v1823 = vpop.permute.xlu0 %1822
      %1824 = vrot.lane.b32.xlu0 %v1739, 20
      %v1825 = vpop.permute.xlu0 %1824
      %1826 = vrot.lane.b32.xlu0 %v1740, 20
      %v1827 = vpop.permute.xlu0 %1826
      %1828 = vrot.lane.b32.xlu0 %v1741, 20
      %v1829 = vpop.permute.xlu0 %1828
      %1830 = vrot.lane.b32.xlu0 %v1742, 20
      %v1831 = vpop.permute.xlu0 %1830
      %1832 = vrot.lane.b32.xlu0 %v1743, 20
      %v1833 = vpop.permute.xlu0 %1832
      %1834 = vrot.lane.b32.xlu0 %v1744, 20
      %v1835 = vpop.permute.xlu0 %1834
      %1836 = vrot.lane.b32.xlu0 %v1745, 20
      %v1837 = vpop.permute.xlu0 %1836
      %1838 = vrot.lane.b32.xlu0 %v1746, 20
      %v1839 = vpop.permute.xlu0 %1838
      %1840 = vrot.lane.b32.xlu0 %v1747, 20
      %v1841 = vpop.permute.xlu0 %1840
      %1842 = vrot.lane.b32.xlu0 %v1748, 20
      %v1843 = vpop.permute.xlu0 %1842
      %1844 = vrot.lane.b32.xlu0 %v1749, 20
      %v1845 = vpop.permute.xlu0 %1844
      %vm1878 = vcmask 195744
      %1879 = vst.msk [vmem:[#allocation2] sm:$0xff] %vm1878, %v1783
      %1880 = vst.msk [vmem:[#allocation2 + $0x8] sm:$0xff] %vm1878, %v1785
      %1881 = vst.msk [vmem:[#allocation2 + $0x10] sm:$0xff] %vm1878, %v1787
      %1882 = vst.msk [vmem:[#allocation2 + $0x18] sm:$0xff] %vm1878, %v1789
      %1883 = vst.msk [vmem:[#allocation2 + $0x20] sm:$0xff] %vm1878, %v1791
      %1884 = vst.msk [vmem:[#allocation2 + $0x28] sm:$0xff] %vm1878, %v1793
      %1885 = vst.msk [vmem:[#allocation2 + $0x30] sm:$0xff] %vm1878, %v1795
      %1886 = vst.msk [vmem:[#allocation2 + $0x38] sm:$0xff] %vm1878, %v1797
      %1887 = vst.msk [vmem:[#allocation2 + $0x40] sm:$0xff] %vm1878, %v1799
      %1888 = vst.msk [vmem:[#allocation2 + $0x48] sm:$0xff] %vm1878, %v1801
      %1889 = vst.msk [vmem:[#allocation2 + $0x50] sm:$0xff] %vm1878, %v1803
      %1890 = vst.msk [vmem:[#allocation2 + $0x58] sm:$0xff] %vm1878, %v1805
      %1891 = vst.msk [vmem:[#allocation2 + $0x60] sm:$0xff] %vm1878, %v1807
      %1892 = vst.msk [vmem:[#allocation2 + $0x68] sm:$0xff] %vm1878, %v1809
      %1893 = vst.msk [vmem:[#allocation2 + $0x70] sm:$0xff] %vm1878, %v1811
      %1894 = vst.msk [vmem:[#allocation2 + $0x78] sm:$0xff] %vm1878, %v1813
      %1895 = vst.msk [vmem:[#allocation2 + $0x80] sm:$0xff] %vm1878, %v1815
      %1896 = vst.msk [vmem:[#allocation2 + $0x88] sm:$0xff] %vm1878, %v1817
      %1897 = vst.msk [vmem:[#allocation2 + $0x90] sm:$0xff] %vm1878, %v1819
      %1898 = vst.msk [vmem:[#allocation2 + $0x98] sm:$0xff] %vm1878, %v1821
      %1899 = vst.msk [vmem:[#allocation2 + $0xa0] sm:$0xff] %vm1878, %v1823
      %1900 = vst.msk [vmem:[#allocation2 + $0xa8] sm:$0xff] %vm1878, %v1825
      %1901 = vst.msk [vmem:[#allocation2 + $0xb0] sm:$0xff] %vm1878, %v1827
      %1902 = vst.msk [vmem:[#allocation2 + $0xb8] sm:$0xff] %vm1878, %v1829
      %1903 = vst.msk [vmem:[#allocation2 + $0xc0] sm:$0xff] %vm1878, %v1831
      %1904 = vst.msk [vmem:[#allocation2 + $0xc8] sm:$0xff] %vm1878, %v1833
      %1905 = vst.msk [vmem:[#allocation2 + $0xd0] sm:$0xff] %vm1878, %v1835
      %1906 = vst.msk [vmem:[#allocation2 + $0xd8] sm:$0xff] %vm1878, %v1837
      %1907 = vst.msk [vmem:[#allocation2 + $0xe0] sm:$0xff] %vm1878, %v1839
      %1908 = vst.msk [vmem:[#allocation2 + $0xe8] sm:$0xff] %vm1878, %v1841
      %1909 = vst.msk [vmem:[#allocation2 + $0xf0] sm:$0xff] %vm1878, %v1843
      %1910 = vst.msk [vmem:[#allocation2 + $0xf8] sm:$0xff] %vm1878, %v1845
      %v1911 = vld [vmem:[#allocation3 + $0x20] sm:$0xff]
      %v1912 = vld [vmem:[#allocation3 + $0x28] sm:$0xff]
      %v1913 = vld [vmem:[#allocation3 + $0x30] sm:$0xff]
      %v1914 = vld [vmem:[#allocation3 + $0x38] sm:$0xff]
      %v1915 = vld [vmem:[#allocation3 + $0x40] sm:$0xff]
      %v1916 = vld [vmem:[#allocation3 + $0x48] sm:$0xff]
      %v1917 = vld [vmem:[#allocation3 + $0x50] sm:$0xff]
      %v1918 = vld [vmem:[#allocation3 + $0x58] sm:$0xff]
      %v1919 = vld [vmem:[#allocation3 + $0x60] sm:$0xff]
      %v1920 = vld [vmem:[#allocation3 + $0x68] sm:$0xff]
      %v1921 = vld [vmem:[#allocation3 + $0x70] sm:$0xff]
      %v1922 = vld [vmem:[#allocation3 + $0x78] sm:$0xff]
      %v1923 = vld [vmem:[#allocation3 + $0x80] sm:$0xff]
      %v1924 = vld [vmem:[#allocation3 + $0x88] sm:$0xff]
      %v1925 = vld [vmem:[#allocation3 + $0x90] sm:$0xff]
      %v1926 = vld [vmem:[#allocation3 + $0x98] sm:$0xff]
      %v1927 = vld [vmem:[#allocation3 + $0xa0] sm:$0xff]
      %v1928 = vld [vmem:[#allocation3 + $0xa8] sm:$0xff]
      %v1929 = vld [vmem:[#allocation3 + $0xb0] sm:$0xff]
      %v1930 = vld [vmem:[#allocation3 + $0xb8] sm:$0xff]
      %v1931 = vld [vmem:[#allocation3 + $0xc0] sm:$0xff]
      %v1932 = vld [vmem:[#allocation3 + $0xc8] sm:$0xff]
      %v1933 = vld [vmem:[#allocation3 + $0xd0] sm:$0xff]
      %v1934 = vld [vmem:[#allocation3 + $0xd8] sm:$0xff]
      %v1935 = vld [vmem:[#allocation3 + $0xe0] sm:$0xff]
      %v1936 = vld [vmem:[#allocation3 + $0xe8] sm:$0xff]
      %v1937 = vld [vmem:[#allocation3 + $0xf0] sm:$0xff]
      %v1938 = vld [vmem:[#allocation3 + $0xf8] sm:$0xff]
      %v1939 = vld [vmem:[#allocation3 + $0x100] sm:$0xff]
      %v1940 = vld [vmem:[#allocation3 + $0x108] sm:$0xff]
      %v1941 = vld [vmem:[#allocation3 + $0x110] sm:$0xff]
      %v1942 = vld [vmem:[#allocation3 + $0x118] sm:$0xff]
      %v1943 = vsel %vm722, %v1911, 0.0
      %v1944 = vsel %vm723, %v1912, 0.0
      %v1945 = vsel %vm724, %v1913, 0.0
      %v1946 = vsel %vm725, %v1914, 0.0
      %v1947 = vsel %vm726, %v1915, 0.0
      %v1948 = vsel %vm727, %v1916, 0.0
      %v1949 = vsel %vm728, %v1917, 0.0
      %v1950 = vsel %vm729, %v1918, 0.0
      %v1951 = vsel %vm730, %v1919, 0.0
      %v1952 = vsel %vm731, %v1920, 0.0
      %v1953 = vsel %vm732, %v1921, 0.0
      %v1954 = vsel %vm733, %v1922, 0.0
      %v1955 = vsel %vm734, %v1923, 0.0
      %v1956 = vsel %vm735, %v1924, 0.0
      %v1957 = vsel %vm736, %v1925, 0.0
      %v1958 = vsel %vm737, %v1926, 0.0
      %v1959 = vsel %vm738, %v1927, 0.0
      %v1960 = vsel %vm739, %v1928, 0.0
      %v1961 = vsel %vm740, %v1929, 0.0
      %v1962 = vsel %vm741, %v1930, 0.0
      %v1963 = vsel %vm742, %v1931, 0.0
      %v1964 = vsel %vm743, %v1932, 0.0
      %v1965 = vsel %vm744, %v1933, 0.0
      %v1966 = vsel %vm745, %v1934, 0.0
      %v1967 = vsel %vm746, %v1935, 0.0
      %v1968 = vsel %vm747, %v1936, 0.0
      %v1969 = vsel %vm748, %v1937, 0.0
      %v1970 = vsel %vm749, %v1938, 0.0
      %v1971 = vsel %vm750, %v1939, 0.0
      %v1972 = vsel %vm751, %v1940, 0.0
      %v1973 = vsel %vm752, %v1941, 0.0
      %v1974 = vsel %vm753, %v1942, 0.0
      %2007 = vrot.lane.b32.xlu0 %v1943, 24
      %v2008 = vpop.permute.xlu0 %2007
      %2009 = vrot.lane.b32.xlu0 %v1944, 24
      %v2010 = vpop.permute.xlu0 %2009
      %2011 = vrot.lane.b32.xlu0 %v1945, 24
      %v2012 = vpop.permute.xlu0 %2011
      %2013 = vrot.lane.b32.xlu0 %v1946, 24
      %v2014 = vpop.permute.xlu0 %2013
      %2015 = vrot.lane.b32.xlu0 %v1947, 24
      %v2016 = vpop.permute.xlu0 %2015
      %2017 = vrot.lane.b32.xlu0 %v1948, 24
      %v2018 = vpop.permute.xlu0 %2017
      %2019 = vrot.lane.b32.xlu0 %v1949, 24
      %v2020 = vpop.permute.xlu0 %2019
      %2021 = vrot.lane.b32.xlu0 %v1950, 24
      %v2022 = vpop.permute.xlu0 %2021
      %2023 = vrot.lane.b32.xlu0 %v1951, 24
      %v2024 = vpop.permute.xlu0 %2023
      %2025 = vrot.lane.b32.xlu0 %v1952, 24
      %v2026 = vpop.permute.xlu0 %2025
      %2027 = vrot.lane.b32.xlu0 %v1953, 24
      %v2028 = vpop.permute.xlu0 %2027
      %2029 = vrot.lane.b32.xlu0 %v1954, 24
      %v2030 = vpop.permute.xlu0 %2029
      %2031 = vrot.lane.b32.xlu0 %v1955, 24
      %v2032 = vpop.permute.xlu0 %2031
      %2033 = vrot.lane.b32.xlu0 %v1956, 24
      %v2034 = vpop.permute.xlu0 %2033
      %2035 = vrot.lane.b32.xlu0 %v1957, 24
      %v2036 = vpop.permute.xlu0 %2035
      %2037 = vrot.lane.b32.xlu0 %v1958, 24
      %v2038 = vpop.permute.xlu0 %2037
      %2039 = vrot.lane.b32.xlu0 %v1959, 24
      %v2040 = vpop.permute.xlu0 %2039
      %2041 = vrot.lane.b32.xlu0 %v1960, 24
      %v2042 = vpop.permute.xlu0 %2041
      %2043 = vrot.lane.b32.xlu0 %v1961, 24
      %v2044 = vpop.permute.xlu0 %2043
      %2045 = vrot.lane.b32.xlu0 %v1962, 24
      %v2046 = vpop.permute.xlu0 %2045
      %2047 = vrot.lane.b32.xlu0 %v1963, 24
      %v2048 = vpop.permute.xlu0 %2047
      %2049 = vrot.lane.b32.xlu0 %v1964, 24
      %v2050 = vpop.permute.xlu0 %2049
      %2051 = vrot.lane.b32.xlu0 %v1965, 24
      %v2052 = vpop.permute.xlu0 %2051
      %2053 = vrot.lane.b32.xlu0 %v1966, 24
      %v2054 = vpop.permute.xlu0 %2053
      %2055 = vrot.lane.b32.xlu0 %v1967, 24
      %v2056 = vpop.permute.xlu0 %2055
      %2057 = vrot.lane.b32.xlu0 %v1968, 24
      %v2058 = vpop.permute.xlu0 %2057
      %2059 = vrot.lane.b32.xlu0 %v1969, 24
      %v2060 = vpop.permute.xlu0 %2059
      %2061 = vrot.lane.b32.xlu0 %v1970, 24
      %v2062 = vpop.permute.xlu0 %2061
      %2063 = vrot.lane.b32.xlu0 %v1971, 24
      %v2064 = vpop.permute.xlu0 %2063
      %2065 = vrot.lane.b32.xlu0 %v1972, 24
      %v2066 = vpop.permute.xlu0 %2065
      %2067 = vrot.lane.b32.xlu0 %v1973, 24
      %v2068 = vpop.permute.xlu0 %2067
      %2069 = vrot.lane.b32.xlu0 %v1974, 24
      %v2070 = vpop.permute.xlu0 %2069
      %vm2103 = vcmask 228544
      %2104 = vst.msk [vmem:[#allocation2] sm:$0xff] %vm2103, %v2008
      %2105 = vst.msk [vmem:[#allocation2 + $0x8] sm:$0xff] %vm2103, %v2010
      %2106 = vst.msk [vmem:[#allocation2 + $0x10] sm:$0xff] %vm2103, %v2012
      %2107 = vst.msk [vmem:[#allocation2 + $0x18] sm:$0xff] %vm2103, %v2014
      %2108 = vst.msk [vmem:[#allocation2 + $0x20] sm:$0xff] %vm2103, %v2016
      %2109 = vst.msk [vmem:[#allocation2 + $0x28] sm:$0xff] %vm2103, %v2018
      %2110 = vst.msk [vmem:[#allocation2 + $0x30] sm:$0xff] %vm2103, %v2020
      %2111 = vst.msk [vmem:[#allocation2 + $0x38] sm:$0xff] %vm2103, %v2022
      %2112 = vst.msk [vmem:[#allocation2 + $0x40] sm:$0xff] %vm2103, %v2024
      %2113 = vst.msk [vmem:[#allocation2 + $0x48] sm:$0xff] %vm2103, %v2026
      %2114 = vst.msk [vmem:[#allocation2 + $0x50] sm:$0xff] %vm2103, %v2028
      %2115 = vst.msk [vmem:[#allocation2 + $0x58] sm:$0xff] %vm2103, %v2030
      %2116 = vst.msk [vmem:[#allocation2 + $0x60] sm:$0xff] %vm2103, %v2032
      %2117 = vst.msk [vmem:[#allocation2 + $0x68] sm:$0xff] %vm2103, %v2034
      %2118 = vst.msk [vmem:[#allocation2 + $0x70] sm:$0xff] %vm2103, %v2036
      %2119 = vst.msk [vmem:[#allocation2 + $0x78] sm:$0xff] %vm2103, %v2038
      %2120 = vst.msk [vmem:[#allocation2 + $0x80] sm:$0xff] %vm2103, %v2040
      %2121 = vst.msk [vmem:[#allocation2 + $0x88] sm:$0xff] %vm2103, %v2042
      %2122 = vst.msk [vmem:[#allocation2 + $0x90] sm:$0xff] %vm2103, %v2044
      %2123 = vst.msk [vmem:[#allocation2 + $0x98] sm:$0xff] %vm2103, %v2046
      %2124 = vst.msk [vmem:[#allocation2 + $0xa0] sm:$0xff] %vm2103, %v2048
      %2125 = vst.msk [vmem:[#allocation2 + $0xa8] sm:$0xff] %vm2103, %v2050
      %2126 = vst.msk [vmem:[#allocation2 + $0xb0] sm:$0xff] %vm2103, %v2052
      %2127 = vst.msk [vmem:[#allocation2 + $0xb8] sm:$0xff] %vm2103, %v2054
      %2128 = vst.msk [vmem:[#allocation2 + $0xc0] sm:$0xff] %vm2103, %v2056
      %2129 = vst.msk [vmem:[#allocation2 + $0xc8] sm:$0xff] %vm2103, %v2058
      %2130 = vst.msk [vmem:[#allocation2 + $0xd0] sm:$0xff] %vm2103, %v2060
      %2131 = vst.msk [vmem:[#allocation2 + $0xd8] sm:$0xff] %vm2103, %v2062
      %2132 = vst.msk [vmem:[#allocation2 + $0xe0] sm:$0xff] %vm2103, %v2064
      %2133 = vst.msk [vmem:[#allocation2 + $0xe8] sm:$0xff] %vm2103, %v2066
      %2134 = vst.msk [vmem:[#allocation2 + $0xf0] sm:$0xff] %vm2103, %v2068
      %2135 = vst.msk [vmem:[#allocation2 + $0xf8] sm:$0xff] %vm2103, %v2070
      %v2136 = vld [vmem:[#allocation3 + $0x21] sm:$0xff]
      %v2137 = vld [vmem:[#allocation3 + $0x29] sm:$0xff]
      %v2138 = vld [vmem:[#allocation3 + $0x31] sm:$0xff]
      %v2139 = vld [vmem:[#allocation3 + $0x39] sm:$0xff]
      %v2140 = vld [vmem:[#allocation3 + $0x41] sm:$0xff]
      %v2141 = vld [vmem:[#allocation3 + $0x49] sm:$0xff]
      %v2142 = vld [vmem:[#allocation3 + $0x51] sm:$0xff]
      %v2143 = vld [vmem:[#allocation3 + $0x59] sm:$0xff]
      %v2144 = vld [vmem:[#allocation3 + $0x61] sm:$0xff]
      %v2145 = vld [vmem:[#allocation3 + $0x69] sm:$0xff]
      %v2146 = vld [vmem:[#allocation3 + $0x71] sm:$0xff]
      %v2147 = vld [vmem:[#allocation3 + $0x79] sm:$0xff]
      %v2148 = vld [vmem:[#allocation3 + $0x81] sm:$0xff]
      %v2149 = vld [vmem:[#allocation3 + $0x89] sm:$0xff]
      %v2150 = vld [vmem:[#allocation3 + $0x91] sm:$0xff]
      %v2151 = vld [vmem:[#allocation3 + $0x99] sm:$0xff]
      %v2152 = vld [vmem:[#allocation3 + $0xa1] sm:$0xff]
      %v2153 = vld [vmem:[#allocation3 + $0xa9] sm:$0xff]
      %v2154 = vld [vmem:[#allocation3 + $0xb1] sm:$0xff]
      %v2155 = vld [vmem:[#allocation3 + $0xb9] sm:$0xff]
      %v2156 = vld [vmem:[#allocation3 + $0xc1] sm:$0xff]
      %v2157 = vld [vmem:[#allocation3 + $0xc9] sm:$0xff]
      %v2158 = vld [vmem:[#allocation3 + $0xd1] sm:$0xff]
      %v2159 = vld [vmem:[#allocation3 + $0xd9] sm:$0xff]
      %v2160 = vld [vmem:[#allocation3 + $0xe1] sm:$0xff]
      %v2161 = vld [vmem:[#allocation3 + $0xe9] sm:$0xff]
      %v2162 = vld [vmem:[#allocation3 + $0xf1] sm:$0xff]
      %v2163 = vld [vmem:[#allocation3 + $0xf9] sm:$0xff]
      %v2164 = vld [vmem:[#allocation3 + $0x101] sm:$0xff]
      %v2165 = vld [vmem:[#allocation3 + $0x109] sm:$0xff]
      %v2166 = vld [vmem:[#allocation3 + $0x111] sm:$0xff]
      %v2167 = vld [vmem:[#allocation3 + $0x119] sm:$0xff]
      %2200 = vrot.lane.b32.xlu0 %v2136, 28
      %v2201 = vpop.permute.xlu0 %2200
      %2202 = vrot.lane.b32.xlu0 %v2137, 28
      %v2203 = vpop.permute.xlu0 %2202
      %2204 = vrot.lane.b32.xlu0 %v2138, 28
      %v2205 = vpop.permute.xlu0 %2204
      %2206 = vrot.lane.b32.xlu0 %v2139, 28
      %v2207 = vpop.permute.xlu0 %2206
      %2208 = vrot.lane.b32.xlu0 %v2140, 28
      %v2209 = vpop.permute.xlu0 %2208
      %2210 = vrot.lane.b32.xlu0 %v2141, 28
      %v2211 = vpop.permute.xlu0 %2210
      %2212 = vrot.lane.b32.xlu0 %v2142, 28
      %v2213 = vpop.permute.xlu0 %2212
      %2214 = vrot.lane.b32.xlu0 %v2143, 28
      %v2215 = vpop.permute.xlu0 %2214
      %2216 = vrot.lane.b32.xlu0 %v2144, 28
      %v2217 = vpop.permute.xlu0 %2216
      %2218 = vrot.lane.b32.xlu0 %v2145, 28
      %v2219 = vpop.permute.xlu0 %2218
      %2220 = vrot.lane.b32.xlu0 %v2146, 28
      %v2221 = vpop.permute.xlu0 %2220
      %2222 = vrot.lane.b32.xlu0 %v2147, 28
      %v2223 = vpop.permute.xlu0 %2222
      %2224 = vrot.lane.b32.xlu0 %v2148, 28
      %v2225 = vpop.permute.xlu0 %2224
      %2226 = vrot.lane.b32.xlu0 %v2149, 28
      %v2227 = vpop.permute.xlu0 %2226
      %2228 = vrot.lane.b32.xlu0 %v2150, 28
      %v2229 = vpop.permute.xlu0 %2228
      %2230 = vrot.lane.b32.xlu0 %v2151, 28
      %v2231 = vpop.permute.xlu0 %2230
      %2232 = vrot.lane.b32.xlu0 %v2152, 28
      %v2233 = vpop.permute.xlu0 %2232
      %2234 = vrot.lane.b32.xlu0 %v2153, 28
      %v2235 = vpop.permute.xlu0 %2234
      %2236 = vrot.lane.b32.xlu0 %v2154, 28
      %v2237 = vpop.permute.xlu0 %2236
      %2238 = vrot.lane.b32.xlu0 %v2155, 28
      %v2239 = vpop.permute.xlu0 %2238
      %2240 = vrot.lane.b32.xlu0 %v2156, 28
      %v2241 = vpop.permute.xlu0 %2240
      %2242 = vrot.lane.b32.xlu0 %v2157, 28
      %v2243 = vpop.permute.xlu0 %2242
      %2244 = vrot.lane.b32.xlu0 %v2158, 28
      %v2245 = vpop.permute.xlu0 %2244
      %2246 = vrot.lane.b32.xlu0 %v2159, 28
      %v2247 = vpop.permute.xlu0 %2246
      %2248 = vrot.lane.b32.xlu0 %v2160, 28
      %v2249 = vpop.permute.xlu0 %2248
      %2250 = vrot.lane.b32.xlu0 %v2161, 28
      %v2251 = vpop.permute.xlu0 %2250
      %2252 = vrot.lane.b32.xlu0 %v2162, 28
      %v2253 = vpop.permute.xlu0 %2252
      %2254 = vrot.lane.b32.xlu0 %v2163, 28
      %v2255 = vpop.permute.xlu0 %2254
      %2256 = vrot.lane.b32.xlu0 %v2164, 28
      %v2257 = vpop.permute.xlu0 %2256
      %2258 = vrot.lane.b32.xlu0 %v2165, 28
      %v2259 = vpop.permute.xlu0 %2258
      %2260 = vrot.lane.b32.xlu0 %v2166, 28
      %v2261 = vpop.permute.xlu0 %2260
      %2262 = vrot.lane.b32.xlu0 %v2167, 28
      %v2263 = vpop.permute.xlu0 %2262
      %vm2296 = vcmask 261344
      %2297 = vst.msk [vmem:[#allocation2] sm:$0xff] %vm2296, %v2201
      %2298 = vst.msk [vmem:[#allocation2 + $0x8] sm:$0xff] %vm2296, %v2203
      %2299 = vst.msk [vmem:[#allocation2 + $0x10] sm:$0xff] %vm2296, %v2205
      %2300 = vst.msk [vmem:[#allocation2 + $0x18] sm:$0xff] %vm2296, %v2207
      %2301 = vst.msk [vmem:[#allocation2 + $0x20] sm:$0xff] %vm2296, %v2209
      %2302 = vst.msk [vmem:[#allocation2 + $0x28] sm:$0xff] %vm2296, %v2211
      %2303 = vst.msk [vmem:[#allocation2 + $0x30] sm:$0xff] %vm2296, %v2213
      %2304 = vst.msk [vmem:[#allocation2 + $0x38] sm:$0xff] %vm2296, %v2215
      %2305 = vst.msk [vmem:[#allocation2 + $0x40] sm:$0xff] %vm2296, %v2217
      %2306 = vst.msk [vmem:[#allocation2 + $0x48] sm:$0xff] %vm2296, %v2219
      %2307 = vst.msk [vmem:[#allocation2 + $0x50] sm:$0xff] %vm2296, %v2221
      %2308 = vst.msk [vmem:[#allocation2 + $0x58] sm:$0xff] %vm2296, %v2223
      %2309 = vst.msk [vmem:[#allocation2 + $0x60] sm:$0xff] %vm2296, %v2225
      %2310 = vst.msk [vmem:[#allocation2 + $0x68] sm:$0xff] %vm2296, %v2227
      %2311 = vst.msk [vmem:[#allocation2 + $0x70] sm:$0xff] %vm2296, %v2229
      %2312 = vst.msk [vmem:[#allocation2 + $0x78] sm:$0xff] %vm2296, %v2231
      %2313 = vst.msk [vmem:[#allocation2 + $0x80] sm:$0xff] %vm2296, %v2233
      %2314 = vst.msk [vmem:[#allocation2 + $0x88] sm:$0xff] %vm2296, %v2235
      %2315 = vst.msk [vmem:[#allocation2 + $0x90] sm:$0xff] %vm2296, %v2237
      %2316 = vst.msk [vmem:[#allocation2 + $0x98] sm:$0xff] %vm2296, %v2239
      %2317 = vst.msk [vmem:[#allocation2 + $0xa0] sm:$0xff] %vm2296, %v2241
      %2318 = vst.msk [vmem:[#allocation2 + $0xa8] sm:$0xff] %vm2296, %v2243
      %2319 = vst.msk [vmem:[#allocation2 + $0xb0] sm:$0xff] %vm2296, %v2245
      %2320 = vst.msk [vmem:[#allocation2 + $0xb8] sm:$0xff] %vm2296, %v2247
      %2321 = vst.msk [vmem:[#allocation2 + $0xc0] sm:$0xff] %vm2296, %v2249
      %2322 = vst.msk [vmem:[#allocation2 + $0xc8] sm:$0xff] %vm2296, %v2251
      %2323 = vst.msk [vmem:[#allocation2 + $0xd0] sm:$0xff] %vm2296, %v2253
      %2324 = vst.msk [vmem:[#allocation2 + $0xd8] sm:$0xff] %vm2296, %v2255
      %2325 = vst.msk [vmem:[#allocation2 + $0xe0] sm:$0xff] %vm2296, %v2257
      %2326 = vst.msk [vmem:[#allocation2 + $0xe8] sm:$0xff] %vm2296, %v2259
      %2327 = vst.msk [vmem:[#allocation2 + $0xf0] sm:$0xff] %vm2296, %v2261
      %2328 = vst.msk [vmem:[#allocation2 + $0xf8] sm:$0xff] %vm2296, %v2263
      %v2329 = vld [vmem:[#allocation3 + $0x22] sm:$0xff]
      %v2330 = vld [vmem:[#allocation3 + $0x2a] sm:$0xff]
      %v2331 = vld [vmem:[#allocation3 + $0x32] sm:$0xff]
      %v2332 = vld [vmem:[#allocation3 + $0x3a] sm:$0xff]
      %v2333 = vld [vmem:[#allocation3 + $0x42] sm:$0xff]
      %v2334 = vld [vmem:[#allocation3 + $0x4a] sm:$0xff]
      %v2335 = vld [vmem:[#allocation3 + $0x52] sm:$0xff]
      %v2336 = vld [vmem:[#allocation3 + $0x5a] sm:$0xff]
      %v2337 = vld [vmem:[#allocation3 + $0x62] sm:$0xff]
      %v2338 = vld [vmem:[#allocation3 + $0x6a] sm:$0xff]
      %v2339 = vld [vmem:[#allocation3 + $0x72] sm:$0xff]
      %v2340 = vld [vmem:[#allocation3 + $0x7a] sm:$0xff]
      %v2341 = vld [vmem:[#allocation3 + $0x82] sm:$0xff]
      %v2342 = vld [vmem:[#allocation3 + $0x8a] sm:$0xff]
      %v2343 = vld [vmem:[#allocation3 + $0x92] sm:$0xff]
      %v2344 = vld [vmem:[#allocation3 + $0x9a] sm:$0xff]
      %v2345 = vld [vmem:[#allocation3 + $0xa2] sm:$0xff]
      %v2346 = vld [vmem:[#allocation3 + $0xaa] sm:$0xff]
      %v2347 = vld [vmem:[#allocation3 + $0xb2] sm:$0xff]
      %v2348 = vld [vmem:[#allocation3 + $0xba] sm:$0xff]
      %v2349 = vld [vmem:[#allocation3 + $0xc2] sm:$0xff]
      %v2350 = vld [vmem:[#allocation3 + $0xca] sm:$0xff]
      %v2351 = vld [vmem:[#allocation3 + $0xd2] sm:$0xff]
      %v2352 = vld [vmem:[#allocation3 + $0xda] sm:$0xff]
      %v2353 = vld [vmem:[#allocation3 + $0xe2] sm:$0xff]
      %v2354 = vld [vmem:[#allocation3 + $0xea] sm:$0xff]
      %v2355 = vld [vmem:[#allocation3 + $0xf2] sm:$0xff]
      %v2356 = vld [vmem:[#allocation3 + $0xfa] sm:$0xff]
      %v2357 = vld [vmem:[#allocation3 + $0x102] sm:$0xff]
      %v2358 = vld [vmem:[#allocation3 + $0x10a] sm:$0xff]
      %v2359 = vld [vmem:[#allocation3 + $0x112] sm:$0xff]
      %v2360 = vld [vmem:[#allocation3 + $0x11a] sm:$0xff]
      %v2361 = vsel %vm1043, %v2329, 0.0
      %v2362 = vsel %vm1044, %v2330, 0.0
      %v2363 = vsel %vm1045, %v2331, 0.0
      %v2364 = vsel %vm1046, %v2332, 0.0
      %v2365 = vsel %vm1047, %v2333, 0.0
      %v2366 = vsel %vm1048, %v2334, 0.0
      %v2367 = vsel %vm1049, %v2335, 0.0
      %v2368 = vsel %vm1050, %v2336, 0.0
      %v2369 = vsel %vm1051, %v2337, 0.0
      %v2370 = vsel %vm1052, %v2338, 0.0
      %v2371 = vsel %vm1053, %v2339, 0.0
      %v2372 = vsel %vm1054, %v2340, 0.0
      %v2373 = vsel %vm1055, %v2341, 0.0
      %v2374 = vsel %vm1056, %v2342, 0.0
      %v2375 = vsel %vm1057, %v2343, 0.0
      %v2376 = vsel %vm1058, %v2344, 0.0
      %v2377 = vsel %vm1059, %v2345, 0.0
      %v2378 = vsel %vm1060, %v2346, 0.0
      %v2379 = vsel %vm1061, %v2347, 0.0
      %v2380 = vsel %vm1062, %v2348, 0.0
      %v2381 = vsel %vm1063, %v2349, 0.0
      %v2382 = vsel %vm1064, %v2350, 0.0
      %v2383 = vsel %vm1065, %v2351, 0.0
      %v2384 = vsel %vm1066, %v2352, 0.0
      %v2385 = vsel %vm1067, %v2353, 0.0
      %v2386 = vsel %vm1068, %v2354, 0.0
      %v2387 = vsel %vm1069, %v2355, 0.0
      %v2388 = vsel %vm1070, %v2356, 0.0
      %v2389 = vsel %vm1071, %v2357, 0.0
      %v2390 = vsel %vm1072, %v2358, 0.0
      %v2391 = vsel %vm1073, %v2359, 0.0
      %v2392 = vsel %vm1074, %v2360, 0.0
      %2425 = vrot.lane.b32.xlu0 %v2361, 32
      %v2426 = vpop.permute.xlu0 %2425
      %2427 = vrot.lane.b32.xlu0 %v2362, 32
      %v2428 = vpop.permute.xlu0 %2427
      %2429 = vrot.lane.b32.xlu0 %v2363, 32
      %v2430 = vpop.permute.xlu0 %2429
      %2431 = vrot.lane.b32.xlu0 %v2364, 32
      %v2432 = vpop.permute.xlu0 %2431
      %2433 = vrot.lane.b32.xlu0 %v2365, 32
      %v2434 = vpop.permute.xlu0 %2433
      %2435 = vrot.lane.b32.xlu0 %v2366, 32
      %v2436 = vpop.permute.xlu0 %2435
      %2437 = vrot.lane.b32.xlu0 %v2367, 32
      %v2438 = vpop.permute.xlu0 %2437
      %2439 = vrot.lane.b32.xlu0 %v2368, 32
      %v2440 = vpop.permute.xlu0 %2439
      %2441 = vrot.lane.b32.xlu0 %v2369, 32
      %v2442 = vpop.permute.xlu0 %2441
      %2443 = vrot.lane.b32.xlu0 %v2370, 32
      %v2444 = vpop.permute.xlu0 %2443
      %2445 = vrot.lane.b32.xlu0 %v2371, 32
      %v2446 = vpop.permute.xlu0 %2445
      %2447 = vrot.lane.b32.xlu0 %v2372, 32
      %v2448 = vpop.permute.xlu0 %2447
      %2449 = vrot.lane.b32.xlu0 %v2373, 32
      %v2450 = vpop.permute.xlu0 %2449
      %2451 = vrot.lane.b32.xlu0 %v2374, 32
      %v2452 = vpop.permute.xlu0 %2451
      %2453 = vrot.lane.b32.xlu0 %v2375, 32
      %v2454 = vpop.permute.xlu0 %2453
      %2455 = vrot.lane.b32.xlu0 %v2376, 32
      %v2456 = vpop.permute.xlu0 %2455
      %2457 = vrot.lane.b32.xlu0 %v2377, 32
      %v2458 = vpop.permute.xlu0 %2457
      %2459 = vrot.lane.b32.xlu0 %v2378, 32
      %v2460 = vpop.permute.xlu0 %2459
      %2461 = vrot.lane.b32.xlu0 %v2379, 32
      %v2462 = vpop.permute.xlu0 %2461
      %2463 = vrot.lane.b32.xlu0 %v2380, 32
      %v2464 = vpop.permute.xlu0 %2463
      %2465 = vrot.lane.b32.xlu0 %v2381, 32
      %v2466 = vpop.permute.xlu0 %2465
      %2467 = vrot.lane.b32.xlu0 %v2382, 32
      %v2468 = vpop.permute.xlu0 %2467
      %2469 = vrot.lane.b32.xlu0 %v2383, 32
      %v2470 = vpop.permute.xlu0 %2469
      %2471 = vrot.lane.b32.xlu0 %v2384, 32
      %v2472 = vpop.permute.xlu0 %2471
      %2473 = vrot.lane.b32.xlu0 %v2385, 32
      %v2474 = vpop.permute.xlu0 %2473
      %2475 = vrot.lane.b32.xlu0 %v2386, 32
      %v2476 = vpop.permute.xlu0 %2475
      %2477 = vrot.lane.b32.xlu0 %v2387, 32
      %v2478 = vpop.permute.xlu0 %2477
      %2479 = vrot.lane.b32.xlu0 %v2388, 32
      %v2480 = vpop.permute.xlu0 %2479
      %2481 = vrot.lane.b32.xlu0 %v2389, 32
      %v2482 = vpop.permute.xlu0 %2481
      %2483 = vrot.lane.b32.xlu0 %v2390, 32
      %v2484 = vpop.permute.xlu0 %2483
      %2485 = vrot.lane.b32.xlu0 %v2391, 32
      %v2486 = vpop.permute.xlu0 %2485
      %2487 = vrot.lane.b32.xlu0 %v2392, 32
      %v2488 = vpop.permute.xlu0 %2487
      %vm2521 = vcmask 294144
      %2522 = vst.msk [vmem:[#allocation2] sm:$0xff] %vm2521, %v2426
      %2523 = vst.msk [vmem:[#allocation2 + $0x8] sm:$0xff] %vm2521, %v2428
      %2524 = vst.msk [vmem:[#allocation2 + $0x10] sm:$0xff] %vm2521, %v2430
      %2525 = vst.msk [vmem:[#allocation2 + $0x18] sm:$0xff] %vm2521, %v2432
      %2526 = vst.msk [vmem:[#allocation2 + $0x20] sm:$0xff] %vm2521, %v2434
      %2527 = vst.msk [vmem:[#allocation2 + $0x28] sm:$0xff] %vm2521, %v2436
      %2528 = vst.msk [vmem:[#allocation2 + $0x30] sm:$0xff] %vm2521, %v2438
      %2529 = vst.msk [vmem:[#allocation2 + $0x38] sm:$0xff] %vm2521, %v2440
      %2530 = vst.msk [vmem:[#allocation2 + $0x40] sm:$0xff] %vm2521, %v2442
      %2531 = vst.msk [vmem:[#allocation2 + $0x48] sm:$0xff] %vm2521, %v2444
      %2532 = vst.msk [vmem:[#allocation2 + $0x50] sm:$0xff] %vm2521, %v2446
      %2533 = vst.msk [vmem:[#allocation2 + $0x58] sm:$0xff] %vm2521, %v2448
      %2534 = vst.msk [vmem:[#allocation2 + $0x60] sm:$0xff] %vm2521, %v2450
      %2535 = vst.msk [vmem:[#allocation2 + $0x68] sm:$0xff] %vm2521, %v2452
      %2536 = vst.msk [vmem:[#allocation2 + $0x70] sm:$0xff] %vm2521, %v2454
      %2537 = vst.msk [vmem:[#allocation2 + $0x78] sm:$0xff] %vm2521, %v2456
      %2538 = vst.msk [vmem:[#allocation2 + $0x80] sm:$0xff] %vm2521, %v2458
      %2539 = vst.msk [vmem:[#allocation2 + $0x88] sm:$0xff] %vm2521, %v2460
      %2540 = vst.msk [vmem:[#allocation2 + $0x90] sm:$0xff] %vm2521, %v2462
      %2541 = vst.msk [vmem:[#allocation2 + $0x98] sm:$0xff] %vm2521, %v2464
      %2542 = vst.msk [vmem:[#allocation2 + $0xa0] sm:$0xff] %vm2521, %v2466
      %2543 = vst.msk [vmem:[#allocation2 + $0xa8] sm:$0xff] %vm2521, %v2468
      %2544 = vst.msk [vmem:[#allocation2 + $0xb0] sm:$0xff] %vm2521, %v2470
      %2545 = vst.msk [vmem:[#allocation2 + $0xb8] sm:$0xff] %vm2521, %v2472
      %2546 = vst.msk [vmem:[#allocation2 + $0xc0] sm:$0xff] %vm2521, %v2474
      %2547 = vst.msk [vmem:[#allocation2 + $0xc8] sm:$0xff] %vm2521, %v2476
      %2548 = vst.msk [vmem:[#allocation2 + $0xd0] sm:$0xff] %vm2521, %v2478
      %2549 = vst.msk [vmem:[#allocation2 + $0xd8] sm:$0xff] %vm2521, %v2480
      %2550 = vst.msk [vmem:[#allocation2 + $0xe0] sm:$0xff] %vm2521, %v2482
      %2551 = vst.msk [vmem:[#allocation2 + $0xe8] sm:$0xff] %vm2521, %v2484
      %2552 = vst.msk [vmem:[#allocation2 + $0xf0] sm:$0xff] %vm2521, %v2486
      %2553 = vst.msk [vmem:[#allocation2 + $0xf8] sm:$0xff] %vm2521, %v2488
      %v2554 = vld [vmem:[#allocation2] sm:$0xff]
      %v2555 = vld [vmem:[#allocation2 + $0x8] sm:$0xff]
      %v2556 = vld [vmem:[#allocation2 + $0x10] sm:$0xff]
      %v2557 = vld [vmem:[#allocation2 + $0x18] sm:$0xff]
      %v2558 = vld [vmem:[#allocation2 + $0x20] sm:$0xff]
      %v2559 = vld [vmem:[#allocation2 + $0x28] sm:$0xff]
      %v2560 = vld [vmem:[#allocation2 + $0x30] sm:$0xff]
      %v2561 = vld [vmem:[#allocation2 + $0x38] sm:$0xff]
      %v2562 = vld [vmem:[#allocation2 + $0x40] sm:$0xff]
      %v2563 = vld [vmem:[#allocation2 + $0x48] sm:$0xff]
      %v2564 = vld [vmem:[#allocation2 + $0x50] sm:$0xff]
      %v2565 = vld [vmem:[#allocation2 + $0x58] sm:$0xff]
      %v2566 = vld [vmem:[#allocation2 + $0x60] sm:$0xff]
      %v2567 = vld [vmem:[#allocation2 + $0x68] sm:$0xff]
      %v2568 = vld [vmem:[#allocation2 + $0x70] sm:$0xff]
      %v2569 = vld [vmem:[#allocation2 + $0x78] sm:$0xff]
      %v2570 = vld [vmem:[#allocation2 + $0x80] sm:$0xff]
      %v2571 = vld [vmem:[#allocation2 + $0x88] sm:$0xff]
      %v2572 = vld [vmem:[#allocation2 + $0x90] sm:$0xff]
      %v2573 = vld [vmem:[#allocation2 + $0x98] sm:$0xff]
      %v2574 = vld [vmem:[#allocation2 + $0xa0] sm:$0xff]
      %v2575 = vld [vmem:[#allocation2 + $0xa8] sm:$0xff]
      %v2576 = vld [vmem:[#allocation2 + $0xb0] sm:$0xff]
      %v2577 = vld [vmem:[#allocation2 + $0xb8] sm:$0xff]
      %v2578 = vld [vmem:[#allocation2 + $0xc0] sm:$0xff]
      %v2579 = vld [vmem:[#allocation2 + $0xc8] sm:$0xff]
      %v2580 = vld [vmem:[#allocation2 + $0xd0] sm:$0xff]
      %v2581 = vld [vmem:[#allocation2 + $0xd8] sm:$0xff]
      %v2582 = vld [vmem:[#allocation2 + $0xe0] sm:$0xff]
      %v2583 = vld [vmem:[#allocation2 + $0xe8] sm:$0xff]
      %v2584 = vld [vmem:[#allocation2 + $0xf0] sm:$0xff]
      %v2585 = vld [vmem:[#allocation2 + $0xf8] sm:$0xff]
      %v2586 = vld [vmem:[%s1] sm:$0xff]
      %v2587 = vld [vmem:[%s1 + $0x8] sm:$0xff]
      %v2588 = vld [vmem:[%s1 + $0x10] sm:$0xff]
      %v2589 = vld [vmem:[%s1 + $0x18] sm:$0xff]
      %v2590 = vld [vmem:[%s1 + $0x20] sm:$0xf]
      %v2591 = vld [vmem:[%s3] sm:$0x1]
      %v2592 = vlaneseq
      %v2593 = vshrl.u32 %v2592, 7
      %v2594 = vsub.s32 0, %v2593
      %v2595 = vrot.slane %v2591, %v2594
      %vm2596 = vcmask 293888
      %v2598 = vsel %vm2596, %v2554, 0
      %v2601 = vsel %vm2596, %v2555, 0
      %v2604 = vsel %vm2596, %v2556, 0
      %v2607 = vsel %vm2596, %v2557, 0
      %v2610 = vsel %vm2596, %v2558, 0
      %v2613 = vsel %vm2596, %v2559, 0
      %v2616 = vsel %vm2596, %v2560, 0
      %v2619 = vsel %vm2596, %v2561, 0
      %v2622 = vsel %vm2596, %v2562, 0
      %v2625 = vsel %vm2596, %v2563, 0
      %v2628 = vsel %vm2596, %v2564, 0
      %v2631 = vsel %vm2596, %v2565, 0
      %v2634 = vsel %vm2596, %v2566, 0
      %v2637 = vsel %vm2596, %v2567, 0
      %v2640 = vsel %vm2596, %v2568, 0
      %v2643 = vsel %vm2596, %v2569, 0
      %v2646 = vsel %vm2596, %v2570, 0
      %v2649 = vsel %vm2596, %v2571, 0
      %v2652 = vsel %vm2596, %v2572, 0
      %v2655 = vsel %vm2596, %v2573, 0
      %v2658 = vsel %vm2596, %v2574, 0
      %v2661 = vsel %vm2596, %v2575, 0
      %v2664 = vsel %vm2596, %v2576, 0
      %v2667 = vsel %vm2596, %v2577, 0
      %v2670 = vsel %vm2596, %v2578, 0
      %v2673 = vsel %vm2596, %v2579, 0
      %v2676 = vsel %vm2596, %v2580, 0
      %v2679 = vsel %vm2596, %v2581, 0
      %v2682 = vsel %vm2596, %v2582, 0
      %v2685 = vsel %vm2596, %v2583, 0
      %v2688 = vsel %vm2596, %v2584, 0
      %v2691 = vsel %vm2596, %v2585, 0
      %vm2693 = vcmask 1043456
      %v2695 = vsel %vm2693, %v2590, 0
      %2697 = vmatprep.subr.mxu0 0.0
      %2698 = vmatpush1.msra.mxu0 %v2586
      %2699 = vmatprep.subr.mxu0 0.0
      %2700 = vmatpush1.msra.mxu0 %v2587
      %2701 = vmatprep.subr.mxu0 0.0
      %2702 = vmatpush1.msra.mxu0 %v2588
      %2703 = vmatprep.subr.mxu0 0.0
      %2704 = vmatpush1.msra.mxu0 %v2589
      %2705 = vmatprep.subr.mxu0 0.0
      %2706 = vmatpush1.msra.mxu0 %v2695
      %2707 = vmatprep.subr.mxu0 0.0
      %2708 = vmatpush1.msra.mxu0 0.0
      %2709 = vmatprep.subr.mxu0 0.0
      %2710 = vmatpush1.msra.mxu0 0.0
      %2711 = vmatprep.subr.mxu0 0.0
      %2712 = vmatpush1.msra.mxu0 0.0
      %2713 = vmatprep.subr.mxu0 0.0
      %2714 = vmatpush1.msra.mxu0 0.0
      %2715 = vmatprep.subr.mxu0 0.0
      %2716 = vmatpush1.msra.mxu0 0.0
      %2717 = vmatprep.subr.mxu0 0.0
      %2718 = vmatpush1.msra.mxu0 0.0
      %2719 = vmatprep.subr.mxu0 0.0
      %2720 = vmatpush1.msra.mxu0 0.0
      %2721 = vmatprep.subr.mxu0 0.0
      %2722 = vmatpush1.msra.mxu0 0.0
      %2723 = vmatprep.subr.mxu0 0.0
      %2724 = vmatpush1.msra.mxu0 0.0
      %2725 = vmatprep.subr.mxu0 0.0
      %2726 = vmatpush1.msra.mxu0 0.0
      %2727 = vmatprep.subr.mxu0 0.0
      %2728 = vmatpush1.msra.mxu0 0.0
      %2729 = vmatprep.subr.mxu0 0.0
      %2730 = vmatpush1.msra.mxu0 0.0
      %2731 = vmatprep.subr.mxu0 0.0
      %2732 = vmatpush1.msra.mxu0 0.0
      %2733 = vmatprep.subr.mxu0 0.0
      %2734 = vmatpush1.msra.mxu0 0.0
      %2735 = vmatprep.subr.mxu0 0.0
      %2736 = vmatpush1.msra.mxu0 0.0
      %2737 = vmatprep.subr.mxu0 0.0
      %2738 = vmatpush1.msra.mxu0 0.0
      %2739 = vmatprep.subr.mxu0 0.0
      %2740 = vmatpush1.msra.mxu0 0.0
      %2741 = vmatprep.subr.mxu0 0.0
      %2742 = vmatpush1.msra.mxu0 0.0
      %2743 = vmatprep.subr.mxu0 0.0
      %2744 = vmatpush1.msra.mxu0 0.0
      %2745 = vmatprep.subr.mxu0 0.0
      %2746 = vmatpush1.msra.mxu0 0.0
      %2747 = vmatprep.subr.mxu0 0.0
      %2748 = vmatpush1.msra.mxu0 0.0
      %2749 = vmatprep.subr.mxu0 0.0
      %2750 = vmatpush1.msra.mxu0 0.0
      %2751 = vmatprep.subr.mxu0 0.0
      %2752 = vmatpush1.msra.mxu0 0.0
      %2753 = vmatprep.subr.mxu0 0.0
      %2754 = vmatpush1.msra.mxu0 0.0
      %2755 = vmatprep.subr.mxu0 0.0
      %2756 = vmatpush1.msra.mxu0 0.0
      %2757 = vmatprep.subr.mxu0 0.0
      %2758 = vmatpush1.msra.mxu0 0.0
      %2759 = vmatprep.subr.mxu0 0.0
      %2760 = vmatpush1.msra.mxu0 0.0
      %2761 = vmatprep.mubr.f32.mxu0 0.0
      %2762 = vmatmul.mubr.f32.gmra.mrb[0].mxu0 %v2598
      %v2763 = vpop.f32.mrb[0].mxu0
      %v2764 = vadd.f32 %v2595, %v2763
      %v2765 = vpop.f32.mrb[0].mxu0
      %2766 = vmatprep.mubr.f32.mxu0 0.0
      %2767 = vmatmul.mubr.f32.gmra.mrb[0].mxu0 %v2601
      %v2768 = vpop.f32.mrb[0].mxu0
      %v2769 = vadd.f32 %v2595, %v2768
      %v2770 = vpop.f32.mrb[0].mxu0
      %2771 = vmatprep.mubr.f32.mxu0 0.0
      %2772 = vmatmul.mubr.f32.gmra.mrb[0].mxu0 %v2604
      %v2773 = vpop.f32.mrb[0].mxu0
      %v2774 = vadd.f32 %v2595, %v2773
      %v2775 = vpop.f32.mrb[0].mxu0
      %2776 = vmatprep.mubr.f32.mxu0 0.0
      %2777 = vmatmul.mubr.f32.gmra.mrb[0].mxu0 %v2607
      %v2778 = vpop.f32.mrb[0].mxu0
      %v2779 = vadd.f32 %v2595, %v2778
      %v2780 = vpop.f32.mrb[0].mxu0
      %2781 = vmatprep.mubr.f32.mxu0 0.0
      %2782 = vmatmul.mubr.f32.gmra.mrb[0].mxu0 %v2610
      %v2783 = vpop.f32.mrb[0].mxu0
      %v2784 = vadd.f32 %v2595, %v2783
      %v2785 = vpop.f32.mrb[0].mxu0
      %2786 = vmatprep.mubr.f32.mxu0 0.0
      %2787 = vmatmul.mubr.f32.gmra.mrb[0].mxu0 %v2613
      %v2788 = vpop.f32.mrb[0].mxu0
      %v2789 = vadd.f32 %v2595, %v2788
      %v2790 = vpop.f32.mrb[0].mxu0
      %2791 = vmatprep.mubr.f32.mxu0 0.0
      %2792 = vmatmul.mubr.f32.gmra.mrb[0].mxu0 %v2616
      %v2793 = vpop.f32.mrb[0].mxu0
      %v2794 = vadd.f32 %v2595, %v2793
      %v2795 = vpop.f32.mrb[0].mxu0
      %2796 = vmatprep.mubr.f32.mxu0 0.0
      %2797 = vmatmul.mubr.f32.gmra.mrb[0].mxu0 %v2619
      %v2798 = vpop.f32.mrb[0].mxu0
      %v2799 = vadd.f32 %v2595, %v2798
      %v2800 = vpop.f32.mrb[0].mxu0
      %2801 = vmatprep.mubr.f32.mxu0 0.0
      %2802 = vmatmul.mubr.f32.gmra.mrb[0].mxu0 %v2622
      %v2803 = vpop.f32.mrb[0].mxu0
      %v2804 = vadd.f32 %v2595, %v2803
      %v2805 = vpop.f32.mrb[0].mxu0
      %2806 = vmatprep.mubr.f32.mxu0 0.0
      %2807 = vmatmul.mubr.f32.gmra.mrb[0].mxu0 %v2625
      %v2808 = vpop.f32.mrb[0].mxu0
      %v2809 = vadd.f32 %v2595, %v2808
      %v2810 = vpop.f32.mrb[0].mxu0
      %2811 = vmatprep.mubr.f32.mxu0 0.0
      %2812 = vmatmul.mubr.f32.gmra.mrb[0].mxu0 %v2628
      %v2813 = vpop.f32.mrb[0].mxu0
      %v2814 = vadd.f32 %v2595, %v2813
      %v2815 = vpop.f32.mrb[0].mxu0
      %2816 = vmatprep.mubr.f32.mxu0 0.0
      %2817 = vmatmul.mubr.f32.gmra.mrb[0].mxu0 %v2631
      %v2818 = vpop.f32.mrb[0].mxu0
      %v2819 = vadd.f32 %v2595, %v2818
      %v2820 = vpop.f32.mrb[0].mxu0
      %2821 = vmatprep.mubr.f32.mxu0 0.0
      %2822 = vmatmul.mubr.f32.gmra.mrb[0].mxu0 %v2634
      %v2823 = vpop.f32.mrb[0].mxu0
      %v2824 = vadd.f32 %v2595, %v2823
      %v2825 = vpop.f32.mrb[0].mxu0
      %2826 = vmatprep.mubr.f32.mxu0 0.0
      %2827 = vmatmul.mubr.f32.gmra.mrb[0].mxu0 %v2637
      %v2828 = vpop.f32.mrb[0].mxu0
      %v2829 = vadd.f32 %v2595, %v2828
      %v2830 = vpop.f32.mrb[0].mxu0
      %2831 = vmatprep.mubr.f32.mxu0 0.0
      %2832 = vmatmul.mubr.f32.gmra.mrb[0].mxu0 %v2640
      %v2833 = vpop.f32.mrb[0].mxu0
      %v2834 = vadd.f32 %v2595, %v2833
      %v2835 = vpop.f32.mrb[0].mxu0
      %2836 = vmatprep.mubr.f32.mxu0 0.0
      %2837 = vmatmul.mubr.f32.gmra.mrb[0].mxu0 %v2643
      %v2838 = vpop.f32.mrb[0].mxu0
      %v2839 = vadd.f32 %v2595, %v2838
      %v2840 = vpop.f32.mrb[0].mxu0
      %2841 = vmatprep.mubr.f32.mxu0 0.0
      %2842 = vmatmul.mubr.f32.gmra.mrb[0].mxu0 %v2646
      %v2843 = vpop.f32.mrb[0].mxu0
      %v2844 = vadd.f32 %v2595, %v2843
      %v2845 = vpop.f32.mrb[0].mxu0
      %2846 = vmatprep.mubr.f32.mxu0 0.0
      %2847 = vmatmul.mubr.f32.gmra.mrb[0].mxu0 %v2649
      %v2848 = vpop.f32.mrb[0].mxu0
      %v2849 = vadd.f32 %v2595, %v2848
      %v2850 = vpop.f32.mrb[0].mxu0
      %2851 = vmatprep.mubr.f32.mxu0 0.0
      %2852 = vmatmul.mubr.f32.gmra.mrb[0].mxu0 %v2652
      %v2853 = vpop.f32.mrb[0].mxu0
      %v2854 = vadd.f32 %v2595, %v2853
      %v2855 = vpop.f32.mrb[0].mxu0
      %2856 = vmatprep.mubr.f32.mxu0 0.0
      %2857 = vmatmul.mubr.f32.gmra.mrb[0].mxu0 %v2655
      %v2858 = vpop.f32.mrb[0].mxu0
      %v2859 = vadd.f32 %v2595, %v2858
      %v2860 = vpop.f32.mrb[0].mxu0
      %2861 = vmatprep.mubr.f32.mxu0 0.0
      %2862 = vmatmul.mubr.f32.gmra.mrb[0].mxu0 %v2658
      %v2863 = vpop.f32.mrb[0].mxu0
      %v2864 = vadd.f32 %v2595, %v2863
      %v2865 = vpop.f32.mrb[0].mxu0
      %2866 = vmatprep.mubr.f32.mxu0 0.0
      %2867 = vmatmul.mubr.f32.gmra.mrb[0].mxu0 %v2661
      %v2868 = vpop.f32.mrb[0].mxu0
      %v2869 = vadd.f32 %v2595, %v2868
      %v2870 = vpop.f32.mrb[0].mxu0
      %2871 = vmatprep.mubr.f32.mxu0 0.0
      %2872 = vmatmul.mubr.f32.gmra.mrb[0].mxu0 %v2664
      %v2873 = vpop.f32.mrb[0].mxu0
      %v2874 = vadd.f32 %v2595, %v2873
      %v2875 = vpop.f32.mrb[0].mxu0
      %2876 = vmatprep.mubr.f32.mxu0 0.0
      %2877 = vmatmul.mubr.f32.gmra.mrb[0].mxu0 %v2667
      %v2878 = vpop.f32.mrb[0].mxu0
      %v2879 = vadd.f32 %v2595, %v2878
      %v2880 = vpop.f32.mrb[0].mxu0
      %2881 = vmatprep.mubr.f32.mxu0 0.0
      %2882 = vmatmul.mubr.f32.gmra.mrb[0].mxu0 %v2670
      %v2883 = vpop.f32.mrb[0].mxu0
      %v2884 = vadd.f32 %v2595, %v2883
      %v2885 = vpop.f32.mrb[0].mxu0
      %2886 = vmatprep.mubr.f32.mxu0 0.0
      %2887 = vmatmul.mubr.f32.gmra.mrb[0].mxu0 %v2673
      %v2888 = vpop.f32.mrb[0].mxu0
      %v2889 = vadd.f32 %v2595, %v2888
      %v2890 = vpop.f32.mrb[0].mxu0
      %2891 = vmatprep.mubr.f32.mxu0 0.0
      %2892 = vmatmul.mubr.f32.gmra.mrb[0].mxu0 %v2676
      %v2893 = vpop.f32.mrb[0].mxu0
      %v2894 = vadd.f32 %v2595, %v2893
      %v2895 = vpop.f32.mrb[0].mxu0
      %2896 = vmatprep.mubr.f32.mxu0 0.0
      %2897 = vmatmul.mubr.f32.gmra.mrb[0].mxu0 %v2679
      %v2898 = vpop.f32.mrb[0].mxu0
      %v2899 = vadd.f32 %v2595, %v2898
      %v2900 = vpop.f32.mrb[0].mxu0
      %2901 = vmatprep.mubr.f32.mxu0 0.0
      %2902 = vmatmul.mubr.f32.gmra.mrb[0].mxu0 %v2682
      %v2903 = vpop.f32.mrb[0].mxu0
      %v2904 = vadd.f32 %v2595, %v2903
      %v2905 = vpop.f32.mrb[0].mxu0
      %2906 = vmatprep.mubr.f32.mxu0 0.0
      %2907 = vmatmul.mubr.f32.gmra.mrb[0].mxu0 %v2685
      %v2908 = vpop.f32.mrb[0].mxu0
      %v2909 = vadd.f32 %v2595, %v2908
      %v2910 = vpop.f32.mrb[0].mxu0
      %2911 = vmatprep.mubr.f32.mxu0 0.0
      %2912 = vmatmul.mubr.f32.gmra.mrb[0].mxu0 %v2688
      %v2913 = vpop.f32.mrb[0].mxu0
      %v2914 = vadd.f32 %v2595, %v2913
      %v2915 = vpop.f32.mrb[0].mxu0
      %2916 = vmatprep.mubr.f32.mxu0 0.0
      %2917 = vmatmul.mubr.f32.gmra.mrb[0].mxu0 %v2691
      %v2918 = vpop.f32.mrb[0].mxu0
      %v2919 = vadd.f32 %v2595, %v2918
      %v2920 = vpop.f32.mrb[0].mxu0
      %2921 = vdwg.mxu0
      %vm2922 = vcmp.gt.f32.partialorder %v2764, 0.0
      %vm2923 = vcmp.gt.f32.partialorder %v2769, 0.0
      %vm2924 = vcmp.gt.f32.partialorder %v2774, 0.0
      %vm2925 = vcmp.gt.f32.partialorder %v2779, 0.0
      %vm2926 = vcmp.gt.f32.partialorder %v2784, 0.0
      %vm2927 = vcmp.gt.f32.partialorder %v2789, 0.0
      %vm2928 = vcmp.gt.f32.partialorder %v2794, 0.0
      %vm2929 = vcmp.gt.f32.partialorder %v2799, 0.0
      %vm2930 = vcmp.gt.f32.partialorder %v2804, 0.0
      %vm2931 = vcmp.gt.f32.partialorder %v2809, 0.0
      %vm2932 = vcmp.gt.f32.partialorder %v2814, 0.0
      %vm2933 = vcmp.gt.f32.partialorder %v2819, 0.0
      %vm2934 = vcmp.gt.f32.partialorder %v2824, 0.0
      %vm2935 = vcmp.gt.f32.partialorder %v2829, 0.0
      %vm2936 = vcmp.gt.f32.partialorder %v2834, 0.0
      %vm2937 = vcmp.gt.f32.partialorder %v2839, 0.0
      %vm2938 = vcmp.gt.f32.partialorder %v2844, 0.0
      %vm2939 = vcmp.gt.f32.partialorder %v2849, 0.0
      %vm2940 = vcmp.gt.f32.partialorder %v2854, 0.0
      %vm2941 = vcmp.gt.f32.partialorder %v2859, 0.0
      %vm2942 = vcmp.gt.f32.partialorder %v2864, 0.0
      %vm2943 = vcmp.gt.f32.partialorder %v2869, 0.0
      %vm2944 = vcmp.gt.f32.partialorder %v2874, 0.0
      %vm2945 = vcmp.gt.f32.partialorder %v2879, 0.0
      %vm2946 = vcmp.gt.f32.partialorder %v2884, 0.0
      %vm2947 = vcmp.gt.f32.partialorder %v2889, 0.0
      %vm2948 = vcmp.gt.f32.partialorder %v2894, 0.0
      %vm2949 = vcmp.gt.f32.partialorder %v2899, 0.0
      %vm2950 = vcmp.gt.f32.partialorder %v2904, 0.0
      %vm2951 = vcmp.gt.f32.partialorder %v2909, 0.0
      %vm2952 = vcmp.gt.f32.partialorder %v2914, 0.0
      %vm2953 = vcmp.gt.f32.partialorder %v2919, 0.0
      %v2954 = vmul.f32 %v2764, 0.01
      %v2955 = vmul.f32 %v2769, 0.01
      %v2956 = vmul.f32 %v2774, 0.01
      %v2957 = vmul.f32 %v2779, 0.01
      %v2958 = vmul.f32 %v2784, 0.01
      %v2959 = vmul.f32 %v2789, 0.01
      %v2960 = vmul.f32 %v2794, 0.01
      %v2961 = vmul.f32 %v2799, 0.01
      %v2962 = vmul.f32 %v2804, 0.01
      %v2963 = vmul.f32 %v2809, 0.01
      %v2964 = vmul.f32 %v2814, 0.01
      %v2965 = vmul.f32 %v2819, 0.01
      %v2966 = vmul.f32 %v2824, 0.01
      %v2967 = vmul.f32 %v2829, 0.01
      %v2968 = vmul.f32 %v2834, 0.01
      %v2969 = vmul.f32 %v2839, 0.01
      %v2970 = vmul.f32 %v2844, 0.01
      %v2971 = vmul.f32 %v2849, 0.01
      %v2972 = vmul.f32 %v2854, 0.01
      %v2973 = vmul.f32 %v2859, 0.01
      %v2974 = vmul.f32 %v2864, 0.01
      %v2975 = vmul.f32 %v2869, 0.01
      %v2976 = vmul.f32 %v2874, 0.01
      %v2977 = vmul.f32 %v2879, 0.01
      %v2978 = vmul.f32 %v2884, 0.01
      %v2979 = vmul.f32 %v2889, 0.01
      %v2980 = vmul.f32 %v2894, 0.01
      %v2981 = vmul.f32 %v2899, 0.01
      %v2982 = vmul.f32 %v2904, 0.01
      %v2983 = vmul.f32 %v2909, 0.01
      %v2984 = vmul.f32 %v2914, 0.01
      %v2985 = vmul.f32 %v2919, 0.01
      %v2986 = vsel %vm2922, %v2764, %v2954
      %v2987 = vsel %vm2923, %v2769, %v2955
      %v2988 = vsel %vm2924, %v2774, %v2956
      %v2989 = vsel %vm2925, %v2779, %v2957
      %v2990 = vsel %vm2926, %v2784, %v2958
      %v2991 = vsel %vm2927, %v2789, %v2959
      %v2992 = vsel %vm2928, %v2794, %v2960
      %v2993 = vsel %vm2929, %v2799, %v2961
      %v2994 = vsel %vm2930, %v2804, %v2962
      %v2995 = vsel %vm2931, %v2809, %v2963
      %v2996 = vsel %vm2932, %v2814, %v2964
      %v2997 = vsel %vm2933, %v2819, %v2965
      %v2998 = vsel %vm2934, %v2824, %v2966
      %v2999 = vsel %vm2935, %v2829, %v2967
      %v3000 = vsel %vm2936, %v2834, %v2968
      %v3001 = vsel %vm2937, %v2839, %v2969
      %v3002 = vsel %vm2938, %v2844, %v2970
      %v3003 = vsel %vm2939, %v2849, %v2971
      %v3004 = vsel %vm2940, %v2854, %v2972
      %v3005 = vsel %vm2941, %v2859, %v2973
      %v3006 = vsel %vm2942, %v2864, %v2974
      %v3007 = vsel %vm2943, %v2869, %v2975
      %v3008 = vsel %vm2944, %v2874, %v2976
      %v3009 = vsel %vm2945, %v2879, %v2977
      %v3010 = vsel %vm2946, %v2884, %v2978
      %v3011 = vsel %vm2947, %v2889, %v2979
      %v3012 = vsel %vm2948, %v2894, %v2980
      %v3013 = vsel %vm2949, %v2899, %v2981
      %v3014 = vsel %vm2950, %v2904, %v2982
      %v3015 = vsel %vm2951, %v2909, %v2983
      %v3016 = vsel %vm2952, %v2914, %v2984
      %v3017 = vsel %vm2953, %v2919, %v2985
      %vm3018 = vcmask 261120
      %3019 = vst.msk [vmem:[#allocation5] sm:$0xff] %vm3018, 0.0
      %3020 = vst.msk [vmem:[#allocation5 + $0x8] sm:$0xff] %vm3018, 0.0
      %vm3021 = vcmask 253952
      %3022 = vst.msk [vmem:[#allocation5 + $0x10] sm:$0x1] %vm3021, 0.0
      %3023 = vst.msk [vmem:[#allocation5 + $0x111] sm:$0xff] %vm3018, 0.0
      %3024 = vst.msk [vmem:[#allocation5 + $0x119] sm:$0xff] %vm3018, 0.0
      %3025 = vst.msk [vmem:[#allocation5 + $0x121] sm:$0x1] %vm3021, 0.0
      %3026 = vst.msk [vmem:[#allocation5 + $0x11] sm:$0xff] %vm3018, %v2986
      %3027 = vst.msk [vmem:[#allocation5 + $0x19] sm:$0xff] %vm3018, %v2987
      %3028 = vst.msk [vmem:[#allocation5 + $0x21] sm:$0xff] %vm3018, %v2988
      %3029 = vst.msk [vmem:[#allocation5 + $0x29] sm:$0xff] %vm3018, %v2989
      %3030 = vst.msk [vmem:[#allocation5 + $0x31] sm:$0xff] %vm3018, %v2990
      %3031 = vst.msk [vmem:[#allocation5 + $0x39] sm:$0xff] %vm3018, %v2991
      %3032 = vst.msk [vmem:[#allocation5 + $0x41] sm:$0xff] %vm3018, %v2992
      %3033 = vst.msk [vmem:[#allocation5 + $0x49] sm:$0xff] %vm3018, %v2993
      %3034 = vst.msk [vmem:[#allocation5 + $0x51] sm:$0xff] %vm3018, %v2994
      %3035 = vst.msk [vmem:[#allocation5 + $0x59] sm:$0xff] %vm3018, %v2995
      %3036 = vst.msk [vmem:[#allocation5 + $0x61] sm:$0xff] %vm3018, %v2996
      %3037 = vst.msk [vmem:[#allocation5 + $0x69] sm:$0xff] %vm3018, %v2997
      %3038 = vst.msk [vmem:[#allocation5 + $0x71] sm:$0xff] %vm3018, %v2998
      %3039 = vst.msk [vmem:[#allocation5 + $0x79] sm:$0xff] %vm3018, %v2999
      %3040 = vst.msk [vmem:[#allocation5 + $0x81] sm:$0xff] %vm3018, %v3000
      %3041 = vst.msk [vmem:[#allocation5 + $0x89] sm:$0xff] %vm3018, %v3001
      %3042 = vst.msk [vmem:[#allocation5 + $0x91] sm:$0xff] %vm3018, %v3002
      %3043 = vst.msk [vmem:[#allocation5 + $0x99] sm:$0xff] %vm3018, %v3003
      %3044 = vst.msk [vmem:[#allocation5 + $0xa1] sm:$0xff] %vm3018, %v3004
      %3045 = vst.msk [vmem:[#allocation5 + $0xa9] sm:$0xff] %vm3018, %v3005
      %3046 = vst.msk [vmem:[#allocation5 + $0xb1] sm:$0xff] %vm3018, %v3006
      %3047 = vst.msk [vmem:[#allocation5 + $0xb9] sm:$0xff] %vm3018, %v3007
      %3048 = vst.msk [vmem:[#allocation5 + $0xc1] sm:$0xff] %vm3018, %v3008
      %3049 = vst.msk [vmem:[#allocation5 + $0xc9] sm:$0xff] %vm3018, %v3009
      %3050 = vst.msk [vmem:[#allocation5 + $0xd1] sm:$0xff] %vm3018, %v3010
      %3051 = vst.msk [vmem:[#allocation5 + $0xd9] sm:$0xff] %vm3018, %v3011
      %3052 = vst.msk [vmem:[#allocation5 + $0xe1] sm:$0xff] %vm3018, %v3012
      %3053 = vst.msk [vmem:[#allocation5 + $0xe9] sm:$0xff] %vm3018, %v3013
      %3054 = vst.msk [vmem:[#allocation5 + $0xf1] sm:$0xff] %vm3018, %v3014
      %3055 = vst.msk [vmem:[#allocation5 + $0xf9] sm:$0xff] %vm3018, %v3015
      %3056 = vst.msk [vmem:[#allocation5 + $0x101] sm:$0xff] %vm3018, %v3016
      %3057 = vst.msk [vmem:[#allocation5 + $0x109] sm:$0xff] %vm3018, %v3017
      %v3058 = vld [vmem:[#allocation5] sm:$0xff]
      %v3059 = vld [vmem:[#allocation5 + $0x8] sm:$0xff]
      %v3060 = vld [vmem:[#allocation5 + $0x10] sm:$0xff]
      %v3061 = vld [vmem:[#allocation5 + $0x18] sm:$0xff]
      %v3062 = vld [vmem:[#allocation5 + $0x20] sm:$0xff]
      %v3063 = vld [vmem:[#allocation5 + $0x28] sm:$0xff]
      %v3064 = vld [vmem:[#allocation5 + $0x30] sm:$0xff]
      %v3065 = vld [vmem:[#allocation5 + $0x38] sm:$0xff]
      %v3066 = vld [vmem:[#allocation5 + $0x40] sm:$0xff]
      %v3067 = vld [vmem:[#allocation5 + $0x48] sm:$0xff]
      %v3068 = vld [vmem:[#allocation5 + $0x50] sm:$0xff]
      %v3069 = vld [vmem:[#allocation5 + $0x58] sm:$0xff]
      %v3070 = vld [vmem:[#allocation5 + $0x60] sm:$0xff]
      %v3071 = vld [vmem:[#allocation5 + $0x68] sm:$0xff]
      %v3072 = vld [vmem:[#allocation5 + $0x70] sm:$0xff]
      %v3073 = vld [vmem:[#allocation5 + $0x78] sm:$0xff]
      %v3074 = vld [vmem:[#allocation5 + $0x80] sm:$0xff]
      %v3075 = vld [vmem:[#allocation5 + $0x88] sm:$0xff]
      %v3076 = vld [vmem:[#allocation5 + $0x90] sm:$0xff]
      %v3077 = vld [vmem:[#allocation5 + $0x98] sm:$0xff]
      %v3078 = vld [vmem:[#allocation5 + $0xa0] sm:$0xff]
      %v3079 = vld [vmem:[#allocation5 + $0xa8] sm:$0xff]
      %v3080 = vld [vmem:[#allocation5 + $0xb0] sm:$0xff]
      %v3081 = vld [vmem:[#allocation5 + $0xb8] sm:$0xff]
      %v3082 = vld [vmem:[#allocation5 + $0xc0] sm:$0xff]
      %v3083 = vld [vmem:[#allocation5 + $0xc8] sm:$0xff]
      %v3084 = vld [vmem:[#allocation5 + $0xd0] sm:$0xff]
      %v3085 = vld [vmem:[#allocation5 + $0xd8] sm:$0xff]
      %v3086 = vld [vmem:[#allocation5 + $0xe0] sm:$0xff]
      %v3087 = vld [vmem:[#allocation5 + $0xe8] sm:$0xff]
      %v3088 = vld [vmem:[#allocation5 + $0xf0] sm:$0xff]
      %v3089 = vld [vmem:[#allocation5 + $0xf8] sm:$0xff]
      %v3090 = vsel %vm722, %v3058, 0.0
      %v3091 = vsel %vm723, %v3059, 0.0
      %v3092 = vsel %vm724, %v3060, 0.0
      %v3093 = vsel %vm725, %v3061, 0.0
      %v3094 = vsel %vm726, %v3062, 0.0
      %v3095 = vsel %vm727, %v3063, 0.0
      %v3096 = vsel %vm728, %v3064, 0.0
      %v3097 = vsel %vm729, %v3065, 0.0
      %v3098 = vsel %vm730, %v3066, 0.0
      %v3099 = vsel %vm731, %v3067, 0.0
      %v3100 = vsel %vm732, %v3068, 0.0
      %v3101 = vsel %vm733, %v3069, 0.0
      %v3102 = vsel %vm734, %v3070, 0.0
      %v3103 = vsel %vm735, %v3071, 0.0
      %v3104 = vsel %vm736, %v3072, 0.0
      %v3105 = vsel %vm737, %v3073, 0.0
      %v3106 = vsel %vm738, %v3074, 0.0
      %v3107 = vsel %vm739, %v3075, 0.0
      %v3108 = vsel %vm740, %v3076, 0.0
      %v3109 = vsel %vm741, %v3077, 0.0
      %v3110 = vsel %vm742, %v3078, 0.0
      %v3111 = vsel %vm743, %v3079, 0.0
      %v3112 = vsel %vm744, %v3080, 0.0
      %v3113 = vsel %vm745, %v3081, 0.0
      %v3114 = vsel %vm746, %v3082, 0.0
      %v3115 = vsel %vm747, %v3083, 0.0
      %v3116 = vsel %vm748, %v3084, 0.0
      %v3117 = vsel %vm749, %v3085, 0.0
      %v3118 = vsel %vm750, %v3086, 0.0
      %v3119 = vsel %vm751, %v3087, 0.0
      %v3120 = vsel %vm752, %v3088, 0.0
      %v3121 = vsel %vm753, %v3089, 0.0
      %3122 = vst.msk [vmem:[#allocation4] sm:$0xff] %vm3018, %v3090
      %3123 = vst.msk [vmem:[#allocation4 + $0x18] sm:$0xff] %vm3018, %v3091
      %3124 = vst.msk [vmem:[#allocation4 + $0x30] sm:$0xff] %vm3018, %v3092
      %3125 = vst.msk [vmem:[#allocation4 + $0x48] sm:$0xff] %vm3018, %v3093
      %3126 = vst.msk [vmem:[#allocation4 + $0x60] sm:$0xff] %vm3018, %v3094
      %3127 = vst.msk [vmem:[#allocation4 + $0x78] sm:$0xff] %vm3018, %v3095
      %3128 = vst.msk [vmem:[#allocation4 + $0x90] sm:$0xff] %vm3018, %v3096
      %3129 = vst.msk [vmem:[#allocation4 + $0xa8] sm:$0xff] %vm3018, %v3097
      %3130 = vst.msk [vmem:[#allocation4 + $0xc0] sm:$0xff] %vm3018, %v3098
      %3131 = vst.msk [vmem:[#allocation4 + $0xd8] sm:$0xff] %vm3018, %v3099
      %3132 = vst.msk [vmem:[#allocation4 + $0xf0] sm:$0xff] %vm3018, %v3100
      %3133 = vst.msk [vmem:[#allocation4 + $0x108] sm:$0xff] %vm3018, %v3101
      %3134 = vst.msk [vmem:[#allocation4 + $0x120] sm:$0xff] %vm3018, %v3102
      %3135 = vst.msk [vmem:[#allocation4 + $0x138] sm:$0xff] %vm3018, %v3103
      %3136 = vst.msk [vmem:[#allocation4 + $0x150] sm:$0xff] %vm3018, %v3104
      %3137 = vst.msk [vmem:[#allocation4 + $0x168] sm:$0xff] %vm3018, %v3105
      %3138 = vst.msk [vmem:[#allocation4 + $0x180] sm:$0xff] %vm3018, %v3106
      %3139 = vst.msk [vmem:[#allocation4 + $0x198] sm:$0xff] %vm3018, %v3107
      %3140 = vst.msk [vmem:[#allocation4 + $0x1b0] sm:$0xff] %vm3018, %v3108
      %3141 = vst.msk [vmem:[#allocation4 + $0x1c8] sm:$0xff] %vm3018, %v3109
      %3142 = vst.msk [vmem:[#allocation4 + $0x1e0] sm:$0xff] %vm3018, %v3110
      %3143 = vst.msk [vmem:[#allocation4 + $0x1f8] sm:$0xff] %vm3018, %v3111
      %3144 = vst.msk [vmem:[#allocation4 + $0x210] sm:$0xff] %vm3018, %v3112
      %3145 = vst.msk [vmem:[#allocation4 + $0x228] sm:$0xff] %vm3018, %v3113
      %3146 = vst.msk [vmem:[#allocation4 + $0x240] sm:$0xff] %vm3018, %v3114
      %3147 = vst.msk [vmem:[#allocation4 + $0x258] sm:$0xff] %vm3018, %v3115
      %3148 = vst.msk [vmem:[#allocation4 + $0x270] sm:$0xff] %vm3018, %v3116
      %3149 = vst.msk [vmem:[#allocation4 + $0x288] sm:$0xff] %vm3018, %v3117
      %3150 = vst.msk [vmem:[#allocation4 + $0x2a0] sm:$0xff] %vm3018, %v3118
      %3151 = vst.msk [vmem:[#allocation4 + $0x2b8] sm:$0xff] %vm3018, %v3119
      %3152 = vst.msk [vmem:[#allocation4 + $0x2d0] sm:$0xff] %vm3018, %v3120
      %3153 = vst.msk [vmem:[#allocation4 + $0x2e8] sm:$0xff] %vm3018, %v3121
      %v3154 = vld [vmem:[#allocation5 + $0x1] sm:$0xff]
      %v3155 = vld [vmem:[#allocation5 + $0x9] sm:$0xff]
      %v3156 = vld [vmem:[#allocation5 + $0x11] sm:$0xff]
      %v3157 = vld [vmem:[#allocation5 + $0x19] sm:$0xff]
      %v3158 = vld [vmem:[#allocation5 + $0x21] sm:$0xff]
      %v3159 = vld [vmem:[#allocation5 + $0x29] sm:$0xff]
      %v3160 = vld [vmem:[#allocation5 + $0x31] sm:$0xff]
      %v3161 = vld [vmem:[#allocation5 + $0x39] sm:$0xff]
      %v3162 = vld [vmem:[#allocation5 + $0x41] sm:$0xff]
      %v3163 = vld [vmem:[#allocation5 + $0x49] sm:$0xff]
      %v3164 = vld [vmem:[#allocation5 + $0x51] sm:$0xff]
      %v3165 = vld [vmem:[#allocation5 + $0x59] sm:$0xff]
      %v3166 = vld [vmem:[#allocation5 + $0x61] sm:$0xff]
      %v3167 = vld [vmem:[#allocation5 + $0x69] sm:$0xff]
      %v3168 = vld [vmem:[#allocation5 + $0x71] sm:$0xff]
      %v3169 = vld [vmem:[#allocation5 + $0x79] sm:$0xff]
      %v3170 = vld [vmem:[#allocation5 + $0x81] sm:$0xff]
      %v3171 = vld [vmem:[#allocation5 + $0x89] sm:$0xff]
      %v3172 = vld [vmem:[#allocation5 + $0x91] sm:$0xff]
      %v3173 = vld [vmem:[#allocation5 + $0x99] sm:$0xff]
      %v3174 = vld [vmem:[#allocation5 + $0xa1] sm:$0xff]
      %v3175 = vld [vmem:[#allocation5 + $0xa9] sm:$0xff]
      %v3176 = vld [vmem:[#allocation5 + $0xb1] sm:$0xff]
      %v3177 = vld [vmem:[#allocation5 + $0xb9] sm:$0xff]
      %v3178 = vld [vmem:[#allocation5 + $0xc1] sm:$0xff]
      %v3179 = vld [vmem:[#allocation5 + $0xc9] sm:$0xff]
      %v3180 = vld [vmem:[#allocation5 + $0xd1] sm:$0xff]
      %v3181 = vld [vmem:[#allocation5 + $0xd9] sm:$0xff]
      %v3182 = vld [vmem:[#allocation5 + $0xe1] sm:$0xff]
      %v3183 = vld [vmem:[#allocation5 + $0xe9] sm:$0xff]
      %v3184 = vld [vmem:[#allocation5 + $0xf1] sm:$0xff]
      %v3185 = vld [vmem:[#allocation5 + $0xf9] sm:$0xff]
      %3218 = vrot.lane.b32.xlu0 %v3154, 32
      %v3219 = vpop.permute.xlu0 %3218
      %3220 = vrot.lane.b32.xlu0 %v3155, 32
      %v3221 = vpop.permute.xlu0 %3220
      %3222 = vrot.lane.b32.xlu0 %v3156, 32
      %v3223 = vpop.permute.xlu0 %3222
      %3224 = vrot.lane.b32.xlu0 %v3157, 32
      %v3225 = vpop.permute.xlu0 %3224
      %3226 = vrot.lane.b32.xlu0 %v3158, 32
      %v3227 = vpop.permute.xlu0 %3226
      %3228 = vrot.lane.b32.xlu0 %v3159, 32
      %v3229 = vpop.permute.xlu0 %3228
      %3230 = vrot.lane.b32.xlu0 %v3160, 32
      %v3231 = vpop.permute.xlu0 %3230
      %3232 = vrot.lane.b32.xlu0 %v3161, 32
      %v3233 = vpop.permute.xlu0 %3232
      %3234 = vrot.lane.b32.xlu0 %v3162, 32
      %v3235 = vpop.permute.xlu0 %3234
      %3236 = vrot.lane.b32.xlu0 %v3163, 32
      %v3237 = vpop.permute.xlu0 %3236
      %3238 = vrot.lane.b32.xlu0 %v3164, 32
      %v3239 = vpop.permute.xlu0 %3238
      %3240 = vrot.lane.b32.xlu0 %v3165, 32
      %v3241 = vpop.permute.xlu0 %3240
      %3242 = vrot.lane.b32.xlu0 %v3166, 32
      %v3243 = vpop.permute.xlu0 %3242
      %3244 = vrot.lane.b32.xlu0 %v3167, 32
      %v3245 = vpop.permute.xlu0 %3244
      %3246 = vrot.lane.b32.xlu0 %v3168, 32
      %v3247 = vpop.permute.xlu0 %3246
      %3248 = vrot.lane.b32.xlu0 %v3169, 32
      %v3249 = vpop.permute.xlu0 %3248
      %3250 = vrot.lane.b32.xlu0 %v3170, 32
      %v3251 = vpop.permute.xlu0 %3250
      %3252 = vrot.lane.b32.xlu0 %v3171, 32
      %v3253 = vpop.permute.xlu0 %3252
      %3254 = vrot.lane.b32.xlu0 %v3172, 32
      %v3255 = vpop.permute.xlu0 %3254
      %3256 = vrot.lane.b32.xlu0 %v3173, 32
      %v3257 = vpop.permute.xlu0 %3256
      %3258 = vrot.lane.b32.xlu0 %v3174, 32
      %v3259 = vpop.permute.xlu0 %3258
      %3260 = vrot.lane.b32.xlu0 %v3175, 32
      %v3261 = vpop.permute.xlu0 %3260
      %3262 = vrot.lane.b32.xlu0 %v3176, 32
      %v3263 = vpop.permute.xlu0 %3262
      %3264 = vrot.lane.b32.xlu0 %v3177, 32
      %v3265 = vpop.permute.xlu0 %3264
      %3266 = vrot.lane.b32.xlu0 %v3178, 32
      %v3267 = vpop.permute.xlu0 %3266
      %3268 = vrot.lane.b32.xlu0 %v3179, 32
      %v3269 = vpop.permute.xlu0 %3268
      %3270 = vrot.lane.b32.xlu0 %v3180, 32
      %v3271 = vpop.permute.xlu0 %3270
      %3272 = vrot.lane.b32.xlu0 %v3181, 32
      %v3273 = vpop.permute.xlu0 %3272
      %3274 = vrot.lane.b32.xlu0 %v3182, 32
      %v3275 = vpop.permute.xlu0 %3274
      %3276 = vrot.lane.b32.xlu0 %v3183, 32
      %v3277 = vpop.permute.xlu0 %3276
      %3278 = vrot.lane.b32.xlu0 %v3184, 32
      %v3279 = vpop.permute.xlu0 %3278
      %3280 = vrot.lane.b32.xlu0 %v3185, 32
      %v3281 = vpop.permute.xlu0 %3280
      %vm3314 = vcmask 523520
      %3315 = vst.msk [vmem:[#allocation4] sm:$0xff] %vm3314, %v3219
      %3316 = vst.msk [vmem:[#allocation4 + $0x18] sm:$0xff] %vm3314, %v3221
      %3317 = vst.msk [vmem:[#allocation4 + $0x30] sm:$0xff] %vm3314, %v3223
      %3318 = vst.msk [vmem:[#allocation4 + $0x48] sm:$0xff] %vm3314, %v3225
      %3319 = vst.msk [vmem:[#allocation4 + $0x60] sm:$0xff] %vm3314, %v3227
      %3320 = vst.msk [vmem:[#allocation4 + $0x78] sm:$0xff] %vm3314, %v3229
      %3321 = vst.msk [vmem:[#allocation4 + $0x90] sm:$0xff] %vm3314, %v3231
      %3322 = vst.msk [vmem:[#allocation4 + $0xa8] sm:$0xff] %vm3314, %v3233
      %3323 = vst.msk [vmem:[#allocation4 + $0xc0] sm:$0xff] %vm3314, %v3235
      %3324 = vst.msk [vmem:[#allocation4 + $0xd8] sm:$0xff] %vm3314, %v3237
      %3325 = vst.msk [vmem:[#allocation4 + $0xf0] sm:$0xff] %vm3314, %v3239
      %3326 = vst.msk [vmem:[#allocation4 + $0x108] sm:$0xff] %vm3314, %v3241
      %3327 = vst.msk [vmem:[#allocation4 + $0x120] sm:$0xff] %vm3314, %v3243
      %3328 = vst.msk [vmem:[#allocation4 + $0x138] sm:$0xff] %vm3314, %v3245
      %3329 = vst.msk [vmem:[#allocation4 + $0x150] sm:$0xff] %vm3314, %v3247
      %3330 = vst.msk [vmem:[#allocation4 + $0x168] sm:$0xff] %vm3314, %v3249
      %3331 = vst.msk [vmem:[#allocation4 + $0x180] sm:$0xff] %vm3314, %v3251
      %3332 = vst.msk [vmem:[#allocation4 + $0x198] sm:$0xff] %vm3314, %v3253
      %3333 = vst.msk [vmem:[#allocation4 + $0x1b0] sm:$0xff] %vm3314, %v3255
      %3334 = vst.msk [vmem:[#allocation4 + $0x1c8] sm:$0xff] %vm3314, %v3257
      %3335 = vst.msk [vmem:[#allocation4 + $0x1e0] sm:$0xff] %vm3314, %v3259
      %3336 = vst.msk [vmem:[#allocation4 + $0x1f8] sm:$0xff] %vm3314, %v3261
      %3337 = vst.msk [vmem:[#allocation4 + $0x210] sm:$0xff] %vm3314, %v3263
      %3338 = vst.msk [vmem:[#allocation4 + $0x228] sm:$0xff] %vm3314, %v3265
      %3339 = vst.msk [vmem:[#allocation4 + $0x240] sm:$0xff] %vm3314, %v3267
      %3340 = vst.msk [vmem:[#allocation4 + $0x258] sm:$0xff] %vm3314, %v3269
      %3341 = vst.msk [vmem:[#allocation4 + $0x270] sm:$0xff] %vm3314, %v3271
      %3342 = vst.msk [vmem:[#allocation4 + $0x288] sm:$0xff] %vm3314, %v3273
      %3343 = vst.msk [vmem:[#allocation4 + $0x2a0] sm:$0xff] %vm3314, %v3275
      %3344 = vst.msk [vmem:[#allocation4 + $0x2b8] sm:$0xff] %vm3314, %v3277
      %3345 = vst.msk [vmem:[#allocation4 + $0x2d0] sm:$0xff] %vm3314, %v3279
      %3346 = vst.msk [vmem:[#allocation4 + $0x2e8] sm:$0xff] %vm3314, %v3281
      %v3347 = vld [vmem:[#allocation5 + $0x2] sm:$0xff]
      %v3348 = vld [vmem:[#allocation5 + $0xa] sm:$0xff]
      %v3349 = vld [vmem:[#allocation5 + $0x12] sm:$0xff]
      %v3350 = vld [vmem:[#allocation5 + $0x1a] sm:$0xff]
      %v3351 = vld [vmem:[#allocation5 + $0x22] sm:$0xff]
      %v3352 = vld [vmem:[#allocation5 + $0x2a] sm:$0xff]
      %v3353 = vld [vmem:[#allocation5 + $0x32] sm:$0xff]
      %v3354 = vld [vmem:[#allocation5 + $0x3a] sm:$0xff]
      %v3355 = vld [vmem:[#allocation5 + $0x42] sm:$0xff]
      %v3356 = vld [vmem:[#allocation5 + $0x4a] sm:$0xff]
      %v3357 = vld [vmem:[#allocation5 + $0x52] sm:$0xff]
      %v3358 = vld [vmem:[#allocation5 + $0x5a] sm:$0xff]
      %v3359 = vld [vmem:[#allocation5 + $0x62] sm:$0xff]
      %v3360 = vld [vmem:[#allocation5 + $0x6a] sm:$0xff]
      %v3361 = vld [vmem:[#allocation5 + $0x72] sm:$0xff]
      %v3362 = vld [vmem:[#allocation5 + $0x7a] sm:$0xff]
      %v3363 = vld [vmem:[#allocation5 + $0x82] sm:$0xff]
      %v3364 = vld [vmem:[#allocation5 + $0x8a] sm:$0xff]
      %v3365 = vld [vmem:[#allocation5 + $0x92] sm:$0xff]
      %v3366 = vld [vmem:[#allocation5 + $0x9a] sm:$0xff]
      %v3367 = vld [vmem:[#allocation5 + $0xa2] sm:$0xff]
      %v3368 = vld [vmem:[#allocation5 + $0xaa] sm:$0xff]
      %v3369 = vld [vmem:[#allocation5 + $0xb2] sm:$0xff]
      %v3370 = vld [vmem:[#allocation5 + $0xba] sm:$0xff]
      %v3371 = vld [vmem:[#allocation5 + $0xc2] sm:$0xff]
      %v3372 = vld [vmem:[#allocation5 + $0xca] sm:$0xff]
      %v3373 = vld [vmem:[#allocation5 + $0xd2] sm:$0xff]
      %v3374 = vld [vmem:[#allocation5 + $0xda] sm:$0xff]
      %v3375 = vld [vmem:[#allocation5 + $0xe2] sm:$0xff]
      %v3376 = vld [vmem:[#allocation5 + $0xea] sm:$0xff]
      %v3377 = vld [vmem:[#allocation5 + $0xf2] sm:$0xff]
      %v3378 = vld [vmem:[#allocation5 + $0xfa] sm:$0xff]
      %v3379 = vsel %vm1043, %v3347, 0.0
      %v3380 = vsel %vm1044, %v3348, 0.0
      %v3381 = vsel %vm1045, %v3349, 0.0
      %v3382 = vsel %vm1046, %v3350, 0.0
      %v3383 = vsel %vm1047, %v3351, 0.0
      %v3384 = vsel %vm1048, %v3352, 0.0
      %v3385 = vsel %vm1049, %v3353, 0.0
      %v3386 = vsel %vm1050, %v3354, 0.0
      %v3387 = vsel %vm1051, %v3355, 0.0
      %v3388 = vsel %vm1052, %v3356, 0.0
      %v3389 = vsel %vm1053, %v3357, 0.0
      %v3390 = vsel %vm1054, %v3358, 0.0
      %v3391 = vsel %vm1055, %v3359, 0.0
      %v3392 = vsel %vm1056, %v3360, 0.0
      %v3393 = vsel %vm1057, %v3361, 0.0
      %v3394 = vsel %vm1058, %v3362, 0.0
      %v3395 = vsel %vm1059, %v3363, 0.0
      %v3396 = vsel %vm1060, %v3364, 0.0
      %v3397 = vsel %vm1061, %v3365, 0.0
      %v3398 = vsel %vm1062, %v3366, 0.0
      %v3399 = vsel %vm1063, %v3367, 0.0
      %v3400 = vsel %vm1064, %v3368, 0.0
      %v3401 = vsel %vm1065, %v3369, 0.0
      %v3402 = vsel %vm1066, %v3370, 0.0
      %v3403 = vsel %vm1067, %v3371, 0.0
      %v3404 = vsel %vm1068, %v3372, 0.0
      %v3405 = vsel %vm1069, %v3373, 0.0
      %v3406 = vsel %vm1070, %v3374, 0.0
      %v3407 = vsel %vm1071, %v3375, 0.0
      %v3408 = vsel %vm1072, %v3376, 0.0
      %v3409 = vsel %vm1073, %v3377, 0.0
      %v3410 = vsel %vm1074, %v3378, 0.0
      %3443 = vrot.lane.b32.xlu0 %v3379, 64
      %v3444 = vpop.permute.xlu0 %3443
      %3445 = vrot.lane.b32.xlu0 %v3380, 64
      %v3446 = vpop.permute.xlu0 %3445
      %3447 = vrot.lane.b32.xlu0 %v3381, 64
      %v3448 = vpop.permute.xlu0 %3447
      %3449 = vrot.lane.b32.xlu0 %v3382, 64
      %v3450 = vpop.permute.xlu0 %3449
      %3451 = vrot.lane.b32.xlu0 %v3383, 64
      %v3452 = vpop.permute.xlu0 %3451
      %3453 = vrot.lane.b32.xlu0 %v3384, 64
      %v3454 = vpop.permute.xlu0 %3453
      %3455 = vrot.lane.b32.xlu0 %v3385, 64
      %v3456 = vpop.permute.xlu0 %3455
      %3457 = vrot.lane.b32.xlu0 %v3386, 64
      %v3458 = vpop.permute.xlu0 %3457
      %3459 = vrot.lane.b32.xlu0 %v3387, 64
      %v3460 = vpop.permute.xlu0 %3459
      %3461 = vrot.lane.b32.xlu0 %v3388, 64
      %v3462 = vpop.permute.xlu0 %3461
      %3463 = vrot.lane.b32.xlu0 %v3389, 64
      %v3464 = vpop.permute.xlu0 %3463
      %3465 = vrot.lane.b32.xlu0 %v3390, 64
      %v3466 = vpop.permute.xlu0 %3465
      %3467 = vrot.lane.b32.xlu0 %v3391, 64
      %v3468 = vpop.permute.xlu0 %3467
      %3469 = vrot.lane.b32.xlu0 %v3392, 64
      %v3470 = vpop.permute.xlu0 %3469
      %3471 = vrot.lane.b32.xlu0 %v3393, 64
      %v3472 = vpop.permute.xlu0 %3471
      %3473 = vrot.lane.b32.xlu0 %v3394, 64
      %v3474 = vpop.permute.xlu0 %3473
      %3475 = vrot.lane.b32.xlu0 %v3395, 64
      %v3476 = vpop.permute.xlu0 %3475
      %3477 = vrot.lane.b32.xlu0 %v3396, 64
      %v3478 = vpop.permute.xlu0 %3477
      %3479 = vrot.lane.b32.xlu0 %v3397, 64
      %v3480 = vpop.permute.xlu0 %3479
      %3481 = vrot.lane.b32.xlu0 %v3398, 64
      %v3482 = vpop.permute.xlu0 %3481
      %3483 = vrot.lane.b32.xlu0 %v3399, 64
      %v3484 = vpop.permute.xlu0 %3483
      %3485 = vrot.lane.b32.xlu0 %v3400, 64
      %v3486 = vpop.permute.xlu0 %3485
      %3487 = vrot.lane.b32.xlu0 %v3401, 64
      %v3488 = vpop.permute.xlu0 %3487
      %3489 = vrot.lane.b32.xlu0 %v3402, 64
      %v3490 = vpop.permute.xlu0 %3489
      %3491 = vrot.lane.b32.xlu0 %v3403, 64
      %v3492 = vpop.permute.xlu0 %3491
      %3493 = vrot.lane.b32.xlu0 %v3404, 64
      %v3494 = vpop.permute.xlu0 %3493
      %3495 = vrot.lane.b32.xlu0 %v3405, 64
      %v3496 = vpop.permute.xlu0 %3495
      %3497 = vrot.lane.b32.xlu0 %v3406, 64
      %v3498 = vpop.permute.xlu0 %3497
      %3499 = vrot.lane.b32.xlu0 %v3407, 64
      %v3500 = vpop.permute.xlu0 %3499
      %3501 = vrot.lane.b32.xlu0 %v3408, 64
      %v3502 = vpop.permute.xlu0 %3501
      %3503 = vrot.lane.b32.xlu0 %v3409, 64
      %v3504 = vpop.permute.xlu0 %3503
      %3505 = vrot.lane.b32.xlu0 %v3410, 64
      %v3506 = vpop.permute.xlu0 %3505
      %vm3539 = vcmask 785920
      %3540 = vst.msk [vmem:[#allocation4] sm:$0xff] %vm3539, %v3444
      %3541 = vst.msk [vmem:[#allocation4 + $0x18] sm:$0xff] %vm3539, %v3446
      %3542 = vst.msk [vmem:[#allocation4 + $0x30] sm:$0xff] %vm3539, %v3448
      %3543 = vst.msk [vmem:[#allocation4 + $0x48] sm:$0xff] %vm3539, %v3450
      %3544 = vst.msk [vmem:[#allocation4 + $0x60] sm:$0xff] %vm3539, %v3452
      %3545 = vst.msk [vmem:[#allocation4 + $0x78] sm:$0xff] %vm3539, %v3454
      %3546 = vst.msk [vmem:[#allocation4 + $0x90] sm:$0xff] %vm3539, %v3456
      %3547 = vst.msk [vmem:[#allocation4 + $0xa8] sm:$0xff] %vm3539, %v3458
      %3548 = vst.msk [vmem:[#allocation4 + $0xc0] sm:$0xff] %vm3539, %v3460
      %3549 = vst.msk [vmem:[#allocation4 + $0xd8] sm:$0xff] %vm3539, %v3462
      %3550 = vst.msk [vmem:[#allocation4 + $0xf0] sm:$0xff] %vm3539, %v3464
      %3551 = vst.msk [vmem:[#allocation4 + $0x108] sm:$0xff] %vm3539, %v3466
      %3552 = vst.msk [vmem:[#allocation4 + $0x120] sm:$0xff] %vm3539, %v3468
      %3553 = vst.msk [vmem:[#allocation4 + $0x138] sm:$0xff] %vm3539, %v3470
      %3554 = vst.msk [vmem:[#allocation4 + $0x150] sm:$0xff] %vm3539, %v3472
      %3555 = vst.msk [vmem:[#allocation4 + $0x168] sm:$0xff] %vm3539, %v3474
      %3556 = vst.msk [vmem:[#allocation4 + $0x180] sm:$0xff] %vm3539, %v3476
      %3557 = vst.msk [vmem:[#allocation4 + $0x198] sm:$0xff] %vm3539, %v3478
      %3558 = vst.msk [vmem:[#allocation4 + $0x1b0] sm:$0xff] %vm3539, %v3480
      %3559 = vst.msk [vmem:[#allocation4 + $0x1c8] sm:$0xff] %vm3539, %v3482
      %3560 = vst.msk [vmem:[#allocation4 + $0x1e0] sm:$0xff] %vm3539, %v3484
      %3561 = vst.msk [vmem:[#allocation4 + $0x1f8] sm:$0xff] %vm3539, %v3486
      %3562 = vst.msk [vmem:[#allocation4 + $0x210] sm:$0xff] %vm3539, %v3488
      %3563 = vst.msk [vmem:[#allocation4 + $0x228] sm:$0xff] %vm3539, %v3490
      %3564 = vst.msk [vmem:[#allocation4 + $0x240] sm:$0xff] %vm3539, %v3492
      %3565 = vst.msk [vmem:[#allocation4 + $0x258] sm:$0xff] %vm3539, %v3494
      %3566 = vst.msk [vmem:[#allocation4 + $0x270] sm:$0xff] %vm3539, %v3496
      %3567 = vst.msk [vmem:[#allocation4 + $0x288] sm:$0xff] %vm3539, %v3498
      %3568 = vst.msk [vmem:[#allocation4 + $0x2a0] sm:$0xff] %vm3539, %v3500
      %3569 = vst.msk [vmem:[#allocation4 + $0x2b8] sm:$0xff] %vm3539, %v3502
      %3570 = vst.msk [vmem:[#allocation4 + $0x2d0] sm:$0xff] %vm3539, %v3504
      %3571 = vst.msk [vmem:[#allocation4 + $0x2e8] sm:$0xff] %vm3539, %v3506
      %v3572 = vld [vmem:[#allocation5 + $0x10] sm:$0xff]
      %v3573 = vld [vmem:[#allocation5 + $0x18] sm:$0xff]
      %v3574 = vld [vmem:[#allocation5 + $0x20] sm:$0xff]
      %v3575 = vld [vmem:[#allocation5 + $0x28] sm:$0xff]
      %v3576 = vld [vmem:[#allocation5 + $0x30] sm:$0xff]
      %v3577 = vld [vmem:[#allocation5 + $0x38] sm:$0xff]
      %v3578 = vld [vmem:[#allocation5 + $0x40] sm:$0xff]
      %v3579 = vld [vmem:[#allocation5 + $0x48] sm:$0xff]
      %v3580 = vld [vmem:[#allocation5 + $0x50] sm:$0xff]
      %v3581 = vld [vmem:[#allocation5 + $0x58] sm:$0xff]
      %v3582 = vld [vmem:[#allocation5 + $0x60] sm:$0xff]
      %v3583 = vld [vmem:[#allocation5 + $0x68] sm:$0xff]
      %v3584 = vld [vmem:[#allocation5 + $0x70] sm:$0xff]
      %v3585 = vld [vmem:[#allocation5 + $0x78] sm:$0xff]
      %v3586 = vld [vmem:[#allocation5 + $0x80] sm:$0xff]
      %v3587 = vld [vmem:[#allocation5 + $0x88] sm:$0xff]
      %v3588 = vld [vmem:[#allocation5 + $0x90] sm:$0xff]
      %v3589 = vld [vmem:[#allocation5 + $0x98] sm:$0xff]
      %v3590 = vld [vmem:[#allocation5 + $0xa0] sm:$0xff]
      %v3591 = vld [vmem:[#allocation5 + $0xa8] sm:$0xff]
      %v3592 = vld [vmem:[#allocation5 + $0xb0] sm:$0xff]
      %v3593 = vld [vmem:[#allocation5 + $0xb8] sm:$0xff]
      %v3594 = vld [vmem:[#allocation5 + $0xc0] sm:$0xff]
      %v3595 = vld [vmem:[#allocation5 + $0xc8] sm:$0xff]
      %v3596 = vld [vmem:[#allocation5 + $0xd0] sm:$0xff]
      %v3597 = vld [vmem:[#allocation5 + $0xd8] sm:$0xff]
      %v3598 = vld [vmem:[#allocation5 + $0xe0] sm:$0xff]
      %v3599 = vld [vmem:[#allocation5 + $0xe8] sm:$0xff]
      %v3600 = vld [vmem:[#allocation5 + $0xf0] sm:$0xff]
      %v3601 = vld [vmem:[#allocation5 + $0xf8] sm:$0xff]
      %v3602 = vld [vmem:[#allocation5 + $0x100] sm:$0xff]
      %v3603 = vld [vmem:[#allocation5 + $0x108] sm:$0xff]
      %v3604 = vsel %vm722, %v3572, 0.0
      %v3605 = vsel %vm723, %v3573, 0.0
      %v3606 = vsel %vm724, %v3574, 0.0
      %v3607 = vsel %vm725, %v3575, 0.0
      %v3608 = vsel %vm726, %v3576, 0.0
      %v3609 = vsel %vm727, %v3577, 0.0
      %v3610 = vsel %vm728, %v3578, 0.0
      %v3611 = vsel %vm729, %v3579, 0.0
      %v3612 = vsel %vm730, %v3580, 0.0
      %v3613 = vsel %vm731, %v3581, 0.0
      %v3614 = vsel %vm732, %v3582, 0.0
      %v3615 = vsel %vm733, %v3583, 0.0
      %v3616 = vsel %vm734, %v3584, 0.0
      %v3617 = vsel %vm735, %v3585, 0.0
      %v3618 = vsel %vm736, %v3586, 0.0
      %v3619 = vsel %vm737, %v3587, 0.0
      %v3620 = vsel %vm738, %v3588, 0.0
      %v3621 = vsel %vm739, %v3589, 0.0
      %v3622 = vsel %vm740, %v3590, 0.0
      %v3623 = vsel %vm741, %v3591, 0.0
      %v3624 = vsel %vm742, %v3592, 0.0
      %v3625 = vsel %vm743, %v3593, 0.0
      %v3626 = vsel %vm744, %v3594, 0.0
      %v3627 = vsel %vm745, %v3595, 0.0
      %v3628 = vsel %vm746, %v3596, 0.0
      %v3629 = vsel %vm747, %v3597, 0.0
      %v3630 = vsel %vm748, %v3598, 0.0
      %v3631 = vsel %vm749, %v3599, 0.0
      %v3632 = vsel %vm750, %v3600, 0.0
      %v3633 = vsel %vm751, %v3601, 0.0
      %v3634 = vsel %vm752, %v3602, 0.0
      %v3635 = vsel %vm753, %v3603, 0.0
      %3668 = vrot.lane.b32.xlu0 %v3604, 96
      %v3669 = vpop.permute.xlu0 %3668
      %3670 = vrot.lane.b32.xlu0 %v3605, 96
      %v3671 = vpop.permute.xlu0 %3670
      %3672 = vrot.lane.b32.xlu0 %v3606, 96
      %v3673 = vpop.permute.xlu0 %3672
      %3674 = vrot.lane.b32.xlu0 %v3607, 96
      %v3675 = vpop.permute.xlu0 %3674
      %3676 = vrot.lane.b32.xlu0 %v3608, 96
      %v3677 = vpop.permute.xlu0 %3676
      %3678 = vrot.lane.b32.xlu0 %v3609, 96
      %v3679 = vpop.permute.xlu0 %3678
      %3680 = vrot.lane.b32.xlu0 %v3610, 96
      %v3681 = vpop.permute.xlu0 %3680
      %3682 = vrot.lane.b32.xlu0 %v3611, 96
      %v3683 = vpop.permute.xlu0 %3682
      %3684 = vrot.lane.b32.xlu0 %v3612, 96
      %v3685 = vpop.permute.xlu0 %3684
      %3686 = vrot.lane.b32.xlu0 %v3613, 96
      %v3687 = vpop.permute.xlu0 %3686
      %3688 = vrot.lane.b32.xlu0 %v3614, 96
      %v3689 = vpop.permute.xlu0 %3688
      %3690 = vrot.lane.b32.xlu0 %v3615, 96
      %v3691 = vpop.permute.xlu0 %3690
      %3692 = vrot.lane.b32.xlu0 %v3616, 96
      %v3693 = vpop.permute.xlu0 %3692
      %3694 = vrot.lane.b32.xlu0 %v3617, 96
      %v3695 = vpop.permute.xlu0 %3694
      %3696 = vrot.lane.b32.xlu0 %v3618, 96
      %v3697 = vpop.permute.xlu0 %3696
      %3698 = vrot.lane.b32.xlu0 %v3619, 96
      %v3699 = vpop.permute.xlu0 %3698
      %3700 = vrot.lane.b32.xlu0 %v3620, 96
      %v3701 = vpop.permute.xlu0 %3700
      %3702 = vrot.lane.b32.xlu0 %v3621, 96
      %v3703 = vpop.permute.xlu0 %3702
      %3704 = vrot.lane.b32.xlu0 %v3622, 96
      %v3705 = vpop.permute.xlu0 %3704
      %3706 = vrot.lane.b32.xlu0 %v3623, 96
      %v3707 = vpop.permute.xlu0 %3706
      %3708 = vrot.lane.b32.xlu0 %v3624, 96
      %v3709 = vpop.permute.xlu0 %3708
      %3710 = vrot.lane.b32.xlu0 %v3625, 96
      %v3711 = vpop.permute.xlu0 %3710
      %3712 = vrot.lane.b32.xlu0 %v3626, 96
      %v3713 = vpop.permute.xlu0 %3712
      %3714 = vrot.lane.b32.xlu0 %v3627, 96
      %v3715 = vpop.permute.xlu0 %3714
      %3716 = vrot.lane.b32.xlu0 %v3628, 96
      %v3717 = vpop.permute.xlu0 %3716
      %3718 = vrot.lane.b32.xlu0 %v3629, 96
      %v3719 = vpop.permute.xlu0 %3718
      %3720 = vrot.lane.b32.xlu0 %v3630, 96
      %v3721 = vpop.permute.xlu0 %3720
      %3722 = vrot.lane.b32.xlu0 %v3631, 96
      %v3723 = vpop.permute.xlu0 %3722
      %3724 = vrot.lane.b32.xlu0 %v3632, 96
      %v3725 = vpop.permute.xlu0 %3724
      %3726 = vrot.lane.b32.xlu0 %v3633, 96
      %v3727 = vpop.permute.xlu0 %3726
      %3728 = vrot.lane.b32.xlu0 %v3634, 96
      %v3729 = vpop.permute.xlu0 %3728
      %3730 = vrot.lane.b32.xlu0 %v3635, 96
      %v3731 = vpop.permute.xlu0 %3730
      %vm3764 = vcmask 1048320
      %3765 = vst.msk [vmem:[#allocation4] sm:$0xff] %vm3764, %v3669
      %3766 = vst.msk [vmem:[#allocation4 + $0x18] sm:$0xff] %vm3764, %v3671
      %3767 = vst.msk [vmem:[#allocation4 + $0x30] sm:$0xff] %vm3764, %v3673
      %3768 = vst.msk [vmem:[#allocation4 + $0x48] sm:$0xff] %vm3764, %v3675
      %3769 = vst.msk [vmem:[#allocation4 + $0x60] sm:$0xff] %vm3764, %v3677
      %3770 = vst.msk [vmem:[#allocation4 + $0x78] sm:$0xff] %vm3764, %v3679
      %3771 = vst.msk [vmem:[#allocation4 + $0x90] sm:$0xff] %vm3764, %v3681
      %3772 = vst.msk [vmem:[#allocation4 + $0xa8] sm:$0xff] %vm3764, %v3683
      %3773 = vst.msk [vmem:[#allocation4 + $0xc0] sm:$0xff] %vm3764, %v3685
      %3774 = vst.msk [vmem:[#allocation4 + $0xd8] sm:$0xff] %vm3764, %v3687
      %3775 = vst.msk [vmem:[#allocation4 + $0xf0] sm:$0xff] %vm3764, %v3689
      %3776 = vst.msk [vmem:[#allocation4 + $0x108] sm:$0xff] %vm3764, %v3691
      %3777 = vst.msk [vmem:[#allocation4 + $0x120] sm:$0xff] %vm3764, %v3693
      %3778 = vst.msk [vmem:[#allocation4 + $0x138] sm:$0xff] %vm3764, %v3695
      %3779 = vst.msk [vmem:[#allocation4 + $0x150] sm:$0xff] %vm3764, %v3697
      %3780 = vst.msk [vmem:[#allocation4 + $0x168] sm:$0xff] %vm3764, %v3699
      %3781 = vst.msk [vmem:[#allocation4 + $0x180] sm:$0xff] %vm3764, %v3701
      %3782 = vst.msk [vmem:[#allocation4 + $0x198] sm:$0xff] %vm3764, %v3703
      %3783 = vst.msk [vmem:[#allocation4 + $0x1b0] sm:$0xff] %vm3764, %v3705
      %3784 = vst.msk [vmem:[#allocation4 + $0x1c8] sm:$0xff] %vm3764, %v3707
      %3785 = vst.msk [vmem:[#allocation4 + $0x1e0] sm:$0xff] %vm3764, %v3709
      %3786 = vst.msk [vmem:[#allocation4 + $0x1f8] sm:$0xff] %vm3764, %v3711
      %3787 = vst.msk [vmem:[#allocation4 + $0x210] sm:$0xff] %vm3764, %v3713
      %3788 = vst.msk [vmem:[#allocation4 + $0x228] sm:$0xff] %vm3764, %v3715
      %3789 = vst.msk [vmem:[#allocation4 + $0x240] sm:$0xff] %vm3764, %v3717
      %3790 = vst.msk [vmem:[#allocation4 + $0x258] sm:$0xff] %vm3764, %v3719
      %3791 = vst.msk [vmem:[#allocation4 + $0x270] sm:$0xff] %vm3764, %v3721
      %3792 = vst.msk [vmem:[#allocation4 + $0x288] sm:$0xff] %vm3764, %v3723
      %3793 = vst.msk [vmem:[#allocation4 + $0x2a0] sm:$0xff] %vm3764, %v3725
      %3794 = vst.msk [vmem:[#allocation4 + $0x2b8] sm:$0xff] %vm3764, %v3727
      %3795 = vst.msk [vmem:[#allocation4 + $0x2d0] sm:$0xff] %vm3764, %v3729
      %3796 = vst.msk [vmem:[#allocation4 + $0x2e8] sm:$0xff] %vm3764, %v3731
      %v3797 = vld [vmem:[#allocation5 + $0x11] sm:$0xff]
      %v3798 = vld [vmem:[#allocation5 + $0x19] sm:$0xff]
      %v3799 = vld [vmem:[#allocation5 + $0x21] sm:$0xff]
      %v3800 = vld [vmem:[#allocation5 + $0x29] sm:$0xff]
      %v3801 = vld [vmem:[#allocation5 + $0x31] sm:$0xff]
      %v3802 = vld [vmem:[#allocation5 + $0x39] sm:$0xff]
      %v3803 = vld [vmem:[#allocation5 + $0x41] sm:$0xff]
      %v3804 = vld [vmem:[#allocation5 + $0x49] sm:$0xff]
      %v3805 = vld [vmem:[#allocation5 + $0x51] sm:$0xff]
      %v3806 = vld [vmem:[#allocation5 + $0x59] sm:$0xff]
      %v3807 = vld [vmem:[#allocation5 + $0x61] sm:$0xff]
      %v3808 = vld [vmem:[#allocation5 + $0x69] sm:$0xff]
      %v3809 = vld [vmem:[#allocation5 + $0x71] sm:$0xff]
      %v3810 = vld [vmem:[#allocation5 + $0x79] sm:$0xff]
      %v3811 = vld [vmem:[#allocation5 + $0x81] sm:$0xff]
      %v3812 = vld [vmem:[#allocation5 + $0x89] sm:$0xff]
      %v3813 = vld [vmem:[#allocation5 + $0x91] sm:$0xff]
      %v3814 = vld [vmem:[#allocation5 + $0x99] sm:$0xff]
      %v3815 = vld [vmem:[#allocation5 + $0xa1] sm:$0xff]
      %v3816 = vld [vmem:[#allocation5 + $0xa9] sm:$0xff]
      %v3817 = vld [vmem:[#allocation5 + $0xb1] sm:$0xff]
      %v3818 = vld [vmem:[#allocation5 + $0xb9] sm:$0xff]
      %v3819 = vld [vmem:[#allocation5 + $0xc1] sm:$0xff]
      %v3820 = vld [vmem:[#allocation5 + $0xc9] sm:$0xff]
      %v3821 = vld [vmem:[#allocation5 + $0xd1] sm:$0xff]
      %v3822 = vld [vmem:[#allocation5 + $0xd9] sm:$0xff]
      %v3823 = vld [vmem:[#allocation5 + $0xe1] sm:$0xff]
      %v3824 = vld [vmem:[#allocation5 + $0xe9] sm:$0xff]
      %v3825 = vld [vmem:[#allocation5 + $0xf1] sm:$0xff]
      %v3826 = vld [vmem:[#allocation5 + $0xf9] sm:$0xff]
      %v3827 = vld [vmem:[#allocation5 + $0x101] sm:$0xff]
      %v3828 = vld [vmem:[#allocation5 + $0x109] sm:$0xff]
      %3829 = vst.msk [vmem:[#allocation4 + $0x8] sm:$0xff] %vm3018, %v3797
      %3830 = vst.msk [vmem:[#allocation4 + $0x20] sm:$0xff] %vm3018, %v3798
      %3831 = vst.msk [vmem:[#allocation4 + $0x38] sm:$0xff] %vm3018, %v3799
      %3832 = vst.msk [vmem:[#allocation4 + $0x50] sm:$0xff] %vm3018, %v3800
      %3833 = vst.msk [vmem:[#allocation4 + $0x68] sm:$0xff] %vm3018, %v3801
      %3834 = vst.msk [vmem:[#allocation4 + $0x80] sm:$0xff] %vm3018, %v3802
      %3835 = vst.msk [vmem:[#allocation4 + $0x98] sm:$0xff] %vm3018, %v3803
      %3836 = vst.msk [vmem:[#allocation4 + $0xb0] sm:$0xff] %vm3018, %v3804
      %3837 = vst.msk [vmem:[#allocation4 + $0xc8] sm:$0xff] %vm3018, %v3805
      %3838 = vst.msk [vmem:[#allocation4 + $0xe0] sm:$0xff] %vm3018, %v3806
      %3839 = vst.msk [vmem:[#allocation4 + $0xf8] sm:$0xff] %vm3018, %v3807
      %3840 = vst.msk [vmem:[#allocation4 + $0x110] sm:$0xff] %vm3018, %v3808
      %3841 = vst.msk [vmem:[#allocation4 + $0x128] sm:$0xff] %vm3018, %v3809
      %3842 = vst.msk [vmem:[#allocation4 + $0x140] sm:$0xff] %vm3018, %v3810
      %3843 = vst.msk [vmem:[#allocation4 + $0x158] sm:$0xff] %vm3018, %v3811
      %3844 = vst.msk [vmem:[#allocation4 + $0x170] sm:$0xff] %vm3018, %v3812
      %3845 = vst.msk [vmem:[#allocation4 + $0x188] sm:$0xff] %vm3018, %v3813
      %3846 = vst.msk [vmem:[#allocation4 + $0x1a0] sm:$0xff] %vm3018, %v3814
      %3847 = vst.msk [vmem:[#allocation4 + $0x1b8] sm:$0xff] %vm3018, %v3815
      %3848 = vst.msk [vmem:[#allocation4 + $0x1d0] sm:$0xff] %vm3018, %v3816
      %3849 = vst.msk [vmem:[#allocation4 + $0x1e8] sm:$0xff] %vm3018, %v3817
      %3850 = vst.msk [vmem:[#allocation4 + $0x200] sm:$0xff] %vm3018, %v3818
      %3851 = vst.msk [vmem:[#allocation4 + $0x218] sm:$0xff] %vm3018, %v3819
      %3852 = vst.msk [vmem:[#allocation4 + $0x230] sm:$0xff] %vm3018, %v3820
      %3853 = vst.msk [vmem:[#allocation4 + $0x248] sm:$0xff] %vm3018, %v3821
      %3854 = vst.msk [vmem:[#allocation4 + $0x260] sm:$0xff] %vm3018, %v3822
      %3855 = vst.msk [vmem:[#allocation4 + $0x278] sm:$0xff] %vm3018, %v3823
      %3856 = vst.msk [vmem:[#allocation4 + $0x290] sm:$0xff] %vm3018, %v3824
      %3857 = vst.msk [vmem:[#allocation4 + $0x2a8] sm:$0xff] %vm3018, %v3825
      %3858 = vst.msk [vmem:[#allocation4 + $0x2c0] sm:$0xff] %vm3018, %v3826
      %3859 = vst.msk [vmem:[#allocation4 + $0x2d8] sm:$0xff] %vm3018, %v3827
      %3860 = vst.msk [vmem:[#allocation4 + $0x2f0] sm:$0xff] %vm3018, %v3828
      %v3861 = vld [vmem:[#allocation5 + $0x12] sm:$0xff]
      %v3862 = vld [vmem:[#allocation5 + $0x1a] sm:$0xff]
      %v3863 = vld [vmem:[#allocation5 + $0x22] sm:$0xff]
      %v3864 = vld [vmem:[#allocation5 + $0x2a] sm:$0xff]
      %v3865 = vld [vmem:[#allocation5 + $0x32] sm:$0xff]
      %v3866 = vld [vmem:[#allocation5 + $0x3a] sm:$0xff]
      %v3867 = vld [vmem:[#allocation5 + $0x42] sm:$0xff]
      %v3868 = vld [vmem:[#allocation5 + $0x4a] sm:$0xff]
      %v3869 = vld [vmem:[#allocation5 + $0x52] sm:$0xff]
      %v3870 = vld [vmem:[#allocation5 + $0x5a] sm:$0xff]
      %v3871 = vld [vmem:[#allocation5 + $0x62] sm:$0xff]
      %v3872 = vld [vmem:[#allocation5 + $0x6a] sm:$0xff]
      %v3873 = vld [vmem:[#allocation5 + $0x72] sm:$0xff]
      %v3874 = vld [vmem:[#allocation5 + $0x7a] sm:$0xff]
      %v3875 = vld [vmem:[#allocation5 + $0x82] sm:$0xff]
      %v3876 = vld [vmem:[#allocation5 + $0x8a] sm:$0xff]
      %v3877 = vld [vmem:[#allocation5 + $0x92] sm:$0xff]
      %v3878 = vld [vmem:[#allocation5 + $0x9a] sm:$0xff]
      %v3879 = vld [vmem:[#allocation5 + $0xa2] sm:$0xff]
      %v3880 = vld [vmem:[#allocation5 + $0xaa] sm:$0xff]
      %v3881 = vld [vmem:[#allocation5 + $0xb2] sm:$0xff]
      %v3882 = vld [vmem:[#allocation5 + $0xba] sm:$0xff]
      %v3883 = vld [vmem:[#allocation5 + $0xc2] sm:$0xff]
      %v3884 = vld [vmem:[#allocation5 + $0xca] sm:$0xff]
      %v3885 = vld [vmem:[#allocation5 + $0xd2] sm:$0xff]
      %v3886 = vld [vmem:[#allocation5 + $0xda] sm:$0xff]
      %v3887 = vld [vmem:[#allocation5 + $0xe2] sm:$0xff]
      %v3888 = vld [vmem:[#allocation5 + $0xea] sm:$0xff]
      %v3889 = vld [vmem:[#allocation5 + $0xf2] sm:$0xff]
      %v3890 = vld [vmem:[#allocation5 + $0xfa] sm:$0xff]
      %v3891 = vld [vmem:[#allocation5 + $0x102] sm:$0xff]
      %v3892 = vld [vmem:[#allocation5 + $0x10a] sm:$0xff]
      %v3893 = vsel %vm1043, %v3861, 0.0
      %v3894 = vsel %vm1044, %v3862, 0.0
      %v3895 = vsel %vm1045, %v3863, 0.0
      %v3896 = vsel %vm1046, %v3864, 0.0
      %v3897 = vsel %vm1047, %v3865, 0.0
      %v3898 = vsel %vm1048, %v3866, 0.0
      %v3899 = vsel %vm1049, %v3867, 0.0
      %v3900 = vsel %vm1050, %v3868, 0.0
      %v3901 = vsel %vm1051, %v3869, 0.0
      %v3902 = vsel %vm1052, %v3870, 0.0
      %v3903 = vsel %vm1053, %v3871, 0.0
      %v3904 = vsel %vm1054, %v3872, 0.0
      %v3905 = vsel %vm1055, %v3873, 0.0
      %v3906 = vsel %vm1056, %v3874, 0.0
      %v3907 = vsel %vm1057, %v3875, 0.0
      %v3908 = vsel %vm1058, %v3876, 0.0
      %v3909 = vsel %vm1059, %v3877, 0.0
      %v3910 = vsel %vm1060, %v3878, 0.0
      %v3911 = vsel %vm1061, %v3879, 0.0
      %v3912 = vsel %vm1062, %v3880, 0.0
      %v3913 = vsel %vm1063, %v3881, 0.0
      %v3914 = vsel %vm1064, %v3882, 0.0
      %v3915 = vsel %vm1065, %v3883, 0.0
      %v3916 = vsel %vm1066, %v3884, 0.0
      %v3917 = vsel %vm1067, %v3885, 0.0
      %v3918 = vsel %vm1068, %v3886, 0.0
      %v3919 = vsel %vm1069, %v3887, 0.0
      %v3920 = vsel %vm1070, %v3888, 0.0
      %v3921 = vsel %vm1071, %v3889, 0.0
      %v3922 = vsel %vm1072, %v3890, 0.0
      %v3923 = vsel %vm1073, %v3891, 0.0
      %v3924 = vsel %vm1074, %v3892, 0.0
      %3957 = vrot.lane.b32.xlu0 %v3893, 32
      %v3958 = vpop.permute.xlu0 %3957
      %3959 = vrot.lane.b32.xlu0 %v3894, 32
      %v3960 = vpop.permute.xlu0 %3959
      %3961 = vrot.lane.b32.xlu0 %v3895, 32
      %v3962 = vpop.permute.xlu0 %3961
      %3963 = vrot.lane.b32.xlu0 %v3896, 32
      %v3964 = vpop.permute.xlu0 %3963
      %3965 = vrot.lane.b32.xlu0 %v3897, 32
      %v3966 = vpop.permute.xlu0 %3965
      %3967 = vrot.lane.b32.xlu0 %v3898, 32
      %v3968 = vpop.permute.xlu0 %3967
      %3969 = vrot.lane.b32.xlu0 %v3899, 32
      %v3970 = vpop.permute.xlu0 %3969
      %3971 = vrot.lane.b32.xlu0 %v3900, 32
      %v3972 = vpop.permute.xlu0 %3971
      %3973 = vrot.lane.b32.xlu0 %v3901, 32
      %v3974 = vpop.permute.xlu0 %3973
      %3975 = vrot.lane.b32.xlu0 %v3902, 32
      %v3976 = vpop.permute.xlu0 %3975
      %3977 = vrot.lane.b32.xlu0 %v3903, 32
      %v3978 = vpop.permute.xlu0 %3977
      %3979 = vrot.lane.b32.xlu0 %v3904, 32
      %v3980 = vpop.permute.xlu0 %3979
      %3981 = vrot.lane.b32.xlu0 %v3905, 32
      %v3982 = vpop.permute.xlu0 %3981
      %3983 = vrot.lane.b32.xlu0 %v3906, 32
      %v3984 = vpop.permute.xlu0 %3983
      %3985 = vrot.lane.b32.xlu0 %v3907, 32
      %v3986 = vpop.permute.xlu0 %3985
      %3987 = vrot.lane.b32.xlu0 %v3908, 32
      %v3988 = vpop.permute.xlu0 %3987
      %3989 = vrot.lane.b32.xlu0 %v3909, 32
      %v3990 = vpop.permute.xlu0 %3989
      %3991 = vrot.lane.b32.xlu0 %v3910, 32
      %v3992 = vpop.permute.xlu0 %3991
      %3993 = vrot.lane.b32.xlu0 %v3911, 32
      %v3994 = vpop.permute.xlu0 %3993
      %3995 = vrot.lane.b32.xlu0 %v3912, 32
      %v3996 = vpop.permute.xlu0 %3995
      %3997 = vrot.lane.b32.xlu0 %v3913, 32
      %v3998 = vpop.permute.xlu0 %3997
      %3999 = vrot.lane.b32.xlu0 %v3914, 32
      %v4000 = vpop.permute.xlu0 %3999
      %4001 = vrot.lane.b32.xlu0 %v3915, 32
      %v4002 = vpop.permute.xlu0 %4001
      %4003 = vrot.lane.b32.xlu0 %v3916, 32
      %v4004 = vpop.permute.xlu0 %4003
      %4005 = vrot.lane.b32.xlu0 %v3917, 32
      %v4006 = vpop.permute.xlu0 %4005
      %4007 = vrot.lane.b32.xlu0 %v3918, 32
      %v4008 = vpop.permute.xlu0 %4007
      %4009 = vrot.lane.b32.xlu0 %v3919, 32
      %v4010 = vpop.permute.xlu0 %4009
      %4011 = vrot.lane.b32.xlu0 %v3920, 32
      %v4012 = vpop.permute.xlu0 %4011
      %4013 = vrot.lane.b32.xlu0 %v3921, 32
      %v4014 = vpop.permute.xlu0 %4013
      %4015 = vrot.lane.b32.xlu0 %v3922, 32
      %v4016 = vpop.permute.xlu0 %4015
      %4017 = vrot.lane.b32.xlu0 %v3923, 32
      %v4018 = vpop.permute.xlu0 %4017
      %4019 = vrot.lane.b32.xlu0 %v3924, 32
      %v4020 = vpop.permute.xlu0 %4019
      %4053 = vst.msk [vmem:[#allocation4 + $0x8] sm:$0xff] %vm3314, %v3958
      %4054 = vst.msk [vmem:[#allocation4 + $0x20] sm:$0xff] %vm3314, %v3960
      %4055 = vst.msk [vmem:[#allocation4 + $0x38] sm:$0xff] %vm3314, %v3962
      %4056 = vst.msk [vmem:[#allocation4 + $0x50] sm:$0xff] %vm3314, %v3964
      %4057 = vst.msk [vmem:[#allocation4 + $0x68] sm:$0xff] %vm3314, %v3966
      %4058 = vst.msk [vmem:[#allocation4 + $0x80] sm:$0xff] %vm3314, %v3968
      %4059 = vst.msk [vmem:[#allocation4 + $0x98] sm:$0xff] %vm3314, %v3970
      %4060 = vst.msk [vmem:[#allocation4 + $0xb0] sm:$0xff] %vm3314, %v3972
      %4061 = vst.msk [vmem:[#allocation4 + $0xc8] sm:$0xff] %vm3314, %v3974
      %4062 = vst.msk [vmem:[#allocation4 + $0xe0] sm:$0xff] %vm3314, %v3976
      %4063 = vst.msk [vmem:[#allocation4 + $0xf8] sm:$0xff] %vm3314, %v3978
      %4064 = vst.msk [vmem:[#allocation4 + $0x110] sm:$0xff] %vm3314, %v3980
      %4065 = vst.msk [vmem:[#allocation4 + $0x128] sm:$0xff] %vm3314, %v3982
      %4066 = vst.msk [vmem:[#allocation4 + $0x140] sm:$0xff] %vm3314, %v3984
      %4067 = vst.msk [vmem:[#allocation4 + $0x158] sm:$0xff] %vm3314, %v3986
      %4068 = vst.msk [vmem:[#allocation4 + $0x170] sm:$0xff] %vm3314, %v3988
      %4069 = vst.msk [vmem:[#allocation4 + $0x188] sm:$0xff] %vm3314, %v3990
      %4070 = vst.msk [vmem:[#allocation4 + $0x1a0] sm:$0xff] %vm3314, %v3992
      %4071 = vst.msk [vmem:[#allocation4 + $0x1b8] sm:$0xff] %vm3314, %v3994
      %4072 = vst.msk [vmem:[#allocation4 + $0x1d0] sm:$0xff] %vm3314, %v3996
      %4073 = vst.msk [vmem:[#allocation4 + $0x1e8] sm:$0xff] %vm3314, %v3998
      %4074 = vst.msk [vmem:[#allocation4 + $0x200] sm:$0xff] %vm3314, %v4000
      %4075 = vst.msk [vmem:[#allocation4 + $0x218] sm:$0xff] %vm3314, %v4002
      %4076 = vst.msk [vmem:[#allocation4 + $0x230] sm:$0xff] %vm3314, %v4004
      %4077 = vst.msk [vmem:[#allocation4 + $0x248] sm:$0xff] %vm3314, %v4006
      %4078 = vst.msk [vmem:[#allocation4 + $0x260] sm:$0xff] %vm3314, %v4008
      %4079 = vst.msk [vmem:[#allocation4 + $0x278] sm:$0xff] %vm3314, %v4010
      %4080 = vst.msk [vmem:[#allocation4 + $0x290] sm:$0xff] %vm3314, %v4012
      %4081 = vst.msk [vmem:[#allocation4 + $0x2a8] sm:$0xff] %vm3314, %v4014
      %4082 = vst.msk [vmem:[#allocation4 + $0x2c0] sm:$0xff] %vm3314, %v4016
      %4083 = vst.msk [vmem:[#allocation4 + $0x2d8] sm:$0xff] %vm3314, %v4018
      %4084 = vst.msk [vmem:[#allocation4 + $0x2f0] sm:$0xff] %vm3314, %v4020
      %v4085 = vld [vmem:[#allocation5 + $0x20] sm:$0xff]
      %v4086 = vld [vmem:[#allocation5 + $0x28] sm:$0xff]
      %v4087 = vld [vmem:[#allocation5 + $0x30] sm:$0xff]
      %v4088 = vld [vmem:[#allocation5 + $0x38] sm:$0xff]
      %v4089 = vld [vmem:[#allocation5 + $0x40] sm:$0xff]
      %v4090 = vld [vmem:[#allocation5 + $0x48] sm:$0xff]
      %v4091 = vld [vmem:[#allocation5 + $0x50] sm:$0xff]
      %v4092 = vld [vmem:[#allocation5 + $0x58] sm:$0xff]
      %v4093 = vld [vmem:[#allocation5 + $0x60] sm:$0xff]
      %v4094 = vld [vmem:[#allocation5 + $0x68] sm:$0xff]
      %v4095 = vld [vmem:[#allocation5 + $0x70] sm:$0xff]
      %v4096 = vld [vmem:[#allocation5 + $0x78] sm:$0xff]
      %v4097 = vld [vmem:[#allocation5 + $0x80] sm:$0xff]
      %v4098 = vld [vmem:[#allocation5 + $0x88] sm:$0xff]
      %v4099 = vld [vmem:[#allocation5 + $0x90] sm:$0xff]
      %v4100 = vld [vmem:[#allocation5 + $0x98] sm:$0xff]
      %v4101 = vld [vmem:[#allocation5 + $0xa0] sm:$0xff]
      %v4102 = vld [vmem:[#allocation5 + $0xa8] sm:$0xff]
      %v4103 = vld [vmem:[#allocation5 + $0xb0] sm:$0xff]
      %v4104 = vld [vmem:[#allocation5 + $0xb8] sm:$0xff]
      %v4105 = vld [vmem:[#allocation5 + $0xc0] sm:$0xff]
      %v4106 = vld [vmem:[#allocation5 + $0xc8] sm:$0xff]
      %v4107 = vld [vmem:[#allocation5 + $0xd0] sm:$0xff]
      %v4108 = vld [vmem:[#allocation5 + $0xd8] sm:$0xff]
      %v4109 = vld [vmem:[#allocation5 + $0xe0] sm:$0xff]
      %v4110 = vld [vmem:[#allocation5 + $0xe8] sm:$0xff]
      %v4111 = vld [vmem:[#allocation5 + $0xf0] sm:$0xff]
      %v4112 = vld [vmem:[#allocation5 + $0xf8] sm:$0xff]
      %v4113 = vld [vmem:[#allocation5 + $0x100] sm:$0xff]
      %v4114 = vld [vmem:[#allocation5 + $0x108] sm:$0xff]
      %v4115 = vld [vmem:[#allocation5 + $0x110] sm:$0xff]
      %v4116 = vld [vmem:[#allocation5 + $0x118] sm:$0xff]
      %v4117 = vsel %vm722, %v4085, 0.0
      %v4118 = vsel %vm723, %v4086, 0.0
      %v4119 = vsel %vm724, %v4087, 0.0
      %v4120 = vsel %vm725, %v4088, 0.0
      %v4121 = vsel %vm726, %v4089, 0.0
      %v4122 = vsel %vm727, %v4090, 0.0
      %v4123 = vsel %vm728, %v4091, 0.0
      %v4124 = vsel %vm729, %v4092, 0.0
      %v4125 = vsel %vm730, %v4093, 0.0
      %v4126 = vsel %vm731, %v4094, 0.0
      %v4127 = vsel %vm732, %v4095, 0.0
      %v4128 = vsel %vm733, %v4096, 0.0
      %v4129 = vsel %vm734, %v4097, 0.0
      %v4130 = vsel %vm735, %v4098, 0.0
      %v4131 = vsel %vm736, %v4099, 0.0
      %v4132 = vsel %vm737, %v4100, 0.0
      %v4133 = vsel %vm738, %v4101, 0.0
      %v4134 = vsel %vm739, %v4102, 0.0
      %v4135 = vsel %vm740, %v4103, 0.0
      %v4136 = vsel %vm741, %v4104, 0.0
      %v4137 = vsel %vm742, %v4105, 0.0
      %v4138 = vsel %vm743, %v4106, 0.0
      %v4139 = vsel %vm744, %v4107, 0.0
      %v4140 = vsel %vm745, %v4108, 0.0
      %v4141 = vsel %vm746, %v4109, 0.0
      %v4142 = vsel %vm747, %v4110, 0.0
      %v4143 = vsel %vm748, %v4111, 0.0
      %v4144 = vsel %vm749, %v4112, 0.0
      %v4145 = vsel %vm750, %v4113, 0.0
      %v4146 = vsel %vm751, %v4114, 0.0
      %v4147 = vsel %vm752, %v4115, 0.0
      %v4148 = vsel %vm753, %v4116, 0.0
      %4181 = vrot.lane.b32.xlu0 %v4117, 64
      %v4182 = vpop.permute.xlu0 %4181
      %4183 = vrot.lane.b32.xlu0 %v4118, 64
      %v4184 = vpop.permute.xlu0 %4183
      %4185 = vrot.lane.b32.xlu0 %v4119, 64
      %v4186 = vpop.permute.xlu0 %4185
      %4187 = vrot.lane.b32.xlu0 %v4120, 64
      %v4188 = vpop.permute.xlu0 %4187
      %4189 = vrot.lane.b32.xlu0 %v4121, 64
      %v4190 = vpop.permute.xlu0 %4189
      %4191 = vrot.lane.b32.xlu0 %v4122, 64
      %v4192 = vpop.permute.xlu0 %4191
      %4193 = vrot.lane.b32.xlu0 %v4123, 64
      %v4194 = vpop.permute.xlu0 %4193
      %4195 = vrot.lane.b32.xlu0 %v4124, 64
      %v4196 = vpop.permute.xlu0 %4195
      %4197 = vrot.lane.b32.xlu0 %v4125, 64
      %v4198 = vpop.permute.xlu0 %4197
      %4199 = vrot.lane.b32.xlu0 %v4126, 64
      %v4200 = vpop.permute.xlu0 %4199
      %4201 = vrot.lane.b32.xlu0 %v4127, 64
      %v4202 = vpop.permute.xlu0 %4201
      %4203 = vrot.lane.b32.xlu0 %v4128, 64
      %v4204 = vpop.permute.xlu0 %4203
      %4205 = vrot.lane.b32.xlu0 %v4129, 64
      %v4206 = vpop.permute.xlu0 %4205
      %4207 = vrot.lane.b32.xlu0 %v4130, 64
      %v4208 = vpop.permute.xlu0 %4207
      %4209 = vrot.lane.b32.xlu0 %v4131, 64
      %v4210 = vpop.permute.xlu0 %4209
      %4211 = vrot.lane.b32.xlu0 %v4132, 64
      %v4212 = vpop.permute.xlu0 %4211
      %4213 = vrot.lane.b32.xlu0 %v4133, 64
      %v4214 = vpop.permute.xlu0 %4213
      %4215 = vrot.lane.b32.xlu0 %v4134, 64
      %v4216 = vpop.permute.xlu0 %4215
      %4217 = vrot.lane.b32.xlu0 %v4135, 64
      %v4218 = vpop.permute.xlu0 %4217
      %4219 = vrot.lane.b32.xlu0 %v4136, 64
      %v4220 = vpop.permute.xlu0 %4219
      %4221 = vrot.lane.b32.xlu0 %v4137, 64
      %v4222 = vpop.permute.xlu0 %4221
      %4223 = vrot.lane.b32.xlu0 %v4138, 64
      %v4224 = vpop.permute.xlu0 %4223
      %4225 = vrot.lane.b32.xlu0 %v4139, 64
      %v4226 = vpop.permute.xlu0 %4225
      %4227 = vrot.lane.b32.xlu0 %v4140, 64
      %v4228 = vpop.permute.xlu0 %4227
      %4229 = vrot.lane.b32.xlu0 %v4141, 64
      %v4230 = vpop.permute.xlu0 %4229
      %4231 = vrot.lane.b32.xlu0 %v4142, 64
      %v4232 = vpop.permute.xlu0 %4231
      %4233 = vrot.lane.b32.xlu0 %v4143, 64
      %v4234 = vpop.permute.xlu0 %4233
      %4235 = vrot.lane.b32.xlu0 %v4144, 64
      %v4236 = vpop.permute.xlu0 %4235
      %4237 = vrot.lane.b32.xlu0 %v4145, 64
      %v4238 = vpop.permute.xlu0 %4237
      %4239 = vrot.lane.b32.xlu0 %v4146, 64
      %v4240 = vpop.permute.xlu0 %4239
      %4241 = vrot.lane.b32.xlu0 %v4147, 64
      %v4242 = vpop.permute.xlu0 %4241
      %4243 = vrot.lane.b32.xlu0 %v4148, 64
      %v4244 = vpop.permute.xlu0 %4243
      %4277 = vst.msk [vmem:[#allocation4 + $0x8] sm:$0xff] %vm3539, %v4182
      %4278 = vst.msk [vmem:[#allocation4 + $0x20] sm:$0xff] %vm3539, %v4184
      %4279 = vst.msk [vmem:[#allocation4 + $0x38] sm:$0xff] %vm3539, %v4186
      %4280 = vst.msk [vmem:[#allocation4 + $0x50] sm:$0xff] %vm3539, %v4188
      %4281 = vst.msk [vmem:[#allocation4 + $0x68] sm:$0xff] %vm3539, %v4190
      %4282 = vst.msk [vmem:[#allocation4 + $0x80] sm:$0xff] %vm3539, %v4192
      %4283 = vst.msk [vmem:[#allocation4 + $0x98] sm:$0xff] %vm3539, %v4194
      %4284 = vst.msk [vmem:[#allocation4 + $0xb0] sm:$0xff] %vm3539, %v4196
      %4285 = vst.msk [vmem:[#allocation4 + $0xc8] sm:$0xff] %vm3539, %v4198
      %4286 = vst.msk [vmem:[#allocation4 + $0xe0] sm:$0xff] %vm3539, %v4200
      %4287 = vst.msk [vmem:[#allocation4 + $0xf8] sm:$0xff] %vm3539, %v4202
      %4288 = vst.msk [vmem:[#allocation4 + $0x110] sm:$0xff] %vm3539, %v4204
      %4289 = vst.msk [vmem:[#allocation4 + $0x128] sm:$0xff] %vm3539, %v4206
      %4290 = vst.msk [vmem:[#allocation4 + $0x140] sm:$0xff] %vm3539, %v4208
      %4291 = vst.msk [vmem:[#allocation4 + $0x158] sm:$0xff] %vm3539, %v4210
      %4292 = vst.msk [vmem:[#allocation4 + $0x170] sm:$0xff] %vm3539, %v4212
      %4293 = vst.msk [vmem:[#allocation4 + $0x188] sm:$0xff] %vm3539, %v4214
      %4294 = vst.msk [vmem:[#allocation4 + $0x1a0] sm:$0xff] %vm3539, %v4216
      %4295 = vst.msk [vmem:[#allocation4 + $0x1b8] sm:$0xff] %vm3539, %v4218
      %4296 = vst.msk [vmem:[#allocation4 + $0x1d0] sm:$0xff] %vm3539, %v4220
      %4297 = vst.msk [vmem:[#allocation4 + $0x1e8] sm:$0xff] %vm3539, %v4222
      %4298 = vst.msk [vmem:[#allocation4 + $0x200] sm:$0xff] %vm3539, %v4224
      %4299 = vst.msk [vmem:[#allocation4 + $0x218] sm:$0xff] %vm3539, %v4226
      %4300 = vst.msk [vmem:[#allocation4 + $0x230] sm:$0xff] %vm3539, %v4228
      %4301 = vst.msk [vmem:[#allocation4 + $0x248] sm:$0xff] %vm3539, %v4230
      %4302 = vst.msk [vmem:[#allocation4 + $0x260] sm:$0xff] %vm3539, %v4232
      %4303 = vst.msk [vmem:[#allocation4 + $0x278] sm:$0xff] %vm3539, %v4234
      %4304 = vst.msk [vmem:[#allocation4 + $0x290] sm:$0xff] %vm3539, %v4236
      %4305 = vst.msk [vmem:[#allocation4 + $0x2a8] sm:$0xff] %vm3539, %v4238
      %4306 = vst.msk [vmem:[#allocation4 + $0x2c0] sm:$0xff] %vm3539, %v4240
      %4307 = vst.msk [vmem:[#allocation4 + $0x2d8] sm:$0xff] %vm3539, %v4242
      %4308 = vst.msk [vmem:[#allocation4 + $0x2f0] sm:$0xff] %vm3539, %v4244
      %v4309 = vld [vmem:[#allocation5 + $0x21] sm:$0xff]
      %v4310 = vld [vmem:[#allocation5 + $0x29] sm:$0xff]
      %v4311 = vld [vmem:[#allocation5 + $0x31] sm:$0xff]
      %v4312 = vld [vmem:[#allocation5 + $0x39] sm:$0xff]
      %v4313 = vld [vmem:[#allocation5 + $0x41] sm:$0xff]
      %v4314 = vld [vmem:[#allocation5 + $0x49] sm:$0xff]
      %v4315 = vld [vmem:[#allocation5 + $0x51] sm:$0xff]
      %v4316 = vld [vmem:[#allocation5 + $0x59] sm:$0xff]
      %v4317 = vld [vmem:[#allocation5 + $0x61] sm:$0xff]
      %v4318 = vld [vmem:[#allocation5 + $0x69] sm:$0xff]
      %v4319 = vld [vmem:[#allocation5 + $0x71] sm:$0xff]
      %v4320 = vld [vmem:[#allocation5 + $0x79] sm:$0xff]
      %v4321 = vld [vmem:[#allocation5 + $0x81] sm:$0xff]
      %v4322 = vld [vmem:[#allocation5 + $0x89] sm:$0xff]
      %v4323 = vld [vmem:[#allocation5 + $0x91] sm:$0xff]
      %v4324 = vld [vmem:[#allocation5 + $0x99] sm:$0xff]
      %v4325 = vld [vmem:[#allocation5 + $0xa1] sm:$0xff]
      %v4326 = vld [vmem:[#allocation5 + $0xa9] sm:$0xff]
      %v4327 = vld [vmem:[#allocation5 + $0xb1] sm:$0xff]
      %v4328 = vld [vmem:[#allocation5 + $0xb9] sm:$0xff]
      %v4329 = vld [vmem:[#allocation5 + $0xc1] sm:$0xff]
      %v4330 = vld [vmem:[#allocation5 + $0xc9] sm:$0xff]
      %v4331 = vld [vmem:[#allocation5 + $0xd1] sm:$0xff]
      %v4332 = vld [vmem:[#allocation5 + $0xd9] sm:$0xff]
      %v4333 = vld [vmem:[#allocation5 + $0xe1] sm:$0xff]
      %v4334 = vld [vmem:[#allocation5 + $0xe9] sm:$0xff]
      %v4335 = vld [vmem:[#allocation5 + $0xf1] sm:$0xff]
      %v4336 = vld [vmem:[#allocation5 + $0xf9] sm:$0xff]
      %v4337 = vld [vmem:[#allocation5 + $0x101] sm:$0xff]
      %v4338 = vld [vmem:[#allocation5 + $0x109] sm:$0xff]
      %v4339 = vld [vmem:[#allocation5 + $0x111] sm:$0xff]
      %v4340 = vld [vmem:[#allocation5 + $0x119] sm:$0xff]
      %4373 = vrot.lane.b32.xlu0 %v4309, 96
      %v4374 = vpop.permute.xlu0 %4373
      %4375 = vrot.lane.b32.xlu0 %v4310, 96
      %v4376 = vpop.permute.xlu0 %4375
      %4377 = vrot.lane.b32.xlu0 %v4311, 96
      %v4378 = vpop.permute.xlu0 %4377
      %4379 = vrot.lane.b32.xlu0 %v4312, 96
      %v4380 = vpop.permute.xlu0 %4379
      %4381 = vrot.lane.b32.xlu0 %v4313, 96
      %v4382 = vpop.permute.xlu0 %4381
      %4383 = vrot.lane.b32.xlu0 %v4314, 96
      %v4384 = vpop.permute.xlu0 %4383
      %4385 = vrot.lane.b32.xlu0 %v4315, 96
      %v4386 = vpop.permute.xlu0 %4385
      %4387 = vrot.lane.b32.xlu0 %v4316, 96
      %v4388 = vpop.permute.xlu0 %4387
      %4389 = vrot.lane.b32.xlu0 %v4317, 96
      %v4390 = vpop.permute.xlu0 %4389
      %4391 = vrot.lane.b32.xlu0 %v4318, 96
      %v4392 = vpop.permute.xlu0 %4391
      %4393 = vrot.lane.b32.xlu0 %v4319, 96
      %v4394 = vpop.permute.xlu0 %4393
      %4395 = vrot.lane.b32.xlu0 %v4320, 96
      %v4396 = vpop.permute.xlu0 %4395
      %4397 = vrot.lane.b32.xlu0 %v4321, 96
      %v4398 = vpop.permute.xlu0 %4397
      %4399 = vrot.lane.b32.xlu0 %v4322, 96
      %v4400 = vpop.permute.xlu0 %4399
      %4401 = vrot.lane.b32.xlu0 %v4323, 96
      %v4402 = vpop.permute.xlu0 %4401
      %4403 = vrot.lane.b32.xlu0 %v4324, 96
      %v4404 = vpop.permute.xlu0 %4403
      %4405 = vrot.lane.b32.xlu0 %v4325, 96
      %v4406 = vpop.permute.xlu0 %4405
      %4407 = vrot.lane.b32.xlu0 %v4326, 96
      %v4408 = vpop.permute.xlu0 %4407
      %4409 = vrot.lane.b32.xlu0 %v4327, 96
      %v4410 = vpop.permute.xlu0 %4409
      %4411 = vrot.lane.b32.xlu0 %v4328, 96
      %v4412 = vpop.permute.xlu0 %4411
      %4413 = vrot.lane.b32.xlu0 %v4329, 96
      %v4414 = vpop.permute.xlu0 %4413
      %4415 = vrot.lane.b32.xlu0 %v4330, 96
      %v4416 = vpop.permute.xlu0 %4415
      %4417 = vrot.lane.b32.xlu0 %v4331, 96
      %v4418 = vpop.permute.xlu0 %4417
      %4419 = vrot.lane.b32.xlu0 %v4332, 96
      %v4420 = vpop.permute.xlu0 %4419
      %4421 = vrot.lane.b32.xlu0 %v4333, 96
      %v4422 = vpop.permute.xlu0 %4421
      %4423 = vrot.lane.b32.xlu0 %v4334, 96
      %v4424 = vpop.permute.xlu0 %4423
      %4425 = vrot.lane.b32.xlu0 %v4335, 96
      %v4426 = vpop.permute.xlu0 %4425
      %4427 = vrot.lane.b32.xlu0 %v4336, 96
      %v4428 = vpop.permute.xlu0 %4427
      %4429 = vrot.lane.b32.xlu0 %v4337, 96
      %v4430 = vpop.permute.xlu0 %4429
      %4431 = vrot.lane.b32.xlu0 %v4338, 96
      %v4432 = vpop.permute.xlu0 %4431
      %4433 = vrot.lane.b32.xlu0 %v4339, 96
      %v4434 = vpop.permute.xlu0 %4433
      %4435 = vrot.lane.b32.xlu0 %v4340, 96
      %v4436 = vpop.permute.xlu0 %4435
      %4469 = vst.msk [vmem:[#allocation4 + $0x8] sm:$0xff] %vm3764, %v4374
      %4470 = vst.msk [vmem:[#allocation4 + $0x20] sm:$0xff] %vm3764, %v4376
      %4471 = vst.msk [vmem:[#allocation4 + $0x38] sm:$0xff] %vm3764, %v4378
      %4472 = vst.msk [vmem:[#allocation4 + $0x50] sm:$0xff] %vm3764, %v4380
      %4473 = vst.msk [vmem:[#allocation4 + $0x68] sm:$0xff] %vm3764, %v4382
      %4474 = vst.msk [vmem:[#allocation4 + $0x80] sm:$0xff] %vm3764, %v4384
      %4475 = vst.msk [vmem:[#allocation4 + $0x98] sm:$0xff] %vm3764, %v4386
      %4476 = vst.msk [vmem:[#allocation4 + $0xb0] sm:$0xff] %vm3764, %v4388
      %4477 = vst.msk [vmem:[#allocation4 + $0xc8] sm:$0xff] %vm3764, %v4390
      %4478 = vst.msk [vmem:[#allocation4 + $0xe0] sm:$0xff] %vm3764, %v4392
      %4479 = vst.msk [vmem:[#allocation4 + $0xf8] sm:$0xff] %vm3764, %v4394
      %4480 = vst.msk [vmem:[#allocation4 + $0x110] sm:$0xff] %vm3764, %v4396
      %4481 = vst.msk [vmem:[#allocation4 + $0x128] sm:$0xff] %vm3764, %v4398
      %4482 = vst.msk [vmem:[#allocation4 + $0x140] sm:$0xff] %vm3764, %v4400
      %4483 = vst.msk [vmem:[#allocation4 + $0x158] sm:$0xff] %vm3764, %v4402
      %4484 = vst.msk [vmem:[#allocation4 + $0x170] sm:$0xff] %vm3764, %v4404
      %4485 = vst.msk [vmem:[#allocation4 + $0x188] sm:$0xff] %vm3764, %v4406
      %4486 = vst.msk [vmem:[#allocation4 + $0x1a0] sm:$0xff] %vm3764, %v4408
      %4487 = vst.msk [vmem:[#allocation4 + $0x1b8] sm:$0xff] %vm3764, %v4410
      %4488 = vst.msk [vmem:[#allocation4 + $0x1d0] sm:$0xff] %vm3764, %v4412
      %4489 = vst.msk [vmem:[#allocation4 + $0x1e8] sm:$0xff] %vm3764, %v4414
      %4490 = vst.msk [vmem:[#allocation4 + $0x200] sm:$0xff] %vm3764, %v4416
      %4491 = vst.msk [vmem:[#allocation4 + $0x218] sm:$0xff] %vm3764, %v4418
      %4492 = vst.msk [vmem:[#allocation4 + $0x230] sm:$0xff] %vm3764, %v4420
      %4493 = vst.msk [vmem:[#allocation4 + $0x248] sm:$0xff] %vm3764, %v4422
      %4494 = vst.msk [vmem:[#allocation4 + $0x260] sm:$0xff] %vm3764, %v4424
      %4495 = vst.msk [vmem:[#allocation4 + $0x278] sm:$0xff] %vm3764, %v4426
      %4496 = vst.msk [vmem:[#allocation4 + $0x290] sm:$0xff] %vm3764, %v4428
      %4497 = vst.msk [vmem:[#allocation4 + $0x2a8] sm:$0xff] %vm3764, %v4430
      %4498 = vst.msk [vmem:[#allocation4 + $0x2c0] sm:$0xff] %vm3764, %v4432
      %4499 = vst.msk [vmem:[#allocation4 + $0x2d8] sm:$0xff] %vm3764, %v4434
      %4500 = vst.msk [vmem:[#allocation4 + $0x2f0] sm:$0xff] %vm3764, %v4436
      %v4501 = vld [vmem:[#allocation5 + $0x22] sm:$0xff]
      %v4502 = vld [vmem:[#allocation5 + $0x2a] sm:$0xff]
      %v4503 = vld [vmem:[#allocation5 + $0x32] sm:$0xff]
      %v4504 = vld [vmem:[#allocation5 + $0x3a] sm:$0xff]
      %v4505 = vld [vmem:[#allocation5 + $0x42] sm:$0xff]
      %v4506 = vld [vmem:[#allocation5 + $0x4a] sm:$0xff]
      %v4507 = vld [vmem:[#allocation5 + $0x52] sm:$0xff]
      %v4508 = vld [vmem:[#allocation5 + $0x5a] sm:$0xff]
      %v4509 = vld [vmem:[#allocation5 + $0x62] sm:$0xff]
      %v4510 = vld [vmem:[#allocation5 + $0x6a] sm:$0xff]
      %v4511 = vld [vmem:[#allocation5 + $0x72] sm:$0xff]
      %v4512 = vld [vmem:[#allocation5 + $0x7a] sm:$0xff]
      %v4513 = vld [vmem:[#allocation5 + $0x82] sm:$0xff]
      %v4514 = vld [vmem:[#allocation5 + $0x8a] sm:$0xff]
      %v4515 = vld [vmem:[#allocation5 + $0x92] sm:$0xff]
      %v4516 = vld [vmem:[#allocation5 + $0x9a] sm:$0xff]
      %v4517 = vld [vmem:[#allocation5 + $0xa2] sm:$0xff]
      %v4518 = vld [vmem:[#allocation5 + $0xaa] sm:$0xff]
      %v4519 = vld [vmem:[#allocation5 + $0xb2] sm:$0xff]
      %v4520 = vld [vmem:[#allocation5 + $0xba] sm:$0xff]
      %v4521 = vld [vmem:[#allocation5 + $0xc2] sm:$0xff]
      %v4522 = vld [vmem:[#allocation5 + $0xca] sm:$0xff]
      %v4523 = vld [vmem:[#allocation5 + $0xd2] sm:$0xff]
      %v4524 = vld [vmem:[#allocation5 + $0xda] sm:$0xff]
      %v4525 = vld [vmem:[#allocation5 + $0xe2] sm:$0xff]
      %v4526 = vld [vmem:[#allocation5 + $0xea] sm:$0xff]
      %v4527 = vld [vmem:[#allocation5 + $0xf2] sm:$0xff]
      %v4528 = vld [vmem:[#allocation5 + $0xfa] sm:$0xff]
      %v4529 = vld [vmem:[#allocation5 + $0x102] sm:$0xff]
      %v4530 = vld [vmem:[#allocation5 + $0x10a] sm:$0xff]
      %v4531 = vld [vmem:[#allocation5 + $0x112] sm:$0xff]
      %v4532 = vld [vmem:[#allocation5 + $0x11a] sm:$0xff]
      %v4533 = vsel %vm1043, %v4501, 0.0
      %v4534 = vsel %vm1044, %v4502, 0.0
      %v4535 = vsel %vm1045, %v4503, 0.0
      %v4536 = vsel %vm1046, %v4504, 0.0
      %v4537 = vsel %vm1047, %v4505, 0.0
      %v4538 = vsel %vm1048, %v4506, 0.0
      %v4539 = vsel %vm1049, %v4507, 0.0
      %v4540 = vsel %vm1050, %v4508, 0.0
      %v4541 = vsel %vm1051, %v4509, 0.0
      %v4542 = vsel %vm1052, %v4510, 0.0
      %v4543 = vsel %vm1053, %v4511, 0.0
      %v4544 = vsel %vm1054, %v4512, 0.0
      %v4545 = vsel %vm1055, %v4513, 0.0
      %v4546 = vsel %vm1056, %v4514, 0.0
      %v4547 = vsel %vm1057, %v4515, 0.0
      %v4548 = vsel %vm1058, %v4516, 0.0
      %v4549 = vsel %vm1059, %v4517, 0.0
      %v4550 = vsel %vm1060, %v4518, 0.0
      %v4551 = vsel %vm1061, %v4519, 0.0
      %v4552 = vsel %vm1062, %v4520, 0.0
      %v4553 = vsel %vm1063, %v4521, 0.0
      %v4554 = vsel %vm1064, %v4522, 0.0
      %v4555 = vsel %vm1065, %v4523, 0.0
      %v4556 = vsel %vm1066, %v4524, 0.0
      %v4557 = vsel %vm1067, %v4525, 0.0
      %v4558 = vsel %vm1068, %v4526, 0.0
      %v4559 = vsel %vm1069, %v4527, 0.0
      %v4560 = vsel %vm1070, %v4528, 0.0
      %v4561 = vsel %vm1071, %v4529, 0.0
      %v4562 = vsel %vm1072, %v4530, 0.0
      %v4563 = vsel %vm1073, %v4531, 0.0
      %v4564 = vsel %vm1074, %v4532, 0.0
      %4565 = vst.msk [vmem:[#allocation4 + $0x10] sm:$0xff] %vm3018, %v4533
      %4566 = vst.msk [vmem:[#allocation4 + $0x28] sm:$0xff] %vm3018, %v4534
      %4567 = vst.msk [vmem:[#allocation4 + $0x40] sm:$0xff] %vm3018, %v4535
      %4568 = vst.msk [vmem:[#allocation4 + $0x58] sm:$0xff] %vm3018, %v4536
      %4569 = vst.msk [vmem:[#allocation4 + $0x70] sm:$0xff] %vm3018, %v4537
      %4570 = vst.msk [vmem:[#allocation4 + $0x88] sm:$0xff] %vm3018, %v4538
      %4571 = vst.msk [vmem:[#allocation4 + $0xa0] sm:$0xff] %vm3018, %v4539
      %4572 = vst.msk [vmem:[#allocation4 + $0xb8] sm:$0xff] %vm3018, %v4540
      %4573 = vst.msk [vmem:[#allocation4 + $0xd0] sm:$0xff] %vm3018, %v4541
      %4574 = vst.msk [vmem:[#allocation4 + $0xe8] sm:$0xff] %vm3018, %v4542
      %4575 = vst.msk [vmem:[#allocation4 + $0x100] sm:$0xff] %vm3018, %v4543
      %4576 = vst.msk [vmem:[#allocation4 + $0x118] sm:$0xff] %vm3018, %v4544
      %4577 = vst.msk [vmem:[#allocation4 + $0x130] sm:$0xff] %vm3018, %v4545
      %4578 = vst.msk [vmem:[#allocation4 + $0x148] sm:$0xff] %vm3018, %v4546
      %4579 = vst.msk [vmem:[#allocation4 + $0x160] sm:$0xff] %vm3018, %v4547
      %4580 = vst.msk [vmem:[#allocation4 + $0x178] sm:$0xff] %vm3018, %v4548
      %4581 = vst.msk [vmem:[#allocation4 + $0x190] sm:$0xff] %vm3018, %v4549
      %4582 = vst.msk [vmem:[#allocation4 + $0x1a8] sm:$0xff] %vm3018, %v4550
      %4583 = vst.msk [vmem:[#allocation4 + $0x1c0] sm:$0xff] %vm3018, %v4551
      %4584 = vst.msk [vmem:[#allocation4 + $0x1d8] sm:$0xff] %vm3018, %v4552
      %4585 = vst.msk [vmem:[#allocation4 + $0x1f0] sm:$0xff] %vm3018, %v4553
      %4586 = vst.msk [vmem:[#allocation4 + $0x208] sm:$0xff] %vm3018, %v4554
      %4587 = vst.msk [vmem:[#allocation4 + $0x220] sm:$0xff] %vm3018, %v4555
      %4588 = vst.msk [vmem:[#allocation4 + $0x238] sm:$0xff] %vm3018, %v4556
      %4589 = vst.msk [vmem:[#allocation4 + $0x250] sm:$0xff] %vm3018, %v4557
      %4590 = vst.msk [vmem:[#allocation4 + $0x268] sm:$0xff] %vm3018, %v4558
      %4591 = vst.msk [vmem:[#allocation4 + $0x280] sm:$0xff] %vm3018, %v4559
      %4592 = vst.msk [vmem:[#allocation4 + $0x298] sm:$0xff] %vm3018, %v4560
      %4593 = vst.msk [vmem:[#allocation4 + $0x2b0] sm:$0xff] %vm3018, %v4561
      %4594 = vst.msk [vmem:[#allocation4 + $0x2c8] sm:$0xff] %vm3018, %v4562
      %4595 = vst.msk [vmem:[#allocation4 + $0x2e0] sm:$0xff] %vm3018, %v4563
      %4596 = vst.msk [vmem:[#allocation4 + $0x2f8] sm:$0xff] %vm3018, %v4564
      %v4597 = vld [vmem:[#allocation4] sm:$0xff]
      %v4598 = vld [vmem:[#allocation4 + $0x8] sm:$0xff]
      %v4599 = vld [vmem:[#allocation4 + $0x10] sm:$0xff]
      %v4600 = vld [vmem:[#allocation4 + $0x18] sm:$0xff]
      %v4601 = vld [vmem:[#allocation4 + $0x20] sm:$0xff]
      %v4602 = vld [vmem:[#allocation4 + $0x28] sm:$0xff]
      %v4603 = vld [vmem:[#allocation4 + $0x30] sm:$0xff]
      %v4604 = vld [vmem:[#allocation4 + $0x38] sm:$0xff]
      %v4605 = vld [vmem:[#allocation4 + $0x40] sm:$0xff]
      %v4606 = vld [vmem:[#allocation4 + $0x48] sm:$0xff]
      %v4607 = vld [vmem:[#allocation4 + $0x50] sm:$0xff]
      %v4608 = vld [vmem:[#allocation4 + $0x58] sm:$0xff]
      %v4609 = vld [vmem:[#allocation4 + $0x60] sm:$0xff]
      %v4610 = vld [vmem:[#allocation4 + $0x68] sm:$0xff]
      %v4611 = vld [vmem:[#allocation4 + $0x70] sm:$0xff]
      %v4612 = vld [vmem:[#allocation4 + $0x78] sm:$0xff]
      %v4613 = vld [vmem:[#allocation4 + $0x80] sm:$0xff]
      %v4614 = vld [vmem:[#allocation4 + $0x88] sm:$0xff]
      %v4615 = vld [vmem:[#allocation4 + $0x90] sm:$0xff]
      %v4616 = vld [vmem:[#allocation4 + $0x98] sm:$0xff]
      %v4617 = vld [vmem:[#allocation4 + $0xa0] sm:$0xff]
      %v4618 = vld [vmem:[#allocation4 + $0xa8] sm:$0xff]
      %v4619 = vld [vmem:[#allocation4 + $0xb0] sm:$0xff]
      %v4620 = vld [vmem:[#allocation4 + $0xb8] sm:$0xff]
      %v4621 = vld [vmem:[#allocation4 + $0xc0] sm:$0xff]
      %v4622 = vld [vmem:[#allocation4 + $0xc8] sm:$0xff]
      %v4623 = vld [vmem:[#allocation4 + $0xd0] sm:$0xff]
      %v4624 = vld [vmem:[#allocation4 + $0xd8] sm:$0xff]
      %v4625 = vld [vmem:[#allocation4 + $0xe0] sm:$0xff]
      %v4626 = vld [vmem:[#allocation4 + $0xe8] sm:$0xff]
      %v4627 = vld [vmem:[#allocation4 + $0xf0] sm:$0xff]
      %v4628 = vld [vmem:[#allocation4 + $0xf8] sm:$0xff]
      %v4629 = vld [vmem:[#allocation4 + $0x100] sm:$0xff]
      %v4630 = vld [vmem:[#allocation4 + $0x108] sm:$0xff]
      %v4631 = vld [vmem:[#allocation4 + $0x110] sm:$0xff]
      %v4632 = vld [vmem:[#allocation4 + $0x118] sm:$0xff]
      %v4633 = vld [vmem:[#allocation4 + $0x120] sm:$0xff]
      %v4634 = vld [vmem:[#allocation4 + $0x128] sm:$0xff]
      %v4635 = vld [vmem:[#allocation4 + $0x130] sm:$0xff]
      %v4636 = vld [vmem:[#allocation4 + $0x138] sm:$0xff]
      %v4637 = vld [vmem:[#allocation4 + $0x140] sm:$0xff]
      %v4638 = vld [vmem:[#allocation4 + $0x148] sm:$0xff]
      %v4639 = vld [vmem:[#allocation4 + $0x150] sm:$0xff]
      %v4640 = vld [vmem:[#allocation4 + $0x158] sm:$0xff]
      %v4641 = vld [vmem:[#allocation4 + $0x160] sm:$0xff]
      %v4642 = vld [vmem:[#allocation4 + $0x168] sm:$0xff]
      %v4643 = vld [vmem:[#allocation4 + $0x170] sm:$0xff]
      %v4644 = vld [vmem:[#allocation4 + $0x178] sm:$0xff]
      %v4645 = vld [vmem:[#allocation4 + $0x180] sm:$0xff]
      %v4646 = vld [vmem:[#allocation4 + $0x188] sm:$0xff]
      %v4647 = vld [vmem:[#allocation4 + $0x190] sm:$0xff]
      %v4648 = vld [vmem:[#allocation4 + $0x198] sm:$0xff]
      %v4649 = vld [vmem:[#allocation4 + $0x1a0] sm:$0xff]
      %v4650 = vld [vmem:[#allocation4 + $0x1a8] sm:$0xff]
      %v4651 = vld [vmem:[#allocation4 + $0x1b0] sm:$0xff]
      %v4652 = vld [vmem:[#allocation4 + $0x1b8] sm:$0xff]
      %v4653 = vld [vmem:[#allocation4 + $0x1c0] sm:$0xff]
      %v4654 = vld [vmem:[#allocation4 + $0x1c8] sm:$0xff]
      %v4655 = vld [vmem:[#allocation4 + $0x1d0] sm:$0xff]
      %v4656 = vld [vmem:[#allocation4 + $0x1d8] sm:$0xff]
      %v4657 = vld [vmem:[#allocation4 + $0x1e0] sm:$0xff]
      %v4658 = vld [vmem:[#allocation4 + $0x1e8] sm:$0xff]
      %v4659 = vld [vmem:[#allocation4 + $0x1f0] sm:$0xff]
      %v4660 = vld [vmem:[#allocation4 + $0x1f8] sm:$0xff]
      %v4661 = vld [vmem:[#allocation4 + $0x200] sm:$0xff]
      %v4662 = vld [vmem:[#allocation4 + $0x208] sm:$0xff]
      %v4663 = vld [vmem:[#allocation4 + $0x210] sm:$0xff]
      %v4664 = vld [vmem:[#allocation4 + $0x218] sm:$0xff]
      %v4665 = vld [vmem:[#allocation4 + $0x220] sm:$0xff]
      %v4666 = vld [vmem:[#allocation4 + $0x228] sm:$0xff]
      %v4667 = vld [vmem:[#allocation4 + $0x230] sm:$0xff]
      %v4668 = vld [vmem:[#allocation4 + $0x238] sm:$0xff]
      %v4669 = vld [vmem:[#allocation4 + $0x240] sm:$0xff]
      %v4670 = vld [vmem:[#allocation4 + $0x248] sm:$0xff]
      %v4671 = vld [vmem:[#allocation4 + $0x250] sm:$0xff]
      %v4672 = vld [vmem:[#allocation4 + $0x258] sm:$0xff]
      %v4673 = vld [vmem:[#allocation4 + $0x260] sm:$0xff]
      %v4674 = vld [vmem:[#allocation4 + $0x268] sm:$0xff]
      %v4675 = vld [vmem:[#allocation4 + $0x270] sm:$0xff]
      %v4676 = vld [vmem:[#allocation4 + $0x278] sm:$0xff]
      %v4677 = vld [vmem:[#allocation4 + $0x280] sm:$0xff]
      %v4678 = vld [vmem:[#allocation4 + $0x288] sm:$0xff]
      %v4679 = vld [vmem:[#allocation4 + $0x290] sm:$0xff]
      %v4680 = vld [vmem:[#allocation4 + $0x298] sm:$0xff]
      %v4681 = vld [vmem:[#allocation4 + $0x2a0] sm:$0xff]
      %v4682 = vld [vmem:[#allocation4 + $0x2a8] sm:$0xff]
      %v4683 = vld [vmem:[#allocation4 + $0x2b0] sm:$0xff]
      %v4684 = vld [vmem:[#allocation4 + $0x2b8] sm:$0xff]
      %v4685 = vld [vmem:[#allocation4 + $0x2c0] sm:$0xff]
      %v4686 = vld [vmem:[#allocation4 + $0x2c8] sm:$0xff]
      %v4687 = vld [vmem:[#allocation4 + $0x2d0] sm:$0xff]
      %v4688 = vld [vmem:[#allocation4 + $0x2d8] sm:$0xff]
      %v4689 = vld [vmem:[#allocation4 + $0x2e0] sm:$0xff]
      %v4690 = vld [vmem:[#allocation4 + $0x2e8] sm:$0xff]
      %v4691 = vld [vmem:[#allocation4 + $0x2f0] sm:$0xff]
      %v4692 = vld [vmem:[#allocation4 + $0x2f8] sm:$0xff]
      %v4693 = vld [vmem:[%s2] sm:$0xff]
      %v4694 = vld [vmem:[%s2 + $0x8] sm:$0xff]
      %v4695 = vld [vmem:[%s2 + $0x10] sm:$0xff]
      %v4696 = vld [vmem:[%s2 + $0x18] sm:$0xff]
      %v4697 = vld [vmem:[%s2 + $0x20] sm:$0xff]
      %v4698 = vld [vmem:[%s2 + $0x28] sm:$0xff]
      %v4699 = vld [vmem:[%s2 + $0x30] sm:$0xff]
      %v4700 = vld [vmem:[%s2 + $0x38] sm:$0xff]
      %v4701 = vld [vmem:[%s2 + $0x40] sm:$0xff]
      %v4702 = vld [vmem:[%s2 + $0x48] sm:$0xff]
      %v4703 = vld [vmem:[%s2 + $0x50] sm:$0xff]
      %v4704 = vld [vmem:[%s2 + $0x58] sm:$0xff]
      %v4705 = vld [vmem:[%s2 + $0x60] sm:$0xff]
      %v4706 = vld [vmem:[%s2 + $0x68] sm:$0xff]
      %v4707 = vld [vmem:[%s2 + $0x70] sm:$0xff]
      %v4708 = vld [vmem:[%s2 + $0x78] sm:$0xff]
      %v4709 = vld [vmem:[%s2 + $0x80] sm:$0xff]
      %v4710 = vld [vmem:[%s2 + $0x88] sm:$0xff]
      %v4711 = vld [vmem:[%s2 + $0x90] sm:$0xff]
      %v4712 = vld [vmem:[%s2 + $0x98] sm:$0xff]
      %v4713 = vld [vmem:[%s2 + $0xa0] sm:$0xff]
      %v4714 = vld [vmem:[%s2 + $0xa8] sm:$0xff]
      %v4715 = vld [vmem:[%s2 + $0xb0] sm:$0xff]
      %v4716 = vld [vmem:[%s2 + $0xb8] sm:$0xff]
      %v4717 = vld [vmem:[%s2 + $0xc0] sm:$0xff]
      %v4718 = vld [vmem:[%s2 + $0xc8] sm:$0xff]
      %v4719 = vld [vmem:[%s2 + $0xd0] sm:$0xff]
      %v4720 = vld [vmem:[%s2 + $0xd8] sm:$0xff]
      %v4721 = vld [vmem:[%s2 + $0xe0] sm:$0xff]
      %v4722 = vld [vmem:[%s2 + $0xe8] sm:$0xff]
      %v4723 = vld [vmem:[%s2 + $0xf0] sm:$0xff]
      %v4724 = vld [vmem:[%s2 + $0xf8] sm:$0xff]
      %v4725 = vld [vmem:[%s2 + $0x100] sm:$0xff]
      %v4726 = vld [vmem:[%s2 + $0x108] sm:$0xff]
      %v4727 = vld [vmem:[%s2 + $0x110] sm:$0xff]
      %v4728 = vld [vmem:[%s2 + $0x118] sm:$0xff]
      %v4729 = vld [vmem:[%s3 + $0x1] sm:$0x1]
      %v4730 = vlaneseq
      %v4731 = vshrl.u32 %v4730, 7
      %v4732 = vsub.s32 0, %v4731
      %v4733 = vrot.slane %v4729, %v4732
      %v4735 = vsel %vm3018, %v4599, 0
      %v4738 = vsel %vm3018, %v4602, 0
      %v4741 = vsel %vm3018, %v4605, 0
      %v4744 = vsel %vm3018, %v4608, 0
      %v4747 = vsel %vm3018, %v4611, 0
      %v4750 = vsel %vm3018, %v4614, 0
      %v4753 = vsel %vm3018, %v4617, 0
      %v4756 = vsel %vm3018, %v4620, 0
      %v4759 = vsel %vm3018, %v4623, 0
      %v4762 = vsel %vm3018, %v4626, 0
      %v4765 = vsel %vm3018, %v4629, 0
      %v4768 = vsel %vm3018, %v4632, 0
      %v4771 = vsel %vm3018, %v4635, 0
      %v4774 = vsel %vm3018, %v4638, 0
      %v4777 = vsel %vm3018, %v4641, 0
      %v4780 = vsel %vm3018, %v4644, 0
      %v4783 = vsel %vm3018, %v4647, 0
      %v4786 = vsel %vm3018, %v4650, 0
      %v4789 = vsel %vm3018, %v4653, 0
      %v4792 = vsel %vm3018, %v4656, 0
      %v4795 = vsel %vm3018, %v4659, 0
      %v4798 = vsel %vm3018, %v4662, 0
      %v4801 = vsel %vm3018, %v4665, 0
      %v4804 = vsel %vm3018, %v4668, 0
      %v4807 = vsel %vm3018, %v4671, 0
      %v4810 = vsel %vm3018, %v4674, 0
      %v4813 = vsel %vm3018, %v4677, 0
      %v4816 = vsel %vm3018, %v4680, 0
      %v4819 = vsel %vm3018, %v4683, 0
      %v4822 = vsel %vm3018, %v4686, 0
      %v4825 = vsel %vm3018, %v4689, 0
      %v4828 = vsel %vm3018, %v4692, 0
      %4830 = vmatprep.subr.mxu0 0.0
      %4831 = vmatpush1.msra.mxu0 %v4693
      %4832 = vmatprep.subr.mxu0 0.0
      %4833 = vmatpush1.msra.mxu0 %v4694
      %4834 = vmatprep.subr.mxu0 0.0
      %4835 = vmatpush1.msra.mxu0 %v4695
      %4836 = vmatprep.subr.mxu0 0.0
      %4837 = vmatpush1.msra.mxu0 %v4696
      %4838 = vmatprep.subr.mxu0 0.0
      %4839 = vmatpush1.msra.mxu0 %v4697
      %4840 = vmatprep.subr.mxu0 0.0
      %4841 = vmatpush1.msra.mxu0 %v4698
      %4842 = vmatprep.subr.mxu0 0.0
      %4843 = vmatpush1.msra.mxu0 %v4699
      %4844 = vmatprep.subr.mxu0 0.0
      %4845 = vmatpush1.msra.mxu0 %v4700
      %4846 = vmatprep.subr.mxu0 0.0
      %4847 = vmatpush1.msra.mxu0 %v4701
      %4848 = vmatprep.subr.mxu0 0.0
      %4849 = vmatpush1.msra.mxu0 %v4702
      %4850 = vmatprep.subr.mxu0 0.0
      %4851 = vmatpush1.msra.mxu0 %v4703
      %4852 = vmatprep.subr.mxu0 0.0
      %4853 = vmatpush1.msra.mxu0 %v4704
      %4854 = vmatprep.subr.mxu0 0.0
      %4855 = vmatpush1.msra.mxu0 %v4705
      %4856 = vmatprep.subr.mxu0 0.0
      %4857 = vmatpush1.msra.mxu0 %v4706
      %4858 = vmatprep.subr.mxu0 0.0
      %4859 = vmatpush1.msra.mxu0 %v4707
      %4860 = vmatprep.subr.mxu0 0.0
      %4861 = vmatpush1.msra.mxu0 %v4708
      %4862 = vmatprep.subr.mxu0 0.0
      %4863 = vmatpush1.msra.mxu0 %v4709
      %4864 = vmatprep.subr.mxu0 0.0
      %4865 = vmatpush1.msra.mxu0 %v4710
      %4866 = vmatprep.subr.mxu0 0.0
      %4867 = vmatpush1.msra.mxu0 %v4711
      %4868 = vmatprep.subr.mxu0 0.0
      %4869 = vmatpush1.msra.mxu0 %v4712
      %4870 = vmatprep.subr.mxu0 0.0
      %4871 = vmatpush1.msra.mxu0 %v4713
      %4872 = vmatprep.subr.mxu0 0.0
      %4873 = vmatpush1.msra.mxu0 %v4714
      %4874 = vmatprep.subr.mxu0 0.0
      %4875 = vmatpush1.msra.mxu0 %v4715
      %4876 = vmatprep.subr.mxu0 0.0
      %4877 = vmatpush1.msra.mxu0 %v4716
      %4878 = vmatprep.subr.mxu0 0.0
      %4879 = vmatpush1.msra.mxu0 %v4717
      %4880 = vmatprep.subr.mxu0 0.0
      %4881 = vmatpush1.msra.mxu0 %v4718
      %4882 = vmatprep.subr.mxu0 0.0
      %4883 = vmatpush1.msra.mxu0 %v4719
      %4884 = vmatprep.subr.mxu0 0.0
      %4885 = vmatpush1.msra.mxu0 %v4720
      %4886 = vmatprep.subr.mxu0 0.0
      %4887 = vmatpush1.msra.mxu0 %v4721
      %4888 = vmatprep.subr.mxu0 0.0
      %4889 = vmatpush1.msra.mxu0 %v4722
      %4890 = vmatprep.subr.mxu0 0.0
      %4891 = vmatpush1.msra.mxu0 %v4723
      %4892 = vmatprep.subr.mxu0 0.0
      %4893 = vmatpush1.msra.mxu0 %v4724
      %4894 = vmatprep.mubr.f32.mxu0 %v4598
      %4895 = vmatmul.mubr.f32.gmra.mrb[0].mxu0 %v4597
      %v4896 = vpop.f32.mrb[0].mxu0
      %v4897 = vadd.f32 %v4733, %v4896
      %v4898 = vpop.f32.mrb[0].mxu0
      %4899 = vmatprep.mubr.f32.mxu0 %v4601
      %4900 = vmatmul.mubr.f32.gmra.mrb[0].mxu0 %v4600
      %v4901 = vpop.f32.mrb[0].mxu0
      %v4902 = vadd.f32 %v4733, %v4901
      %v4903 = vpop.f32.mrb[0].mxu0
      %4904 = vmatprep.mubr.f32.mxu0 %v4604
      %4905 = vmatmul.mubr.f32.gmra.mrb[0].mxu0 %v4603
      %v4906 = vpop.f32.mrb[0].mxu0
      %v4907 = vadd.f32 %v4733, %v4906
      %v4908 = vpop.f32.mrb[0].mxu0
      %4909 = vmatprep.mubr.f32.mxu0 %v4607
      %4910 = vmatmul.mubr.f32.gmra.mrb[0].mxu0 %v4606
      %v4911 = vpop.f32.mrb[0].mxu0
      %v4912 = vadd.f32 %v4733, %v4911
      %v4913 = vpop.f32.mrb[0].mxu0
      %4914 = vmatprep.mubr.f32.mxu0 %v4610
      %4915 = vmatmul.mubr.f32.gmra.mrb[0].mxu0 %v4609
      %v4916 = vpop.f32.mrb[0].mxu0
      %v4917 = vadd.f32 %v4733, %v4916
      %v4918 = vpop.f32.mrb[0].mxu0
      %4919 = vmatprep.mubr.f32.mxu0 %v4613
      %4920 = vmatmul.mubr.f32.gmra.mrb[0].mxu0 %v4612
      %v4921 = vpop.f32.mrb[0].mxu0
      %v4922 = vadd.f32 %v4733, %v4921
      %v4923 = vpop.f32.mrb[0].mxu0
      %4924 = vmatprep.mubr.f32.mxu0 %v4616
      %4925 = vmatmul.mubr.f32.gmra.mrb[0].mxu0 %v4615
      %v4926 = vpop.f32.mrb[0].mxu0
      %v4927 = vadd.f32 %v4733, %v4926
      %v4928 = vpop.f32.mrb[0].mxu0
      %4929 = vmatprep.mubr.f32.mxu0 %v4619
      %4930 = vmatmul.mubr.f32.gmra.mrb[0].mxu0 %v4618
      %v4931 = vpop.f32.mrb[0].mxu0
      %v4932 = vadd.f32 %v4733, %v4931
      %v4933 = vpop.f32.mrb[0].mxu0
      %4934 = vmatprep.mubr.f32.mxu0 %v4622
      %4935 = vmatmul.mubr.f32.gmra.mrb[0].mxu0 %v4621
      %v4936 = vpop.f32.mrb[0].mxu0
      %v4937 = vadd.f32 %v4733, %v4936
      %v4938 = vpop.f32.mrb[0].mxu0
      %4939 = vmatprep.mubr.f32.mxu0 %v4625
      %4940 = vmatmul.mubr.f32.gmra.mrb[0].mxu0 %v4624
      %v4941 = vpop.f32.mrb[0].mxu0
      %v4942 = vadd.f32 %v4733, %v4941
      %v4943 = vpop.f32.mrb[0].mxu0
      %4944 = vmatprep.mubr.f32.mxu0 %v4628
      %4945 = vmatmul.mubr.f32.gmra.mrb[0].mxu0 %v4627
      %v4946 = vpop.f32.mrb[0].mxu0
      %v4947 = vadd.f32 %v4733, %v4946
      %v4948 = vpop.f32.mrb[0].mxu0
      %4949 = vmatprep.mubr.f32.mxu0 %v4631
      %4950 = vmatmul.mubr.f32.gmra.mrb[0].mxu0 %v4630
      %v4951 = vpop.f32.mrb[0].mxu0
      %v4952 = vadd.f32 %v4733, %v4951
      %v4953 = vpop.f32.mrb[0].mxu0
      %4954 = vmatprep.mubr.f32.mxu0 %v4634
      %4955 = vmatmul.mubr.f32.gmra.mrb[0].mxu0 %v4633
      %v4956 = vpop.f32.mrb[0].mxu0
      %v4957 = vadd.f32 %v4733, %v4956
      %v4958 = vpop.f32.mrb[0].mxu0
      %4959 = vmatprep.mubr.f32.mxu0 %v4637
      %4960 = vmatmul.mubr.f32.gmra.mrb[0].mxu0 %v4636
      %v4961 = vpop.f32.mrb[0].mxu0
      %v4962 = vadd.f32 %v4733, %v4961
      %v4963 = vpop.f32.mrb[0].mxu0
      %4964 = vmatprep.mubr.f32.mxu0 %v4640
      %4965 = vmatmul.mubr.f32.gmra.mrb[0].mxu0 %v4639
      %v4966 = vpop.f32.mrb[0].mxu0
      %v4967 = vadd.f32 %v4733, %v4966
      %v4968 = vpop.f32.mrb[0].mxu0
      %4969 = vmatprep.mubr.f32.mxu0 %v4643
      %4970 = vmatmul.mubr.f32.gmra.mrb[0].mxu0 %v4642
      %v4971 = vpop.f32.mrb[0].mxu0
      %v4972 = vadd.f32 %v4733, %v4971
      %v4973 = vpop.f32.mrb[0].mxu0
      %4974 = vmatprep.mubr.f32.mxu0 %v4646
      %4975 = vmatmul.mubr.f32.gmra.mrb[0].mxu0 %v4645
      %v4976 = vpop.f32.mrb[0].mxu0
      %v4977 = vadd.f32 %v4733, %v4976
      %v4978 = vpop.f32.mrb[0].mxu0
      %4979 = vmatprep.mubr.f32.mxu0 %v4649
      %4980 = vmatmul.mubr.f32.gmra.mrb[0].mxu0 %v4648
      %v4981 = vpop.f32.mrb[0].mxu0
      %v4982 = vadd.f32 %v4733, %v4981
      %v4983 = vpop.f32.mrb[0].mxu0
      %4984 = vmatprep.mubr.f32.mxu0 %v4652
      %4985 = vmatmul.mubr.f32.gmra.mrb[0].mxu0 %v4651
      %v4986 = vpop.f32.mrb[0].mxu0
      %v4987 = vadd.f32 %v4733, %v4986
      %v4988 = vpop.f32.mrb[0].mxu0
      %4989 = vmatprep.mubr.f32.mxu0 %v4655
      %4990 = vmatmul.mubr.f32.gmra.mrb[0].mxu0 %v4654
      %v4991 = vpop.f32.mrb[0].mxu0
      %v4992 = vadd.f32 %v4733, %v4991
      %v4993 = vpop.f32.mrb[0].mxu0
      %4994 = vmatprep.mubr.f32.mxu0 %v4658
      %4995 = vmatmul.mubr.f32.gmra.mrb[0].mxu0 %v4657
      %v4996 = vpop.f32.mrb[0].mxu0
      %v4997 = vadd.f32 %v4733, %v4996
      %v4998 = vpop.f32.mrb[0].mxu0
      %4999 = vmatprep.mubr.f32.mxu0 %v4661
      %5000 = vmatmul.mubr.f32.gmra.mrb[0].mxu0 %v4660
      %v5001 = vpop.f32.mrb[0].mxu0
      %v5002 = vadd.f32 %v4733, %v5001
      %v5003 = vpop.f32.mrb[0].mxu0
      %5004 = vmatprep.mubr.f32.mxu0 %v4664
      %5005 = vmatmul.mubr.f32.gmra.mrb[0].mxu0 %v4663
      %v5006 = vpop.f32.mrb[0].mxu0
      %v5007 = vadd.f32 %v4733, %v5006
      %v5008 = vpop.f32.mrb[0].mxu0
      %5009 = vmatprep.mubr.f32.mxu0 %v4667
      %5010 = vmatmul.mubr.f32.gmra.mrb[0].mxu0 %v4666
      %v5011 = vpop.f32.mrb[0].mxu0
      %v5012 = vadd.f32 %v4733, %v5011
      %v5013 = vpop.f32.mrb[0].mxu0
      %5014 = vmatprep.mubr.f32.mxu0 %v4670
      %5015 = vmatmul.mubr.f32.gmra.mrb[0].mxu0 %v4669
      %v5016 = vpop.f32.mrb[0].mxu0
      %v5017 = vadd.f32 %v4733, %v5016
      %v5018 = vpop.f32.mrb[0].mxu0
      %5019 = vmatprep.mubr.f32.mxu0 %v4673
      %5020 = vmatmul.mubr.f32.gmra.mrb[0].mxu0 %v4672
      %v5021 = vpop.f32.mrb[0].mxu0
      %v5022 = vadd.f32 %v4733, %v5021
      %v5023 = vpop.f32.mrb[0].mxu0
      %5024 = vmatprep.mubr.f32.mxu0 %v4676
      %5025 = vmatmul.mubr.f32.gmra.mrb[0].mxu0 %v4675
      %v5026 = vpop.f32.mrb[0].mxu0
      %v5027 = vadd.f32 %v4733, %v5026
      %v5028 = vpop.f32.mrb[0].mxu0
      %5029 = vmatprep.mubr.f32.mxu0 %v4679
      %5030 = vmatmul.mubr.f32.gmra.mrb[0].mxu0 %v4678
      %v5031 = vpop.f32.mrb[0].mxu0
      %v5032 = vadd.f32 %v4733, %v5031
      %v5033 = vpop.f32.mrb[0].mxu0
      %5034 = vmatprep.mubr.f32.mxu0 %v4682
      %5035 = vmatmul.mubr.f32.gmra.mrb[0].mxu0 %v4681
      %v5036 = vpop.f32.mrb[0].mxu0
      %v5037 = vadd.f32 %v4733, %v5036
      %v5038 = vpop.f32.mrb[0].mxu0
      %5039 = vmatprep.mubr.f32.mxu0 %v4685
      %5040 = vmatmul.mubr.f32.gmra.mrb[0].mxu0 %v4684
      %v5041 = vpop.f32.mrb[0].mxu0
      %v5042 = vadd.f32 %v4733, %v5041
      %v5043 = vpop.f32.mrb[0].mxu0
      %5044 = vmatprep.mubr.f32.mxu0 %v4688
      %5045 = vmatmul.mubr.f32.gmra.mrb[0].mxu0 %v4687
      %v5046 = vpop.f32.mrb[0].mxu0
      %v5047 = vadd.f32 %v4733, %v5046
      %v5048 = vpop.f32.mrb[0].mxu0
      %5049 = vmatprep.mubr.f32.mxu0 %v4691
      %5050 = vmatmul.mubr.f32.gmra.mrb[0].mxu0 %v4690
      %v5051 = vpop.f32.mrb[0].mxu0
      %v5052 = vadd.f32 %v4733, %v5051
      %v5053 = vpop.f32.mrb[0].mxu0
      %5054 = vdwg.mxu0
      %5055 = vmatprep.subr.mxu0 0.0
      %5056 = vmatpush1.msra.mxu0 %v4725
      %5057 = vmatprep.subr.mxu0 0.0
      %5058 = vmatpush1.msra.mxu0 %v4726
      %5059 = vmatprep.subr.mxu0 0.0
      %5060 = vmatpush1.msra.mxu0 %v4727
      %5061 = vmatprep.subr.mxu0 0.0
      %5062 = vmatpush1.msra.mxu0 %v4728
      %5063 = vmatprep.subr.mxu0 0.0
      %5064 = vmatpush1.msra.mxu0 0.0
      %5065 = vmatprep.subr.mxu0 0.0
      %5066 = vmatpush1.msra.mxu0 0.0
      %5067 = vmatprep.subr.mxu0 0.0
      %5068 = vmatpush1.msra.mxu0 0.0
      %5069 = vmatprep.subr.mxu0 0.0
      %5070 = vmatpush1.msra.mxu0 0.0
      %5071 = vmatprep.subr.mxu0 0.0
      %5072 = vmatpush1.msra.mxu0 0.0
      %5073 = vmatprep.subr.mxu0 0.0
      %5074 = vmatpush1.msra.mxu0 0.0
      %5075 = vmatprep.subr.mxu0 0.0
      %5076 = vmatpush1.msra.mxu0 0.0
      %5077 = vmatprep.subr.mxu0 0.0
      %5078 = vmatpush1.msra.mxu0 0.0
      %5079 = vmatprep.subr.mxu0 0.0
      %5080 = vmatpush1.msra.mxu0 0.0
      %5081 = vmatprep.subr.mxu0 0.0
      %5082 = vmatpush1.msra.mxu0 0.0
      %5083 = vmatprep.subr.mxu0 0.0
      %5084 = vmatpush1.msra.mxu0 0.0
      %5085 = vmatprep.subr.mxu0 0.0
      %5086 = vmatpush1.msra.mxu0 0.0
      %5087 = vmatprep.subr.mxu0 0.0
      %5088 = vmatpush1.msra.mxu0 0.0
      %5089 = vmatprep.subr.mxu0 0.0
      %5090 = vmatpush1.msra.mxu0 0.0
      %5091 = vmatprep.subr.mxu0 0.0
      %5092 = vmatpush1.msra.mxu0 0.0
      %5093 = vmatprep.subr.mxu0 0.0
      %5094 = vmatpush1.msra.mxu0 0.0
      %5095 = vmatprep.subr.mxu0 0.0
      %5096 = vmatpush1.msra.mxu0 0.0
      %5097 = vmatprep.subr.mxu0 0.0
      %5098 = vmatpush1.msra.mxu0 0.0
      %5099 = vmatprep.subr.mxu0 0.0
      %5100 = vmatpush1.msra.mxu0 0.0
      %5101 = vmatprep.subr.mxu0 0.0
      %5102 = vmatpush1.msra.mxu0 0.0
      %5103 = vmatprep.subr.mxu0 0.0
      %5104 = vmatpush1.msra.mxu0 0.0
      %5105 = vmatprep.subr.mxu0 0.0
      %5106 = vmatpush1.msra.mxu0 0.0
      %5107 = vmatprep.subr.mxu0 0.0
      %5108 = vmatpush1.msra.mxu0 0.0
      %5109 = vmatprep.subr.mxu0 0.0
      %5110 = vmatpush1.msra.mxu0 0.0
      %5111 = vmatprep.subr.mxu0 0.0
      %5112 = vmatpush1.msra.mxu0 0.0
      %5113 = vmatprep.subr.mxu0 0.0
      %5114 = vmatpush1.msra.mxu0 0.0
      %5115 = vmatprep.subr.mxu0 0.0
      %5116 = vmatpush1.msra.mxu0 0.0
      %5117 = vmatprep.subr.mxu0 0.0
      %5118 = vmatpush1.msra.mxu0 0.0
      %5119 = vmatprep.mubr.f32.mxu0 0.0
      %5120 = vmatmul.mubr.f32.gmra.mrb[0].mxu0 %v4735
      %v5121 = vpop.f32.mrb[0].mxu0
      %v5122 = vadd.f32 %v4897, %v5121
      %v5123 = vpop.f32.mrb[0].mxu0
      %5124 = vmatprep.mubr.f32.mxu0 0.0
      %5125 = vmatmul.mubr.f32.gmra.mrb[0].mxu0 %v4738
      %v5126 = vpop.f32.mrb[0].mxu0
      %v5127 = vadd.f32 %v4902, %v5126
      %v5128 = vpop.f32.mrb[0].mxu0
      %5129 = vmatprep.mubr.f32.mxu0 0.0
      %5130 = vmatmul.mubr.f32.gmra.mrb[0].mxu0 %v4741
      %v5131 = vpop.f32.mrb[0].mxu0
      %v5132 = vadd.f32 %v4907, %v5131
      %v5133 = vpop.f32.mrb[0].mxu0
      %5134 = vmatprep.mubr.f32.mxu0 0.0
      %5135 = vmatmul.mubr.f32.gmra.mrb[0].mxu0 %v4744
      %v5136 = vpop.f32.mrb[0].mxu0
      %v5137 = vadd.f32 %v4912, %v5136
      %v5138 = vpop.f32.mrb[0].mxu0
      %5139 = vmatprep.mubr.f32.mxu0 0.0
      %5140 = vmatmul.mubr.f32.gmra.mrb[0].mxu0 %v4747
      %v5141 = vpop.f32.mrb[0].mxu0
      %v5142 = vadd.f32 %v4917, %v5141
      %v5143 = vpop.f32.mrb[0].mxu0
      %5144 = vmatprep.mubr.f32.mxu0 0.0
      %5145 = vmatmul.mubr.f32.gmra.mrb[0].mxu0 %v4750
      %v5146 = vpop.f32.mrb[0].mxu0
      %v5147 = vadd.f32 %v4922, %v5146
      %v5148 = vpop.f32.mrb[0].mxu0
      %5149 = vmatprep.mubr.f32.mxu0 0.0
      %5150 = vmatmul.mubr.f32.gmra.mrb[0].mxu0 %v4753
      %v5151 = vpop.f32.mrb[0].mxu0
      %v5152 = vadd.f32 %v4927, %v5151
      %v5153 = vpop.f32.mrb[0].mxu0
      %5154 = vmatprep.mubr.f32.mxu0 0.0
      %5155 = vmatmul.mubr.f32.gmra.mrb[0].mxu0 %v4756
      %v5156 = vpop.f32.mrb[0].mxu0
      %v5157 = vadd.f32 %v4932, %v5156
      %v5158 = vpop.f32.mrb[0].mxu0
      %5159 = vmatprep.mubr.f32.mxu0 0.0
      %5160 = vmatmul.mubr.f32.gmra.mrb[0].mxu0 %v4759
      %v5161 = vpop.f32.mrb[0].mxu0
      %v5162 = vadd.f32 %v4937, %v5161
      %v5163 = vpop.f32.mrb[0].mxu0
      %5164 = vmatprep.mubr.f32.mxu0 0.0
      %5165 = vmatmul.mubr.f32.gmra.mrb[0].mxu0 %v4762
      %v5166 = vpop.f32.mrb[0].mxu0
      %v5167 = vadd.f32 %v4942, %v5166
      %v5168 = vpop.f32.mrb[0].mxu0
      %5169 = vmatprep.mubr.f32.mxu0 0.0
      %5170 = vmatmul.mubr.f32.gmra.mrb[0].mxu0 %v4765
      %v5171 = vpop.f32.mrb[0].mxu0
      %v5172 = vadd.f32 %v4947, %v5171
      %v5173 = vpop.f32.mrb[0].mxu0
      %5174 = vmatprep.mubr.f32.mxu0 0.0
      %5175 = vmatmul.mubr.f32.gmra.mrb[0].mxu0 %v4768
      %v5176 = vpop.f32.mrb[0].mxu0
      %v5177 = vadd.f32 %v4952, %v5176
      %v5178 = vpop.f32.mrb[0].mxu0
      %5179 = vmatprep.mubr.f32.mxu0 0.0
      %5180 = vmatmul.mubr.f32.gmra.mrb[0].mxu0 %v4771
      %v5181 = vpop.f32.mrb[0].mxu0
      %v5182 = vadd.f32 %v4957, %v5181
      %v5183 = vpop.f32.mrb[0].mxu0
      %5184 = vmatprep.mubr.f32.mxu0 0.0
      %5185 = vmatmul.mubr.f32.gmra.mrb[0].mxu0 %v4774
      %v5186 = vpop.f32.mrb[0].mxu0
      %v5187 = vadd.f32 %v4962, %v5186
      %v5188 = vpop.f32.mrb[0].mxu0
      %5189 = vmatprep.mubr.f32.mxu0 0.0
      %5190 = vmatmul.mubr.f32.gmra.mrb[0].mxu0 %v4777
      %v5191 = vpop.f32.mrb[0].mxu0
      %v5192 = vadd.f32 %v4967, %v5191
      %v5193 = vpop.f32.mrb[0].mxu0
      %5194 = vmatprep.mubr.f32.mxu0 0.0
      %5195 = vmatmul.mubr.f32.gmra.mrb[0].mxu0 %v4780
      %v5196 = vpop.f32.mrb[0].mxu0
      %v5197 = vadd.f32 %v4972, %v5196
      %v5198 = vpop.f32.mrb[0].mxu0
      %5199 = vmatprep.mubr.f32.mxu0 0.0
      %5200 = vmatmul.mubr.f32.gmra.mrb[0].mxu0 %v4783
      %v5201 = vpop.f32.mrb[0].mxu0
      %v5202 = vadd.f32 %v4977, %v5201
      %v5203 = vpop.f32.mrb[0].mxu0
      %5204 = vmatprep.mubr.f32.mxu0 0.0
      %5205 = vmatmul.mubr.f32.gmra.mrb[0].mxu0 %v4786
      %v5206 = vpop.f32.mrb[0].mxu0
      %v5207 = vadd.f32 %v4982, %v5206
      %v5208 = vpop.f32.mrb[0].mxu0
      %5209 = vmatprep.mubr.f32.mxu0 0.0
      %5210 = vmatmul.mubr.f32.gmra.mrb[0].mxu0 %v4789
      %v5211 = vpop.f32.mrb[0].mxu0
      %v5212 = vadd.f32 %v4987, %v5211
      %v5213 = vpop.f32.mrb[0].mxu0
      %5214 = vmatprep.mubr.f32.mxu0 0.0
      %5215 = vmatmul.mubr.f32.gmra.mrb[0].mxu0 %v4792
      %v5216 = vpop.f32.mrb[0].mxu0
      %v5217 = vadd.f32 %v4992, %v5216
      %v5218 = vpop.f32.mrb[0].mxu0
      %5219 = vmatprep.mubr.f32.mxu0 0.0
      %5220 = vmatmul.mubr.f32.gmra.mrb[0].mxu0 %v4795
      %v5221 = vpop.f32.mrb[0].mxu0
      %v5222 = vadd.f32 %v4997, %v5221
      %v5223 = vpop.f32.mrb[0].mxu0
      %5224 = vmatprep.mubr.f32.mxu0 0.0
      %5225 = vmatmul.mubr.f32.gmra.mrb[0].mxu0 %v4798
      %v5226 = vpop.f32.mrb[0].mxu0
      %v5227 = vadd.f32 %v5002, %v5226
      %v5228 = vpop.f32.mrb[0].mxu0
      %5229 = vmatprep.mubr.f32.mxu0 0.0
      %5230 = vmatmul.mubr.f32.gmra.mrb[0].mxu0 %v4801
      %v5231 = vpop.f32.mrb[0].mxu0
      %v5232 = vadd.f32 %v5007, %v5231
      %v5233 = vpop.f32.mrb[0].mxu0
      %5234 = vmatprep.mubr.f32.mxu0 0.0
      %5235 = vmatmul.mubr.f32.gmra.mrb[0].mxu0 %v4804
      %v5236 = vpop.f32.mrb[0].mxu0
      %v5237 = vadd.f32 %v5012, %v5236
      %v5238 = vpop.f32.mrb[0].mxu0
      %5239 = vmatprep.mubr.f32.mxu0 0.0
      %5240 = vmatmul.mubr.f32.gmra.mrb[0].mxu0 %v4807
      %v5241 = vpop.f32.mrb[0].mxu0
      %v5242 = vadd.f32 %v5017, %v5241
      %v5243 = vpop.f32.mrb[0].mxu0
      %5244 = vmatprep.mubr.f32.mxu0 0.0
      %5245 = vmatmul.mubr.f32.gmra.mrb[0].mxu0 %v4810
      %v5246 = vpop.f32.mrb[0].mxu0
      %v5247 = vadd.f32 %v5022, %v5246
      %v5248 = vpop.f32.mrb[0].mxu0
      %5249 = vmatprep.mubr.f32.mxu0 0.0
      %5250 = vmatmul.mubr.f32.gmra.mrb[0].mxu0 %v4813
      %v5251 = vpop.f32.mrb[0].mxu0
      %v5252 = vadd.f32 %v5027, %v5251
      %v5253 = vpop.f32.mrb[0].mxu0
      %5254 = vmatprep.mubr.f32.mxu0 0.0
      %5255 = vmatmul.mubr.f32.gmra.mrb[0].mxu0 %v4816
      %v5256 = vpop.f32.mrb[0].mxu0
      %v5257 = vadd.f32 %v5032, %v5256
      %v5258 = vpop.f32.mrb[0].mxu0
      %5259 = vmatprep.mubr.f32.mxu0 0.0
      %5260 = vmatmul.mubr.f32.gmra.mrb[0].mxu0 %v4819
      %v5261 = vpop.f32.mrb[0].mxu0
      %v5262 = vadd.f32 %v5037, %v5261
      %v5263 = vpop.f32.mrb[0].mxu0
      %5264 = vmatprep.mubr.f32.mxu0 0.0
      %5265 = vmatmul.mubr.f32.gmra.mrb[0].mxu0 %v4822
      %v5266 = vpop.f32.mrb[0].mxu0
      %v5267 = vadd.f32 %v5042, %v5266
      %v5268 = vpop.f32.mrb[0].mxu0
      %5269 = vmatprep.mubr.f32.mxu0 0.0
      %5270 = vmatmul.mubr.f32.gmra.mrb[0].mxu0 %v4825
      %v5271 = vpop.f32.mrb[0].mxu0
      %v5272 = vadd.f32 %v5047, %v5271
      %v5273 = vpop.f32.mrb[0].mxu0
      %5274 = vmatprep.mubr.f32.mxu0 0.0
      %5275 = vmatmul.mubr.f32.gmra.mrb[0].mxu0 %v4828
      %v5276 = vpop.f32.mrb[0].mxu0
      %v5277 = vadd.f32 %v5052, %v5276
      %v5278 = vpop.f32.mrb[0].mxu0
      %5279 = vdwg.mxu0
      %vm5280 = vcmp.gt.f32.partialorder %v5122, 0.0
      %vm5281 = vcmp.gt.f32.partialorder %v5127, 0.0
      %vm5282 = vcmp.gt.f32.partialorder %v5132, 0.0
      %vm5283 = vcmp.gt.f32.partialorder %v5137, 0.0
      %vm5284 = vcmp.gt.f32.partialorder %v5142, 0.0
      %vm5285 = vcmp.gt.f32.partialorder %v5147, 0.0
      %vm5286 = vcmp.gt.f32.partialorder %v5152, 0.0
      %vm5287 = vcmp.gt.f32.partialorder %v5157, 0.0
      %vm5288 = vcmp.gt.f32.partialorder %v5162, 0.0
      %vm5289 = vcmp.gt.f32.partialorder %v5167, 0.0
      %vm5290 = vcmp.gt.f32.partialorder %v5172, 0.0
      %vm5291 = vcmp.gt.f32.partialorder %v5177, 0.0
      %vm5292 = vcmp.gt.f32.partialorder %v5182, 0.0
      %vm5293 = vcmp.gt.f32.partialorder %v5187, 0.0
      %vm5294 = vcmp.gt.f32.partialorder %v5192, 0.0
      %vm5295 = vcmp.gt.f32.partialorder %v5197, 0.0
      %vm5296 = vcmp.gt.f32.partialorder %v5202, 0.0
      %vm5297 = vcmp.gt.f32.partialorder %v5207, 0.0
      %vm5298 = vcmp.gt.f32.partialorder %v5212, 0.0
      %vm5299 = vcmp.gt.f32.partialorder %v5217, 0.0
      %vm5300 = vcmp.gt.f32.partialorder %v5222, 0.0
      %vm5301 = vcmp.gt.f32.partialorder %v5227, 0.0
      %vm5302 = vcmp.gt.f32.partialorder %v5232, 0.0
      %vm5303 = vcmp.gt.f32.partialorder %v5237, 0.0
      %vm5304 = vcmp.gt.f32.partialorder %v5242, 0.0
      %vm5305 = vcmp.gt.f32.partialorder %v5247, 0.0
      %vm5306 = vcmp.gt.f32.partialorder %v5252, 0.0
      %vm5307 = vcmp.gt.f32.partialorder %v5257, 0.0
      %vm5308 = vcmp.gt.f32.partialorder %v5262, 0.0
      %vm5309 = vcmp.gt.f32.partialorder %v5267, 0.0
      %vm5310 = vcmp.gt.f32.partialorder %v5272, 0.0
      %vm5311 = vcmp.gt.f32.partialorder %v5277, 0.0
      %v5312 = vmul.f32 %v5122, 0.01
      %v5313 = vmul.f32 %v5127, 0.01
      %v5314 = vmul.f32 %v5132, 0.01
      %v5315 = vmul.f32 %v5137, 0.01
      %v5316 = vmul.f32 %v5142, 0.01
      %v5317 = vmul.f32 %v5147, 0.01
      %v5318 = vmul.f32 %v5152, 0.01
      %v5319 = vmul.f32 %v5157, 0.01
      %v5320 = vmul.f32 %v5162, 0.01
      %v5321 = vmul.f32 %v5167, 0.01
      %v5322 = vmul.f32 %v5172, 0.01
      %v5323 = vmul.f32 %v5177, 0.01
      %v5324 = vmul.f32 %v5182, 0.01
      %v5325 = vmul.f32 %v5187, 0.01
      %v5326 = vmul.f32 %v5192, 0.01
      %v5327 = vmul.f32 %v5197, 0.01
      %v5328 = vmul.f32 %v5202, 0.01
      %v5329 = vmul.f32 %v5207, 0.01
      %v5330 = vmul.f32 %v5212, 0.01
      %v5331 = vmul.f32 %v5217, 0.01
      %v5332 = vmul.f32 %v5222, 0.01
      %v5333 = vmul.f32 %v5227, 0.01
      %v5334 = vmul.f32 %v5232, 0.01
      %v5335 = vmul.f32 %v5237, 0.01
      %v5336 = vmul.f32 %v5242, 0.01
      %v5337 = vmul.f32 %v5247, 0.01
      %v5338 = vmul.f32 %v5252, 0.01
      %v5339 = vmul.f32 %v5257, 0.01
      %v5340 = vmul.f32 %v5262, 0.01
      %v5341 = vmul.f32 %v5267, 0.01
      %v5342 = vmul.f32 %v5272, 0.01
      %v5343 = vmul.f32 %v5277, 0.01
      %v5344 = vsel %vm5280, %v5122, %v5312
      %v5345 = vsel %vm5281, %v5127, %v5313
      %v5346 = vsel %vm5282, %v5132, %v5314
      %v5347 = vsel %vm5283, %v5137, %v5315
      %v5348 = vsel %vm5284, %v5142, %v5316
      %v5349 = vsel %vm5285, %v5147, %v5317
      %v5350 = vsel %vm5286, %v5152, %v5318
      %v5351 = vsel %vm5287, %v5157, %v5319
      %v5352 = vsel %vm5288, %v5162, %v5320
      %v5353 = vsel %vm5289, %v5167, %v5321
      %v5354 = vsel %vm5290, %v5172, %v5322
      %v5355 = vsel %vm5291, %v5177, %v5323
      %v5356 = vsel %vm5292, %v5182, %v5324
      %v5357 = vsel %vm5293, %v5187, %v5325
      %v5358 = vsel %vm5294, %v5192, %v5326
      %v5359 = vsel %vm5295, %v5197, %v5327
      %v5360 = vsel %vm5296, %v5202, %v5328
      %v5361 = vsel %vm5297, %v5207, %v5329
      %v5362 = vsel %vm5298, %v5212, %v5330
      %v5363 = vsel %vm5299, %v5217, %v5331
      %v5364 = vsel %vm5300, %v5222, %v5332
      %v5365 = vsel %vm5301, %v5227, %v5333
      %v5366 = vsel %vm5302, %v5232, %v5334
      %v5367 = vsel %vm5303, %v5237, %v5335
      %v5368 = vsel %vm5304, %v5242, %v5336
      %v5369 = vsel %vm5305, %v5247, %v5337
      %v5370 = vsel %vm5306, %v5252, %v5338
      %v5371 = vsel %vm5307, %v5257, %v5339
      %v5372 = vsel %vm5308, %v5262, %v5340
      %v5373 = vsel %vm5309, %v5267, %v5341
      %v5374 = vsel %vm5310, %v5272, %v5342
      %v5375 = vsel %vm5311, %v5277, %v5343
      %5376 = vst.msk [vmem:[%s199] sm:$0xff] %vm3018, %v5344
      %5377 = vst.msk [vmem:[%s199 + $0x8] sm:$0xff] %vm3018, %v5345
      %5378 = vst.msk [vmem:[%s199 + $0x10] sm:$0xff] %vm3018, %v5346
      %5379 = vst.msk [vmem:[%s199 + $0x18] sm:$0xff] %vm3018, %v5347
      %5380 = vst.msk [vmem:[%s199 + $0x20] sm:$0xff] %vm3018, %v5348
      %5381 = vst.msk [vmem:[%s199 + $0x28] sm:$0xff] %vm3018, %v5349
      %5382 = vst.msk [vmem:[%s199 + $0x30] sm:$0xff] %vm3018, %v5350
      %5383 = vst.msk [vmem:[%s199 + $0x38] sm:$0xff] %vm3018, %v5351
      %5384 = vst.msk [vmem:[%s199 + $0x40] sm:$0xff] %vm3018, %v5352
      %5385 = vst.msk [vmem:[%s199 + $0x48] sm:$0xff] %vm3018, %v5353
      %5386 = vst.msk [vmem:[%s199 + $0x50] sm:$0xff] %vm3018, %v5354
      %5387 = vst.msk [vmem:[%s199 + $0x58] sm:$0xff] %vm3018, %v5355
      %5388 = vst.msk [vmem:[%s199 + $0x60] sm:$0xff] %vm3018, %v5356
      %5389 = vst.msk [vmem:[%s199 + $0x68] sm:$0xff] %vm3018, %v5357
      %5390 = vst.msk [vmem:[%s199 + $0x70] sm:$0xff] %vm3018, %v5358
      %5391 = vst.msk [vmem:[%s199 + $0x78] sm:$0xff] %vm3018, %v5359
      %5392 = vst.msk [vmem:[%s199 + $0x80] sm:$0xff] %vm3018, %v5360
      %5393 = vst.msk [vmem:[%s199 + $0x88] sm:$0xff] %vm3018, %v5361
      %5394 = vst.msk [vmem:[%s199 + $0x90] sm:$0xff] %vm3018, %v5362
      %5395 = vst.msk [vmem:[%s199 + $0x98] sm:$0xff] %vm3018, %v5363
      %5396 = vst.msk [vmem:[%s199 + $0xa0] sm:$0xff] %vm3018, %v5364
      %5397 = vst.msk [vmem:[%s199 + $0xa8] sm:$0xff] %vm3018, %v5365
      %5398 = vst.msk [vmem:[%s199 + $0xb0] sm:$0xff] %vm3018, %v5366
      %5399 = vst.msk [vmem:[%s199 + $0xb8] sm:$0xff] %vm3018, %v5367
      %5400 = vst.msk [vmem:[%s199 + $0xc0] sm:$0xff] %vm3018, %v5368
      %5401 = vst.msk [vmem:[%s199 + $0xc8] sm:$0xff] %vm3018, %v5369
      %5402 = vst.msk [vmem:[%s199 + $0xd0] sm:$0xff] %vm3018, %v5370
      %5403 = vst.msk [vmem:[%s199 + $0xd8] sm:$0xff] %vm3018, %v5371
      %5404 = vst.msk [vmem:[%s199 + $0xe0] sm:$0xff] %vm3018, %v5372
      %5405 = vst.msk [vmem:[%s199 + $0xe8] sm:$0xff] %vm3018, %v5373
      %5406 = vst.msk [vmem:[%s199 + $0xf0] sm:$0xff] %vm3018, %v5374
      %5407 = vst.msk [vmem:[%s199 + $0xf8] sm:$0xff] %vm3018, %v5375
      %s5408 = smul.u32 32, %s15
      %p5409 = scmp.lt.s32.totalorder %s5408, 63
      %s5410 = scalar_select %p5409, %s5408, 63
      %s5411 = smul.addr %s5410, 8
      %s5412 = scalar_lea.vmem %s4, %s5411
      // Predicated region
      $region37: #{tpu_custom_call.1} parent=35 // pred_check
        %p5413 = pneg %p122
      $region38: #{tpu_custom_call.1} parent=35 // pred_check_branch
        %5415 = sbr.rel (%p5413) target = $region40
      $region39: #{tpu_custom_call.1} parent=35 // pred_region
        %s5416 = smul.u32 32, %s15
      $region40: #{tpu_custom_call.1} parent=35 // pred_fallthru
        _
    $region36: #{tpu_custom_call.1} parent=5 // pred_fallthru
      _
    %p5417 = scmp.le.s32.totalorder 2, %s10
    // Predicated region
    $region41: #{tpu_custom_call.1} parent=5 // pred_check
      %p5418 = pneg %p5417
    $region42: #{tpu_custom_call.1} parent=5 // pred_check_branch
      %5420 = sbr.rel (%p5418) target = $region44
    $region43: #{tpu_custom_call.1} parent=5 // pred_region
      %s5421 = ssub.s32 %s10, 2
      // Predicated region
      $region45: #{tpu_custom_call.1} parent=43 // pred_check
        %p5422 = pneg %p128
      $region46: #{tpu_custom_call.1} parent=43 // pred_check_branch
        %5424 = sbr.rel (%p5422) target = $region48
      $region47: #{tpu_custom_call.1} parent=43 // pred_region
        %s5425 = smul.u32 32, %s16
        %p5426 = scmp.lt.s32.totalorder %s5425, 63
        %s5427 = scalar_select %p5426, %s5425, 63
        %s5428 = smul.addr %s5427, 8
        %s5429 = scalar_lea.vmem %s4, %s5428
      $region48: #{tpu_custom_call.1} parent=43 // pred_fallthru
        _
    $region44: #{tpu_custom_call.1} parent=5 // pred_fallthru
      _
  $region6: #{tpu_custom_call.1} parent=0 // loop_footer
    %s14 = sadd.s32 1, %s10
  $region7: #{tpu_custom_call.1} parent=0 // loop_footer_branch
    %9 = sbr.rel target = $region3
  $region8: #{tpu_custom_call.1} parent=0 // loop_exit
    _

</llo_original>
